<compile_context>
chip_gen: v6e
topology: v6e:2x2x1
jax: 0.10.0
libtpu: 0.0.40
codegen_flags: <defaults>
</compile_context>

<pallas_src>
import functools
import math

import jax
import jax.numpy as jnp
from jax.experimental import pallas as pl
from jax.experimental.pallas import tpu as pltpu


# ---------------------------------------------------------------------------
# Fused MHA kernel: one grid step == Tb batch elements, all heads.
# ---------------------------------------------------------------------------
def _fused_mha_kernel(
    xq_ref, xk_ref, xv_ref,                  # [Tb, Sq, D] / [Tb, Sk, D] bf16
    wq_ref, bq_ref,                          # [D, D] bf16, [1, D] f32
    wk_ref, bk_ref,
    wv_ref, bv_ref,
    wo_ref, bo_ref,
    o_ref,                                   # [Tb, Sq, D] f32
    *, num_heads,
):
    tb, sq, d = xq_ref.shape
    sk = xk_ref.shape[1]
    dh = d // num_heads
    scale = 1.0 / math.sqrt(float(dh))
    mq, mk = tb * sq, tb * sk

    # ---- Q/K/V projections: stacked [Tb*S, D] GEMMs (bf16 in, f32 acc) ----
    xq = xq_ref[...].reshape(mq, d)
    xk = xk_ref[...].reshape(mk, d)
    xv = xv_ref[...].reshape(mk, d)

    q = jnp.dot(xq, wq_ref[...], preferred_element_type=jnp.float32) + bq_ref[...]
    k = jnp.dot(xk, wk_ref[...], preferred_element_type=jnp.float32) + bk_ref[...]
    v = jnp.dot(xv, wv_ref[...], preferred_element_type=jnp.float32) + bv_ref[...]

    # Fold the 1/sqrt(dh) scale into Q (O(S*D) instead of O(H*S^2)); recast
    # matmul operands to bf16 for the attention GEMMs.
    q3 = (q * scale).astype(jnp.bfloat16).reshape(tb, sq, d)
    k3 = k.astype(jnp.bfloat16).reshape(tb, sk, d)
    v3 = v.astype(jnp.bfloat16).reshape(tb, sk, d)

    # f32 output accumulator; per-head context is folded straight into the
    # output projection, so no sub-128-lane masked scratch stores exist.
    o_acc = jnp.zeros((mq, d), jnp.float32)

    # num_heads is static -> unrolled at trace time (H=4 here).
    for h in range(num_heads):
        lo = h * dh
        hi = lo + dh
        qh = q3[:, :, lo:hi]                 # [Tb, Sq, dh]
        kh = k3[:, :, lo:hi]                 # [Tb, Sk, dh]
        vh = v3[:, :, lo:hi]                 # [Tb, Sk, dh]

        # energy = qh @ kh^T without materializing a transpose (NT contraction
        # of the head dim of both operands -> no XLU relayout of kh).
        energy = jnp.einsum("bqd,bkd->bqk", qh, kh,
                            preferred_element_type=jnp.float32)   # [Tb, Sq, Sk]

        # Numerically-stable softmax over keys, all in f32.
        m = jnp.max(energy, axis=-1, keepdims=True)
        p = jnp.exp(energy - m)
        denom = jnp.sum(p, axis=-1, keepdims=True)
        attn = (p * pl.reciprocal(denom, approx=True)).astype(jnp.bfloat16)

        # Per-head context, then accumulate its contribution to the output
        # projection: wo[lo:hi, :] is a sublane (row) slice -> cheap.
        ctx_h = jnp.einsum("bqk,bkd->bqd", attn, vh,
                           preferred_element_type=jnp.float32)    # [Tb, Sq, dh]
        o_acc = o_acc + jnp.dot(
            ctx_h.reshape(mq, dh).astype(jnp.bfloat16),
            wo_ref[lo:hi, :],
            preferred_element_type=jnp.float32,
        )

    # Single lane-dense store of the whole output block.
    o_ref[...] = (o_acc + bo_ref[...]).reshape(tb, sq, d)


# ---------------------------------------------------------------------------
# Wrapper
# ---------------------------------------------------------------------------
def _choose_batch_tile(batch, seq_q, target_m=256):
    """Largest divisor of `batch` with Tb*Sq <= target_m that still leaves a
    grid of >= 2 steps (so "parallel" can shard across 2 TCs on v7x)."""
    best = 1
    for d in range(1, batch + 1):
        if batch % d:
            continue
        if d * seq_q <= target_m and (batch // d >= 2 or batch == 1):
            best = d
    return best


def _mha_pallas_call(batch, seq_q, seq_k, d, num_heads, tb, *, single_buffer_weights):
    grid = (batch // tb,)

    act_q_spec = pl.BlockSpec((tb, seq_q, d), lambda b: (b, 0, 0))
    act_k_spec = pl.BlockSpec((tb, seq_k, d), lambda b: (b, 0, 0))
    out_spec = pl.BlockSpec((tb, seq_q, d), lambda b: (b, 0, 0))

    if single_buffer_weights:
        # Constant index_map -> the block never changes across the grid;
        # double-buffering it would just burn VMEM (critical at D>=1024 on v7x).
        w_spec = pl.BlockSpec((d, d), lambda b: (0, 0), pipeline_mode=pl.Buffered(1))
    else:
        w_spec = pl.BlockSpec((d, d), lambda b: (0, 0))
    b_spec = pl.BlockSpec((1, d), lambda b: (0, 0))

    dh = d // num_heads
    flops = 2 * batch * ((seq_q + 2 * seq_k) * d * d            # Q/K/V projections
                         + 2 * num_heads * seq_q * seq_k * dh   # energy + context
                         + seq_q * d * d)                       # output projection
    transcendentals = batch * num_heads * seq_q * seq_k         # exp in softmax
    bytes_accessed = (2 * batch * (seq_q + 2 * seq_k) * d       # bf16 activations in
                      + 4 * batch * seq_q * d                   # f32 output
                      + 2 * 4 * d * d                           # bf16 weights
                      + 4 * 4 * d)                              # f32 biases

    return pl.pallas_call(
        functools.partial(_fused_mha_kernel, num_heads=num_heads),
        out_shape=jax.ShapeDtypeStruct((batch, seq_q, d), jnp.float32),
        grid=grid,
        in_specs=[
            act_q_spec, act_k_spec, act_k_spec,      # query, key, value
            w_spec, b_spec,                          # wq, bq
            w_spec, b_spec,                          # wk, bk
            w_spec, b_spec,                          # wv, bv
            w_spec, b_spec,                          # wo, bo
        ],
        out_specs=out_spec,
        compiler_params=pltpu.CompilerParams(
            dimension_semantics=("parallel",),
        ),
        cost_estimate=pl.CostEstimate(
            flops=flops,
            transcendentals=transcendentals,
            bytes_accessed=bytes_accessed,
        ),
    )


def multi_head_attention(params, query, key, value, num_heads, *, batch_tile=None):
    """Pallas equivalent of MultiHeadAttention.forward (mask=None path)."""
    batch, seq_q, d = query.shape
    seq_k = key.shape[1]
    assert d % num_heads == 0

    tb = batch_tile if batch_tile is not None else _choose_batch_tile(batch, seq_q)
    assert batch % tb == 0

    # bf16 MXU operands (halves DMA, ~2x MXU throughput on v6e/v7x); biases
    # stay f32 (added to the f32-accumulated GEMM result inside the kernel).
    qx = query.astype(jnp.bfloat16)
    kx = key.astype(jnp.bfloat16)
    vx = value.astype(jnp.bfloat16)
    wq = params["wq"].astype(jnp.bfloat16)
    wk = params["wk"].astype(jnp.bfloat16)
    wv = params["wv"].astype(jnp.bfloat16)
    wo = params["wo"].astype(jnp.bfloat16)
    bq = params["bq"].reshape(1, d).astype(jnp.float32)
    bk = params["bk"].reshape(1, d).astype(jnp.float32)
    bv = params["bv"].reshape(1, d).astype(jnp.float32)
    bo = params["bo"].reshape(1, d).astype(jnp.float32)

    args = (qx, kx, vx, wq, bq, wk, bk, wv, bv, wo, bo)
    try:
        return _mha_pallas_call(batch, seq_q, seq_k, d, num_heads, tb,
                                single_buffer_weights=True)(*args)
    except Exception:
        # TODO(synk): pipeline_mode=pl.Buffered(1) not accepted by this jax
        # build; fall back to default (double-buffered) weight blocks.
        return _mha_pallas_call(batch, seq_q, seq_k, d, num_heads, tb,
                                single_buffer_weights=False)(*args)


# ---------------------------------------------------------------------------
# References
# ---------------------------------------------------------------------------
def reference_mha_f32(params, query, key, value, num_heads):
    """Pure-f32 mirror of the PyTorch forward (mask=None)."""
    b, sq, d = query.shape
    sk = key.shape[1]
    dh = d // num_heads

    q = (query @ params["wq"] + params["bq"]).reshape(b, sq, num_heads, dh).transpose(0, 2, 1, 3)
    k = (key @ params["wk"] + params["bk"]).reshape(b, sk, num_heads, dh).transpose(0, 2, 1, 3)
    v = (value @ params["wv"] + params["bv"]).reshape(b, sk, num_heads, dh).transpose(0, 2, 1, 3)

    energy = jnp.einsum("bhqd,bhkd->bhqk", q, k) / jnp.sqrt(jnp.float32(dh))
    attention = jax.nn.softmax(energy, axis=-1)
    x = jnp.einsum("bhqk,bhkd->bhqd", attention, v)
    x = x.transpose(0, 2, 1, 3).reshape(b, sq, d)
    return x @ params["wo"] + params["bo"]


def reference_mha_mixed(params, query, key, value, num_heads):
    """Reference matching the kernel's numerics: bf16 MXU operands, f32 acc."""
    b, sq, d = query.shape
    sk = key.shape[1]
    dh = d // num_heads
    bf = jnp.bfloat16

    def proj(x, w, bias):
        y = jnp.dot(x.astype(bf).reshape(-1, d), w.astype(bf),
                    preferred_element_type=jnp.float32) + bias.reshape(1, d)
        return y.reshape(x.shape[0], -1, d)

    q = proj(query, params["wq"], params["bq"]) / jnp.sqrt(jnp.float32(dh))
    k = proj(key, params["wk"], params["bk"])
    v = proj(value, params["wv"], params["bv"])

    q = q.astype(bf).reshape(b, sq, num_heads, dh).transpose(0, 2, 1, 3)
    k = k.astype(bf).reshape(b, sk, num_heads, dh).transpose(0, 2, 1, 3)
    v = v.astype(bf).reshape(b, sk, num_heads, dh).transpose(0, 2, 1, 3)

    energy = jnp.einsum("bhqd,bhkd->bhqk", q, k, preferred_element_type=jnp.float32)
    attn = jax.nn.softmax(energy, axis=-1).astype(bf)
    ctx = jnp.einsum("bhqk,bhkd->bhqd", attn, v, preferred_element_type=jnp.float32)
    ctx = ctx.transpose(0, 2, 1, 3).reshape(b, sq, d).astype(bf)
    out = jnp.dot(ctx.reshape(-1, d), params["wo"].astype(bf),
                  preferred_element_type=jnp.float32).reshape(b, sq, d)
    return out + params["bo"]


# ---------------------------------------------------------------------------
# Main
# ---------------------------------------------------------------------------
if __name__ == "__main__":
    INPUT_DIM = 32
    NUM_HEADS = 4
    BATCH = 2
    SEQ = 8

    root = jax.random.PRNGKey(0)
    keys = jax.random.split(root, 12)

    # nn.Linear-style init (uniform with bound 1/sqrt(fan_in)), weights stored [in, out].
    bound = 1.0 / jnp.sqrt(jnp.float32(INPUT_DIM))

    def init_w(k):
        return jax.random.uniform(k, (INPUT_DIM, INPUT_DIM), jnp.float32, -bound, bound)

    def init_b(k):
        return jax.random.uniform(k, (INPUT_DIM,), jnp.float32, -bound, bound)

    params = {
        "wq": init_w(keys[0]), "bq": init_b(keys[1]),
        "wk": init_w(keys[2]), "bk": init_b(keys[3]),
        "wv": init_w(keys[4]), "bv": init_b(keys[5]),
        "wo": init_w(keys[6]), "bo": init_b(keys[7]),
    }

    query = jax.random.normal(keys[8], (BATCH, SEQ, INPUT_DIM), jnp.float32)
    key_t = jax.random.normal(keys[9], (BATCH, SEQ, INPUT_DIM), jnp.float32)
    value = jax.random.normal(keys[10], (BATCH, SEQ, INPUT_DIM), jnp.float32)

    out = multi_head_attention(params, query, key_t, value, NUM_HEADS)
    out = jax.block_until_ready(out)
    assert out.shape == (BATCH, SEQ, INPUT_DIM)

    # Tight check vs. a reference that mirrors the kernel's mixed precision
    # (residual diff is the approx reciprocal / accumulation order, ~1e-3).
    ref_mixed = reference_mha_mixed(params, query, key_t, value, NUM_HEADS)
    assert jnp.allclose(out, ref_mixed, atol=5e-3, rtol=5e-3), (
        "mismatch vs mixed-precision reference: "
        f"max |diff| = {float(jnp.max(jnp.abs(out - ref_mixed)))}")

    # Loose sanity check vs. the pure-f32 PyTorch-equivalent forward
    # (bf16 matmul operands bound the achievable accuracy here).
    ref_f32 = reference_mha_f32(params, query, key_t, value, NUM_HEADS)
    assert jnp.allclose(out, ref_f32, atol=1e-1, rtol=1e-1), (
        "mismatch vs f32 reference: "
        f"max |diff| = {float(jnp.max(jnp.abs(out - ref_f32)))}")

    print("KERNEL_OK")
</pallas_src>

<mosaic_0001>
module attributes {stable_mosaic.version = 11 : i64} {
  func.func @_fused_mha_kernel(%arg0: i32, %arg1: memref<1x8x32xbf16, #tpu.memory_space<vmem>>, %arg2: memref<1x8x32xbf16, #tpu.memory_space<vmem>>, %arg3: memref<1x8x32xbf16, #tpu.memory_space<vmem>>, %arg4: memref<32x32xbf16, #tpu.memory_space<vmem>>, %arg5: memref<1x32xf32, #tpu.memory_space<vmem>>, %arg6: memref<32x32xbf16, #tpu.memory_space<vmem>>, %arg7: memref<1x32xf32, #tpu.memory_space<vmem>>, %arg8: memref<32x32xbf16, #tpu.memory_space<vmem>>, %arg9: memref<1x32xf32, #tpu.memory_space<vmem>>, %arg10: memref<32x32xbf16, #tpu.memory_space<vmem>>, %arg11: memref<1x32xf32, #tpu.memory_space<vmem>>, %arg12: memref<1x8x32xf32, #tpu.memory_space<vmem>>) attributes {dimension_semantics = [#tpu.dimension_semantics<parallel>], iteration_bounds = array<i64: 2>, scalar_prefetch = 0 : i64, scratch_operands = 0 : i64, tpu.core_type = #tpu.core_type<tc>, window_params = [{transform_indices = @transform_0, window_bounds = array<i64: 1, 8, 32>}, {transform_indices = @transform_1, window_bounds = array<i64: 1, 8, 32>}, {transform_indices = @transform_2, window_bounds = array<i64: 1, 8, 32>}, {pipeline_mode = #tpu.pipeline_mode<synchronous>, transform_indices = @transform_3, window_bounds = array<i64: 32, 32>}, {pipeline_mode = #tpu.pipeline_mode<synchronous>, transform_indices = @transform_4, window_bounds = array<i64: 1, 32>}, {pipeline_mode = #tpu.pipeline_mode<synchronous>, transform_indices = @transform_5, window_bounds = array<i64: 32, 32>}, {pipeline_mode = #tpu.pipeline_mode<synchronous>, transform_indices = @transform_6, window_bounds = array<i64: 1, 32>}, {pipeline_mode = #tpu.pipeline_mode<synchronous>, transform_indices = @transform_7, window_bounds = array<i64: 32, 32>}, {pipeline_mode = #tpu.pipeline_mode<synchronous>, transform_indices = @transform_8, window_bounds = array<i64: 1, 32>}, {pipeline_mode = #tpu.pipeline_mode<synchronous>, transform_indices = @transform_9, window_bounds = array<i64: 32, 32>}, {pipeline_mode = #tpu.pipeline_mode<synchronous>, transform_indices = @transform_10, window_bounds = array<i64: 1, 32>}, {transform_indices = @transform_11, window_bounds = array<i64: 1, 8, 32>}]} {
    %c0 = arith.constant 0 : index
    %c0_0 = arith.constant 0 : index
    %c0_1 = arith.constant 0 : index
    %0 = vector.load %arg1[%c0, %c0_0, %c0_1] : memref<1x8x32xbf16, #tpu.memory_space<vmem>>, vector<1x8x32xbf16>
    %1 = vector.shape_cast %0 : vector<1x8x32xbf16> to vector<8x32xbf16>
    %c0_2 = arith.constant 0 : index
    %c0_3 = arith.constant 0 : index
    %c0_4 = arith.constant 0 : index
    %2 = vector.load %arg2[%c0_2, %c0_3, %c0_4] : memref<1x8x32xbf16, #tpu.memory_space<vmem>>, vector<1x8x32xbf16>
    %3 = vector.shape_cast %2 : vector<1x8x32xbf16> to vector<8x32xbf16>
    %c0_5 = arith.constant 0 : index
    %c0_6 = arith.constant 0 : index
    %c0_7 = arith.constant 0 : index
    %4 = vector.load %arg3[%c0_5, %c0_6, %c0_7] : memref<1x8x32xbf16, #tpu.memory_space<vmem>>, vector<1x8x32xbf16>
    %5 = vector.shape_cast %4 : vector<1x8x32xbf16> to vector<8x32xbf16>
    %c0_8 = arith.constant 0 : index
    %c0_9 = arith.constant 0 : index
    %6 = vector.load %arg4[%c0_8, %c0_9] : memref<32x32xbf16, #tpu.memory_space<vmem>>, vector<32x32xbf16>
    %cst = arith.constant dense<0.000000e+00> : vector<8x32xf32>
    %7 = tpu.matmul %1, %6, %cst {dimension_numbers = #tpu.dot_dimension_numbers<[1], [0], [0], [1], [0, 0, 1, 1], [], []>} : vector<8x32xbf16>, vector<32x32xbf16>, vector<8x32xf32> -> vector<8x32xf32>
    %c0_10 = arith.constant 0 : index
    %c0_11 = arith.constant 0 : index
    %8 = vector.load %arg5[%c0_10, %c0_11] : memref<1x32xf32, #tpu.memory_space<vmem>>, vector<1x32xf32>
    %9 = vector.broadcast %8 : vector<1x32xf32> to vector<8x32xf32>
    %10 = arith.addf %7, %9 : vector<8x32xf32>
    %c0_12 = arith.constant 0 : index
    %c0_13 = arith.constant 0 : index
    %11 = vector.load %arg6[%c0_12, %c0_13] : memref<32x32xbf16, #tpu.memory_space<vmem>>, vector<32x32xbf16>
    %cst_14 = arith.constant dense<0.000000e+00> : vector<8x32xf32>
    %12 = tpu.matmul %3, %11, %cst_14 {dimension_numbers = #tpu.dot_dimension_numbers<[1], [0], [0], [1], [0, 0, 1, 1], [], []>} : vector<8x32xbf16>, vector<32x32xbf16>, vector<8x32xf32> -> vector<8x32xf32>
    %c0_15 = arith.constant 0 : index
    %c0_16 = arith.constant 0 : index
    %13 = vector.load %arg7[%c0_15, %c0_16] : memref<1x32xf32, #tpu.memory_space<vmem>>, vector<1x32xf32>
    %14 = vector.broadcast %13 : vector<1x32xf32> to vector<8x32xf32>
    %15 = arith.addf %12, %14 : vector<8x32xf32>
    %c0_17 = arith.constant 0 : index
    %c0_18 = arith.constant 0 : index
    %16 = vector.load %arg8[%c0_17, %c0_18] : memref<32x32xbf16, #tpu.memory_space<vmem>>, vector<32x32xbf16>
    %cst_19 = arith.constant dense<0.000000e+00> : vector<8x32xf32>
    %17 = tpu.matmul %5, %16, %cst_19 {dimension_numbers = #tpu.dot_dimension_numbers<[1], [0], [0], [1], [0, 0, 1, 1], [], []>} : vector<8x32xbf16>, vector<32x32xbf16>, vector<8x32xf32> -> vector<8x32xf32>
    %c0_20 = arith.constant 0 : index
    %c0_21 = arith.constant 0 : index
    %18 = vector.load %arg9[%c0_20, %c0_21] : memref<1x32xf32, #tpu.memory_space<vmem>>, vector<1x32xf32>
    %19 = vector.broadcast %18 : vector<1x32xf32> to vector<8x32xf32>
    %20 = arith.addf %17, %19 : vector<8x32xf32>
    %cst_22 = arith.constant 0.353553385 : f32
    %21 = vector.broadcast %cst_22 : f32 to vector<8x32xf32>
    %22 = arith.mulf %10, %21 : vector<8x32xf32>
    %23 = arith.truncf %22 : vector<8x32xf32> to vector<8x32xbf16>
    %24 = vector.shape_cast %23 : vector<8x32xbf16> to vector<1x8x32xbf16>
    %25 = arith.truncf %15 : vector<8x32xf32> to vector<8x32xbf16>
    %26 = vector.shape_cast %25 : vector<8x32xbf16> to vector<1x8x32xbf16>
    %27 = arith.truncf %20 : vector<8x32xf32> to vector<8x32xbf16>
    %28 = vector.shape_cast %27 : vector<8x32xbf16> to vector<1x8x32xbf16>
    %cst_23 = arith.constant 0.000000e+00 : f32
    %29 = vector.broadcast %cst_23 : f32 to vector<8x32xf32>
    %30 = vector.extract_strided_slice %24 {offsets = [0, 0, 0], sizes = [1, 8, 8], strides = [1, 1, 1]} : vector<1x8x32xbf16> to vector<1x8x8xbf16>
    %31 = vector.extract_strided_slice %26 {offsets = [0, 0, 0], sizes = [1, 8, 8], strides = [1, 1, 1]} : vector<1x8x32xbf16> to vector<1x8x8xbf16>
    %32 = vector.extract_strided_slice %28 {offsets = [0, 0, 0], sizes = [1, 8, 8], strides = [1, 1, 1]} : vector<1x8x32xbf16> to vector<1x8x8xbf16>
    "tpu.trace_start"() <{level = 10 : i32, message = "bqd,bkd->bqk"}> : () -> ()
    %cst_24 = arith.constant dense<0.000000e+00> : vector<1x8x8xf32>
    %33 = tpu.matmul %30, %31, %cst_24 {dimension_numbers = #tpu.dot_dimension_numbers<[2], [2], [1], [1], [0, 0, 0, 1, 1, 1], [0], [0]>} : vector<1x8x8xbf16>, vector<1x8x8xbf16>, vector<1x8x8xf32> -> vector<1x8x8xf32>
    "tpu.trace_stop"() : () -> ()
    %cst_25 = arith.constant dense<0xFF800000> : vector<1x8xf32>
    %34 = vector.multi_reduction <maximumf>, %33, %cst_25 [2] : vector<1x8x8xf32> to vector<1x8xf32>
    %35 = vector.shape_cast %34 : vector<1x8xf32> to vector<1x8x1xf32>
    %36 = vector.broadcast %35 : vector<1x8x1xf32> to vector<1x8x8xf32>
    %37 = arith.subf %33, %36 : vector<1x8x8xf32>
    %38 = math.exp %37 : vector<1x8x8xf32>
    %cst_26 = arith.constant dense<0.000000e+00> : vector<1x8xf32>
    %39 = vector.multi_reduction <add>, %38, %cst_26 [2] : vector<1x8x8xf32> to vector<1x8xf32>
    %40 = vector.shape_cast %39 : vector<1x8xf32> to vector<1x8x1xf32>
    %41 = tpu.reciprocal %40 {approx = true} : vector<1x8x1xf32> -> vector<1x8x1xf32>
    %42 = vector.broadcast %41 : vector<1x8x1xf32> to vector<1x8x8xf32>
    %43 = arith.mulf %38, %42 : vector<1x8x8xf32>
    %44 = arith.truncf %43 : vector<1x8x8xf32> to vector<1x8x8xbf16>
    "tpu.trace_start"() <{level = 10 : i32, message = "bqk,bkd->bqd"}> : () -> ()
    %cst_27 = arith.constant dense<0.000000e+00> : vector<1x8x8xf32>
    %45 = tpu.matmul %44, %32, %cst_27 {dimension_numbers = #tpu.dot_dimension_numbers<[2], [1], [1], [2], [0, 0, 0, 1, 1, 2], [0], [0]>} : vector<1x8x8xbf16>, vector<1x8x8xbf16>, vector<1x8x8xf32> -> vector<1x8x8xf32>
    "tpu.trace_stop"() : () -> ()
    %46 = vector.shape_cast %45 : vector<1x8x8xf32> to vector<8x8xf32>
    %47 = arith.truncf %46 : vector<8x8xf32> to vector<8x8xbf16>
    %c0_28 = arith.constant 0 : index
    %c0_29 = arith.constant 0 : index
    %48 = vector.load %arg10[%c0_28, %c0_29] : memref<32x32xbf16, #tpu.memory_space<vmem>>, vector<8x32xbf16>
    %cst_30 = arith.constant dense<0.000000e+00> : vector<8x32xf32>
    %49 = tpu.matmul %47, %48, %cst_30 {dimension_numbers = #tpu.dot_dimension_numbers<[1], [0], [0], [1], [0, 0, 1, 1], [], []>} : vector<8x8xbf16>, vector<8x32xbf16>, vector<8x32xf32> -> vector<8x32xf32>
    %50 = arith.addf %29, %49 : vector<8x32xf32>
    %51 = vector.extract_strided_slice %24 {offsets = [0, 0, 8], sizes = [1, 8, 8], strides = [1, 1, 1]} : vector<1x8x32xbf16> to vector<1x8x8xbf16>
    %52 = vector.extract_strided_slice %26 {offsets = [0, 0, 8], sizes = [1, 8, 8], strides = [1, 1, 1]} : vector<1x8x32xbf16> to vector<1x8x8xbf16>
    %53 = vector.extract_strided_slice %28 {offsets = [0, 0, 8], sizes = [1, 8, 8], strides = [1, 1, 1]} : vector<1x8x32xbf16> to vector<1x8x8xbf16>
    "tpu.trace_start"() <{level = 10 : i32, message = "bqd,bkd->bqk"}> : () -> ()
    %cst_31 = arith.constant dense<0.000000e+00> : vector<1x8x8xf32>
    %54 = tpu.matmul %51, %52, %cst_31 {dimension_numbers = #tpu.dot_dimension_numbers<[2], [2], [1], [1], [0, 0, 0, 1, 1, 1], [0], [0]>} : vector<1x8x8xbf16>, vector<1x8x8xbf16>, vector<1x8x8xf32> -> vector<1x8x8xf32>
    "tpu.trace_stop"() : () -> ()
    %cst_32 = arith.constant dense<0xFF800000> : vector<1x8xf32>
    %55 = vector.multi_reduction <maximumf>, %54, %cst_32 [2] : vector<1x8x8xf32> to vector<1x8xf32>
    %56 = vector.shape_cast %55 : vector<1x8xf32> to vector<1x8x1xf32>
    %57 = vector.broadcast %56 : vector<1x8x1xf32> to vector<1x8x8xf32>
    %58 = arith.subf %54, %57 : vector<1x8x8xf32>
    %59 = math.exp %58 : vector<1x8x8xf32>
    %cst_33 = arith.constant dense<0.000000e+00> : vector<1x8xf32>
    %60 = vector.multi_reduction <add>, %59, %cst_33 [2] : vector<1x8x8xf32> to vector<1x8xf32>
    %61 = vector.shape_cast %60 : vector<1x8xf32> to vector<1x8x1xf32>
    %62 = tpu.reciprocal %61 {approx = true} : vector<1x8x1xf32> -> vector<1x8x1xf32>
    %63 = vector.broadcast %62 : vector<1x8x1xf32> to vector<1x8x8xf32>
    %64 = arith.mulf %59, %63 : vector<1x8x8xf32>
    %65 = arith.truncf %64 : vector<1x8x8xf32> to vector<1x8x8xbf16>
    "tpu.trace_start"() <{level = 10 : i32, message = "bqk,bkd->bqd"}> : () -> ()
    %cst_34 = arith.constant dense<0.000000e+00> : vector<1x8x8xf32>
    %66 = tpu.matmul %65, %53, %cst_34 {dimension_numbers = #tpu.dot_dimension_numbers<[2], [1], [1], [2], [0, 0, 0, 1, 1, 2], [0], [0]>} : vector<1x8x8xbf16>, vector<1x8x8xbf16>, vector<1x8x8xf32> -> vector<1x8x8xf32>
    "tpu.trace_stop"() : () -> ()
    %67 = vector.shape_cast %66 : vector<1x8x8xf32> to vector<8x8xf32>
    %68 = arith.truncf %67 : vector<8x8xf32> to vector<8x8xbf16>
    %c8 = arith.constant 8 : index
    %c0_35 = arith.constant 0 : index
    %69 = vector.load %arg10[%c8, %c0_35] : memref<32x32xbf16, #tpu.memory_space<vmem>>, vector<8x32xbf16>
    %cst_36 = arith.constant dense<0.000000e+00> : vector<8x32xf32>
    %70 = tpu.matmul %68, %69, %cst_36 {dimension_numbers = #tpu.dot_dimension_numbers<[1], [0], [0], [1], [0, 0, 1, 1], [], []>} : vector<8x8xbf16>, vector<8x32xbf16>, vector<8x32xf32> -> vector<8x32xf32>
    %71 = arith.addf %50, %70 : vector<8x32xf32>
    %72 = vector.extract_strided_slice %24 {offsets = [0, 0, 16], sizes = [1, 8, 8], strides = [1, 1, 1]} : vector<1x8x32xbf16> to vector<1x8x8xbf16>
    %73 = vector.extract_strided_slice %26 {offsets = [0, 0, 16], sizes = [1, 8, 8], strides = [1, 1, 1]} : vector<1x8x32xbf16> to vector<1x8x8xbf16>
    %74 = vector.extract_strided_slice %28 {offsets = [0, 0, 16], sizes = [1, 8, 8], strides = [1, 1, 1]} : vector<1x8x32xbf16> to vector<1x8x8xbf16>
    "tpu.trace_start"() <{level = 10 : i32, message = "bqd,bkd->bqk"}> : () -> ()
    %cst_37 = arith.constant dense<0.000000e+00> : vector<1x8x8xf32>
    %75 = tpu.matmul %72, %73, %cst_37 {dimension_numbers = #tpu.dot_dimension_numbers<[2], [2], [1], [1], [0, 0, 0, 1, 1, 1], [0], [0]>} : vector<1x8x8xbf16>, vector<1x8x8xbf16>, vector<1x8x8xf32> -> vector<1x8x8xf32>
    "tpu.trace_stop"() : () -> ()
    %cst_38 = arith.constant dense<0xFF800000> : vector<1x8xf32>
    %76 = vector.multi_reduction <maximumf>, %75, %cst_38 [2] : vector<1x8x8xf32> to vector<1x8xf32>
    %77 = vector.shape_cast %76 : vector<1x8xf32> to vector<1x8x1xf32>
    %78 = vector.broadcast %77 : vector<1x8x1xf32> to vector<1x8x8xf32>
    %79 = arith.subf %75, %78 : vector<1x8x8xf32>
    %80 = math.exp %79 : vector<1x8x8xf32>
    %cst_39 = arith.constant dense<0.000000e+00> : vector<1x8xf32>
    %81 = vector.multi_reduction <add>, %80, %cst_39 [2] : vector<1x8x8xf32> to vector<1x8xf32>
    %82 = vector.shape_cast %81 : vector<1x8xf32> to vector<1x8x1xf32>
    %83 = tpu.reciprocal %82 {approx = true} : vector<1x8x1xf32> -> vector<1x8x1xf32>
    %84 = vector.broadcast %83 : vector<1x8x1xf32> to vector<1x8x8xf32>
    %85 = arith.mulf %80, %84 : vector<1x8x8xf32>
    %86 = arith.truncf %85 : vector<1x8x8xf32> to vector<1x8x8xbf16>
    "tpu.trace_start"() <{level = 10 : i32, message = "bqk,bkd->bqd"}> : () -> ()
    %cst_40 = arith.constant dense<0.000000e+00> : vector<1x8x8xf32>
    %87 = tpu.matmul %86, %74, %cst_40 {dimension_numbers = #tpu.dot_dimension_numbers<[2], [1], [1], [2], [0, 0, 0, 1, 1, 2], [0], [0]>} : vector<1x8x8xbf16>, vector<1x8x8xbf16>, vector<1x8x8xf32> -> vector<1x8x8xf32>
    "tpu.trace_stop"() : () -> ()
    %88 = vector.shape_cast %87 : vector<1x8x8xf32> to vector<8x8xf32>
    %89 = arith.truncf %88 : vector<8x8xf32> to vector<8x8xbf16>
    %c16 = arith.constant 16 : index
    %c0_41 = arith.constant 0 : index
    %90 = vector.load %arg10[%c16, %c0_41] : memref<32x32xbf16, #tpu.memory_space<vmem>>, vector<8x32xbf16>
    %cst_42 = arith.constant dense<0.000000e+00> : vector<8x32xf32>
    %91 = tpu.matmul %89, %90, %cst_42 {dimension_numbers = #tpu.dot_dimension_numbers<[1], [0], [0], [1], [0, 0, 1, 1], [], []>} : vector<8x8xbf16>, vector<8x32xbf16>, vector<8x32xf32> -> vector<8x32xf32>
    %92 = arith.addf %71, %91 : vector<8x32xf32>
    %93 = vector.extract_strided_slice %24 {offsets = [0, 0, 24], sizes = [1, 8, 8], strides = [1, 1, 1]} : vector<1x8x32xbf16> to vector<1x8x8xbf16>
    %94 = vector.extract_strided_slice %26 {offsets = [0, 0, 24], sizes = [1, 8, 8], strides = [1, 1, 1]} : vector<1x8x32xbf16> to vector<1x8x8xbf16>
    %95 = vector.extract_strided_slice %28 {offsets = [0, 0, 24], sizes = [1, 8, 8], strides = [1, 1, 1]} : vector<1x8x32xbf16> to vector<1x8x8xbf16>
    "tpu.trace_start"() <{level = 10 : i32, message = "bqd,bkd->bqk"}> : () -> ()
    %cst_43 = arith.constant dense<0.000000e+00> : vector<1x8x8xf32>
    %96 = tpu.matmul %93, %94, %cst_43 {dimension_numbers = #tpu.dot_dimension_numbers<[2], [2], [1], [1], [0, 0, 0, 1, 1, 1], [0], [0]>} : vector<1x8x8xbf16>, vector<1x8x8xbf16>, vector<1x8x8xf32> -> vector<1x8x8xf32>
    "tpu.trace_stop"() : () -> ()
    %cst_44 = arith.constant dense<0xFF800000> : vector<1x8xf32>
    %97 = vector.multi_reduction <maximumf>, %96, %cst_44 [2] : vector<1x8x8xf32> to vector<1x8xf32>
    %98 = vector.shape_cast %97 : vector<1x8xf32> to vector<1x8x1xf32>
    %99 = vector.broadcast %98 : vector<1x8x1xf32> to vector<1x8x8xf32>
    %100 = arith.subf %96, %99 : vector<1x8x8xf32>
    %101 = math.exp %100 : vector<1x8x8xf32>
    %cst_45 = arith.constant dense<0.000000e+00> : vector<1x8xf32>
    %102 = vector.multi_reduction <add>, %101, %cst_45 [2] : vector<1x8x8xf32> to vector<1x8xf32>
    %103 = vector.shape_cast %102 : vector<1x8xf32> to vector<1x8x1xf32>
    %104 = tpu.reciprocal %103 {approx = true} : vector<1x8x1xf32> -> vector<1x8x1xf32>
    %105 = vector.broadcast %104 : vector<1x8x1xf32> to vector<1x8x8xf32>
    %106 = arith.mulf %101, %105 : vector<1x8x8xf32>
    %107 = arith.truncf %106 : vector<1x8x8xf32> to vector<1x8x8xbf16>
    "tpu.trace_start"() <{level = 10 : i32, message = "bqk,bkd->bqd"}> : () -> ()
    %cst_46 = arith.constant dense<0.000000e+00> : vector<1x8x8xf32>
    %108 = tpu.matmul %107, %95, %cst_46 {dimension_numbers = #tpu.dot_dimension_numbers<[2], [1], [1], [2], [0, 0, 0, 1, 1, 2], [0], [0]>} : vector<1x8x8xbf16>, vector<1x8x8xbf16>, vector<1x8x8xf32> -> vector<1x8x8xf32>
    "tpu.trace_stop"() : () -> ()
    %109 = vector.shape_cast %108 : vector<1x8x8xf32> to vector<8x8xf32>
    %110 = arith.truncf %109 : vector<8x8xf32> to vector<8x8xbf16>
    %c24 = arith.constant 24 : index
    %c0_47 = arith.constant 0 : index
    %111 = vector.load %arg10[%c24, %c0_47] : memref<32x32xbf16, #tpu.memory_space<vmem>>, vector<8x32xbf16>
    %cst_48 = arith.constant dense<0.000000e+00> : vector<8x32xf32>
    %112 = tpu.matmul %110, %111, %cst_48 {dimension_numbers = #tpu.dot_dimension_numbers<[1], [0], [0], [1], [0, 0, 1, 1], [], []>} : vector<8x8xbf16>, vector<8x32xbf16>, vector<8x32xf32> -> vector<8x32xf32>
    %113 = arith.addf %92, %112 : vector<8x32xf32>
    %c0_49 = arith.constant 0 : index
    %c0_50 = arith.constant 0 : index
    %114 = vector.load %arg11[%c0_49, %c0_50] : memref<1x32xf32, #tpu.memory_space<vmem>>, vector<1x32xf32>
    %115 = vector.broadcast %114 : vector<1x32xf32> to vector<8x32xf32>
    %116 = arith.addf %113, %115 : vector<8x32xf32>
    %117 = vector.shape_cast %116 : vector<8x32xf32> to vector<1x8x32xf32>
    %c0_51 = arith.constant 0 : index
    %c0_52 = arith.constant 0 : index
    %c0_53 = arith.constant 0 : index
    %118 = vector.load %arg12[%c0_51, %c0_52, %c0_53] : memref<1x8x32xf32, #tpu.memory_space<vmem>>, vector<1x8x32xf32>
    tpu.vector_store %arg12[%c0_51, %c0_52, %c0_53], %117 {strides = array<i32>} : memref<1x8x32xf32, #tpu.memory_space<vmem>>, vector<1x8x32xf32>,
    return
  }
  func.func @transform_0(%arg0: i32) -> (i32, i32, i32) {
    %c0_i32 = arith.constant 0 : i32
    %c0_i32_0 = arith.constant 0 : i32
    %c0_i32_1 = arith.constant 0 : i32
    return %arg0, %c0_i32, %c0_i32_0 : i32, i32, i32
  }
  func.func @transform_1(%arg0: i32) -> (i32, i32, i32) {
    %c0_i32 = arith.constant 0 : i32
    %c0_i32_0 = arith.constant 0 : i32
    %c0_i32_1 = arith.constant 0 : i32
    return %arg0, %c0_i32, %c0_i32_0 : i32, i32, i32
  }
  func.func @transform_2(%arg0: i32) -> (i32, i32, i32) {
    %c0_i32 = arith.constant 0 : i32
    %c0_i32_0 = arith.constant 0 : i32
    %c0_i32_1 = arith.constant 0 : i32
    return %arg0, %c0_i32, %c0_i32_0 : i32, i32, i32
  }
  func.func @transform_3(%arg0: i32) -> (i32, i32) {
    %c0_i32 = arith.constant 0 : i32
    %c0_i32_0 = arith.constant 0 : i32
    %c0_i32_1 = arith.constant 0 : i32
    return %c0_i32, %c0_i32_0 : i32, i32
  }
  func.func @transform_4(%arg0: i32) -> (i32, i32) {
    %c0_i32 = arith.constant 0 : i32
    %c0_i32_0 = arith.constant 0 : i32
    %c0_i32_1 = arith.constant 0 : i32
    return %c0_i32, %c0_i32_0 : i32, i32
  }
  func.func @transform_5(%arg0: i32) -> (i32, i32) {
    %c0_i32 = arith.constant 0 : i32
    %c0_i32_0 = arith.constant 0 : i32
    %c0_i32_1 = arith.constant 0 : i32
    return %c0_i32, %c0_i32_0 : i32, i32
  }
  func.func @transform_6(%arg0: i32) -> (i32, i32) {
    %c0_i32 = arith.constant 0 : i32
    %c0_i32_0 = arith.constant 0 : i32
    %c0_i32_1 = arith.constant 0 : i32
    return %c0_i32, %c0_i32_0 : i32, i32
  }
  func.func @transform_7(%arg0: i32) -> (i32, i32) {
    %c0_i32 = arith.constant 0 : i32
    %c0_i32_0 = arith.constant 0 : i32
    %c0_i32_1 = arith.constant 0 : i32
    return %c0_i32, %c0_i32_0 : i32, i32
  }
  func.func @transform_8(%arg0: i32) -> (i32, i32) {
    %c0_i32 = arith.constant 0 : i32
    %c0_i32_0 = arith.constant 0 : i32
    %c0_i32_1 = arith.constant 0 : i32
    return %c0_i32, %c0_i32_0 : i32, i32
  }
  func.func @transform_9(%arg0: i32) -> (i32, i32) {
    %c0_i32 = arith.constant 0 : i32
    %c0_i32_0 = arith.constant 0 : i32
    %c0_i32_1 = arith.constant 0 : i32
    return %c0_i32, %c0_i32_0 : i32, i32
  }
  func.func @transform_10(%arg0: i32) -> (i32, i32) {
    %c0_i32 = arith.constant 0 : i32
    %c0_i32_0 = arith.constant 0 : i32
    %c0_i32_1 = arith.constant 0 : i32
    return %c0_i32, %c0_i32_0 : i32, i32
  }
  func.func @transform_11(%arg0: i32) -> (i32, i32, i32) {
    %c0_i32 = arith.constant 0 : i32
    %c0_i32_0 = arith.constant 0 : i32
    %c0_i32_1 = arith.constant 0 : i32
    return %arg0, %c0_i32, %c0_i32_0 : i32, i32, i32
  }
}

module attributes {stable_mosaic.version = 11 : i64} {
  func.func @_fused_mha_kernel(%arg0: i32, %arg1: memref<1x8x32xbf16, #tpu.memory_space<vmem>>, %arg2: memref<1x8x32xbf16, #tpu.memory_space<vmem>>, %arg3: memref<1x8x32xbf16, #tpu.memory_space<vmem>>, %arg4: memref<32x32xbf16, #tpu.memory_space<vmem>>, %arg5: memref<1x32xf32, #tpu.memory_space<vmem>>, %arg6: memref<32x32xbf16, #tpu.memory_space<vmem>>, %arg7: memref<1x32xf32, #tpu.memory_space<vmem>>, %arg8: memref<32x32xbf16, #tpu.memory_space<vmem>>, %arg9: memref<1x32xf32, #tpu.memory_space<vmem>>, %arg10: memref<32x32xbf16, #tpu.memory_space<vmem>>, %arg11: memref<1x32xf32, #tpu.memory_space<vmem>>, %arg12: memref<1x8x32xf32, #tpu.memory_space<vmem>>) attributes {dimension_semantics = [#tpu.dimension_semantics<parallel>], iteration_bounds = array<i64: 2>, scalar_prefetch = 0 : i64, scratch_operands = 0 : i64, tpu.core_type = #tpu.core_type<tc>, window_params = [{transform_indices = @transform_0, window_bounds = array<i64: 1, 8, 32>}, {transform_indices = @transform_1, window_bounds = array<i64: 1, 8, 32>}, {transform_indices = @transform_2, window_bounds = array<i64: 1, 8, 32>}, {pipeline_mode = #tpu.pipeline_mode<synchronous>, transform_indices = @transform_3, window_bounds = array<i64: 32, 32>}, {pipeline_mode = #tpu.pipeline_mode<synchronous>, transform_indices = @transform_4, window_bounds = array<i64: 1, 32>}, {pipeline_mode = #tpu.pipeline_mode<synchronous>, transform_indices = @transform_5, window_bounds = array<i64: 32, 32>}, {pipeline_mode = #tpu.pipeline_mode<synchronous>, transform_indices = @transform_6, window_bounds = array<i64: 1, 32>}, {pipeline_mode = #tpu.pipeline_mode<synchronous>, transform_indices = @transform_7, window_bounds = array<i64: 32, 32>}, {pipeline_mode = #tpu.pipeline_mode<synchronous>, transform_indices = @transform_8, window_bounds = array<i64: 1, 32>}, {pipeline_mode = #tpu.pipeline_mode<synchronous>, transform_indices = @transform_9, window_bounds = array<i64: 32, 32>}, {pipeline_mode = #tpu.pipeline_mode<synchronous>, transform_indices = @transform_10, window_bounds = array<i64: 1, 32>}, {transform_indices = @transform_11, window_bounds = array<i64: 1, 8, 32>}]} {
    %c0 = arith.constant 0 : index
    %c0_0 = arith.constant 0 : index
    %c0_1 = arith.constant 0 : index
    %0 = vector.load %arg1[%c0, %c0_0, %c0_1] : memref<1x8x32xbf16, #tpu.memory_space<vmem>>, vector<1x8x32xbf16>
    %1 = vector.shape_cast %0 : vector<1x8x32xbf16> to vector<8x32xbf16>
    %c0_2 = arith.constant 0 : index
    %c0_3 = arith.constant 0 : index
    %c0_4 = arith.constant 0 : index
    %2 = vector.load %arg2[%c0_2, %c0_3, %c0_4] : memref<1x8x32xbf16, #tpu.memory_space<vmem>>, vector<1x8x32xbf16>
    %3 = vector.shape_cast %2 : vector<1x8x32xbf16> to vector<8x32xbf16>
    %c0_5 = arith.constant 0 : index
    %c0_6 = arith.constant 0 : index
    %c0_7 = arith.constant 0 : index
    %4 = vector.load %arg3[%c0_5, %c0_6, %c0_7] : memref<1x8x32xbf16, #tpu.memory_space<vmem>>, vector<1x8x32xbf16>
    %5 = vector.shape_cast %4 : vector<1x8x32xbf16> to vector<8x32xbf16>
    %c0_8 = arith.constant 0 : index
    %c0_9 = arith.constant 0 : index
    %6 = vector.load %arg4[%c0_8, %c0_9] : memref<32x32xbf16, #tpu.memory_space<vmem>>, vector<32x32xbf16>
    %cst = arith.constant dense<0.000000e+00> : vector<8x32xf32>
    %7 = tpu.matmul %1, %6, %cst {dimension_numbers = #tpu.dot_dimension_numbers<[1], [0], [0], [1], [0, 0, 1, 1], [], []>} : vector<8x32xbf16>, vector<32x32xbf16>, vector<8x32xf32> -> vector<8x32xf32>
    %c0_10 = arith.constant 0 : index
    %c0_11 = arith.constant 0 : index
    %8 = vector.load %arg5[%c0_10, %c0_11] : memref<1x32xf32, #tpu.memory_space<vmem>>, vector<1x32xf32>
    %9 = vector.broadcast %8 : vector<1x32xf32> to vector<8x32xf32>
    %10 = arith.addf %7, %9 : vector<8x32xf32>
    %c0_12 = arith.constant 0 : index
    %c0_13 = arith.constant 0 : index
    %11 = vector.load %arg6[%c0_12, %c0_13] : memref<32x32xbf16, #tpu.memory_space<vmem>>, vector<32x32xbf16>
    %cst_14 = arith.constant dense<0.000000e+00> : vector<8x32xf32>
    %12 = tpu.matmul %3, %11, %cst_14 {dimension_numbers = #tpu.dot_dimension_numbers<[1], [0], [0], [1], [0, 0, 1, 1], [], []>} : vector<8x32xbf16>, vector<32x32xbf16>, vector<8x32xf32> -> vector<8x32xf32>
    %c0_15 = arith.constant 0 : index
    %c0_16 = arith.constant 0 : index
    %13 = vector.load %arg7[%c0_15, %c0_16] : memref<1x32xf32, #tpu.memory_space<vmem>>, vector<1x32xf32>
    %14 = vector.broadcast %13 : vector<1x32xf32> to vector<8x32xf32>
    %15 = arith.addf %12, %14 : vector<8x32xf32>
    %c0_17 = arith.constant 0 : index
    %c0_18 = arith.constant 0 : index
    %16 = vector.load %arg8[%c0_17, %c0_18] : memref<32x32xbf16, #tpu.memory_space<vmem>>, vector<32x32xbf16>
    %cst_19 = arith.constant dense<0.000000e+00> : vector<8x32xf32>
    %17 = tpu.matmul %5, %16, %cst_19 {dimension_numbers = #tpu.dot_dimension_numbers<[1], [0], [0], [1], [0, 0, 1, 1], [], []>} : vector<8x32xbf16>, vector<32x32xbf16>, vector<8x32xf32> -> vector<8x32xf32>
    %c0_20 = arith.constant 0 : index
    %c0_21 = arith.constant 0 : index
    %18 = vector.load %arg9[%c0_20, %c0_21] : memref<1x32xf32, #tpu.memory_space<vmem>>, vector<1x32xf32>
    %19 = vector.broadcast %18 : vector<1x32xf32> to vector<8x32xf32>
    %20 = arith.addf %17, %19 : vector<8x32xf32>
    %cst_22 = arith.constant 0.353553385 : f32
    %21 = vector.broadcast %cst_22 : f32 to vector<8x32xf32>
    %22 = arith.mulf %10, %21 : vector<8x32xf32>
    %23 = arith.truncf %22 : vector<8x32xf32> to vector<8x32xbf16>
    %24 = vector.shape_cast %23 : vector<8x32xbf16> to vector<1x8x32xbf16>
    %25 = arith.truncf %15 : vector<8x32xf32> to vector<8x32xbf16>
    %26 = vector.shape_cast %25 : vector<8x32xbf16> to vector<1x8x32xbf16>
    %27 = arith.truncf %20 : vector<8x32xf32> to vector<8x32xbf16>
    %28 = vector.shape_cast %27 : vector<8x32xbf16> to vector<1x8x32xbf16>
    %cst_23 = arith.constant 0.000000e+00 : f32
    %29 = vector.broadcast %cst_23 : f32 to vector<8x32xf32>
    %30 = vector.extract_strided_slice %24 {offsets = [0, 0, 0], sizes = [1, 8, 8], strides = [1, 1, 1]} : vector<1x8x32xbf16> to vector<1x8x8xbf16>
    %31 = vector.extract_strided_slice %26 {offsets = [0, 0, 0], sizes = [1, 8, 8], strides = [1, 1, 1]} : vector<1x8x32xbf16> to vector<1x8x8xbf16>
    %32 = vector.extract_strided_slice %28 {offsets = [0, 0, 0], sizes = [1, 8, 8], strides = [1, 1, 1]} : vector<1x8x32xbf16> to vector<1x8x8xbf16>
    "tpu.trace_start"() <{level = 10 : i32, message = "bqd,bkd->bqk"}> : () -> ()
    %cst_24 = arith.constant dense<0.000000e+00> : vector<1x8x8xf32>
    %33 = tpu.matmul %30, %31, %cst_24 {dimension_numbers = #tpu.dot_dimension_numbers<[2], [2], [1], [1], [0, 0, 0, 1, 1, 1], [0], [0]>} : vector<1x8x8xbf16>, vector<1x8x8xbf16>, vector<1x8x8xf32> -> vector<1x8x8xf32>
    "tpu.trace_stop"() : () -> ()
    %cst_25 = arith.constant dense<0xFF800000> : vector<1x8xf32>
    %34 = vector.multi_reduction <maximumf>, %33, %cst_25 [2] : vector<1x8x8xf32> to vector<1x8xf32>
    %35 = vector.shape_cast %34 : vector<1x8xf32> to vector<1x8x1xf32>
    %36 = vector.broadcast %35 : vector<1x8x1xf32> to vector<1x8x8xf32>
    %37 = arith.subf %33, %36 : vector<1x8x8xf32>
    %38 = math.exp %37 : vector<1x8x8xf32>
    %cst_26 = arith.constant dense<0.000000e+00> : vector<1x8xf32>
    %39 = vector.multi_reduction <add>, %38, %cst_26 [2] : vector<1x8x8xf32> to vector<1x8xf32>
    %40 = vector.shape_cast %39 : vector<1x8xf32> to vector<1x8x1xf32>
    %41 = tpu.reciprocal %40 {approx = true} : vector<1x8x1xf32> -> vector<1x8x1xf32>
    %42 = vector.broadcast %41 : vector<1x8x1xf32> to vector<1x8x8xf32>
    %43 = arith.mulf %38, %42 : vector<1x8x8xf32>
    %44 = arith.truncf %43 : vector<1x8x8xf32> to vector<1x8x8xbf16>
    "tpu.trace_start"() <{level = 10 : i32, message = "bqk,bkd->bqd"}> : () -> ()
    %cst_27 = arith.constant dense<0.000000e+00> : vector<1x8x8xf32>
    %45 = tpu.matmul %44, %32, %cst_27 {dimension_numbers = #tpu.dot_dimension_numbers<[2], [1], [1], [2], [0, 0, 0, 1, 1, 2], [0], [0]>} : vector<1x8x8xbf16>, vector<1x8x8xbf16>, vector<1x8x8xf32> -> vector<1x8x8xf32>
    "tpu.trace_stop"() : () -> ()
    %46 = vector.shape_cast %45 : vector<1x8x8xf32> to vector<8x8xf32>
    %47 = arith.truncf %46 : vector<8x8xf32> to vector<8x8xbf16>
    %c0_28 = arith.constant 0 : index
    %c0_29 = arith.constant 0 : index
    %48 = vector.load %arg10[%c0_28, %c0_29] : memref<32x32xbf16, #tpu.memory_space<vmem>>, vector<8x32xbf16>
    %cst_30 = arith.constant dense<0.000000e+00> : vector<8x32xf32>
    %49 = tpu.matmul %47, %48, %cst_30 {dimension_numbers = #tpu.dot_dimension_numbers<[1], [0], [0], [1], [0, 0, 1, 1], [], []>} : vector<8x8xbf16>, vector<8x32xbf16>, vector<8x32xf32> -> vector<8x32xf32>
    %50 = arith.addf %29, %49 : vector<8x32xf32>
    %51 = vector.extract_strided_slice %24 {offsets = [0, 0, 8], sizes = [1, 8, 8], strides = [1, 1, 1]} : vector<1x8x32xbf16> to vector<1x8x8xbf16>
    %52 = vector.extract_strided_slice %26 {offsets = [0, 0, 8], sizes = [1, 8, 8], strides = [1, 1, 1]} : vector<1x8x32xbf16> to vector<1x8x8xbf16>
    %53 = vector.extract_strided_slice %28 {offsets = [0, 0, 8], sizes = [1, 8, 8], strides = [1, 1, 1]} : vector<1x8x32xbf16> to vector<1x8x8xbf16>
    "tpu.trace_start"() <{level = 10 : i32, message = "bqd,bkd->bqk"}> : () -> ()
    %cst_31 = arith.constant dense<0.000000e+00> : vector<1x8x8xf32>
    %54 = tpu.matmul %51, %52, %cst_31 {dimension_numbers = #tpu.dot_dimension_numbers<[2], [2], [1], [1], [0, 0, 0, 1, 1, 1], [0], [0]>} : vector<1x8x8xbf16>, vector<1x8x8xbf16>, vector<1x8x8xf32> -> vector<1x8x8xf32>
    "tpu.trace_stop"() : () -> ()
    %cst_32 = arith.constant dense<0xFF800000> : vector<1x8xf32>
    %55 = vector.multi_reduction <maximumf>, %54, %cst_32 [2] : vector<1x8x8xf32> to vector<1x8xf32>
    %56 = vector.shape_cast %55 : vector<1x8xf32> to vector<1x8x1xf32>
    %57 = vector.broadcast %56 : vector<1x8x1xf32> to vector<1x8x8xf32>
    %58 = arith.subf %54, %57 : vector<1x8x8xf32>
    %59 = math.exp %58 : vector<1x8x8xf32>
    %cst_33 = arith.constant dense<0.000000e+00> : vector<1x8xf32>
    %60 = vector.multi_reduction <add>, %59, %cst_33 [2] : vector<1x8x8xf32> to vector<1x8xf32>
    %61 = vector.shape_cast %60 : vector<1x8xf32> to vector<1x8x1xf32>
    %62 = tpu.reciprocal %61 {approx = true} : vector<1x8x1xf32> -> vector<1x8x1xf32>
    %63 = vector.broadcast %62 : vector<1x8x1xf32> to vector<1x8x8xf32>
    %64 = arith.mulf %59, %63 : vector<1x8x8xf32>
    %65 = arith.truncf %64 : vector<1x8x8xf32> to vector<1x8x8xbf16>
    "tpu.trace_start"() <{level = 10 : i32, message = "bqk,bkd->bqd"}> : () -> ()
    %cst_34 = arith.constant dense<0.000000e+00> : vector<1x8x8xf32>
    %66 = tpu.matmul %65, %53, %cst_34 {dimension_numbers = #tpu.dot_dimension_numbers<[2], [1], [1], [2], [0, 0, 0, 1, 1, 2], [0], [0]>} : vector<1x8x8xbf16>, vector<1x8x8xbf16>, vector<1x8x8xf32> -> vector<1x8x8xf32>
    "tpu.trace_stop"() : () -> ()
    %67 = vector.shape_cast %66 : vector<1x8x8xf32> to vector<8x8xf32>
    %68 = arith.truncf %67 : vector<8x8xf32> to vector<8x8xbf16>
    %c8 = arith.constant 8 : index
    %c0_35 = arith.constant 0 : index
    %69 = vector.load %arg10[%c8, %c0_35] : memref<32x32xbf16, #tpu.memory_space<vmem>>, vector<8x32xbf16>
    %cst_36 = arith.constant dense<0.000000e+00> : vector<8x32xf32>
    %70 = tpu.matmul %68, %69, %cst_36 {dimension_numbers = #tpu.dot_dimension_numbers<[1], [0], [0], [1], [0, 0, 1, 1], [], []>} : vector<8x8xbf16>, vector<8x32xbf16>, vector<8x32xf32> -> vector<8x32xf32>
    %71 = arith.addf %50, %70 : vector<8x32xf32>
    %72 = vector.extract_strided_slice %24 {offsets = [0, 0, 16], sizes = [1, 8, 8], strides = [1, 1, 1]} : vector<1x8x32xbf16> to vector<1x8x8xbf16>
    %73 = vector.extract_strided_slice %26 {offsets = [0, 0, 16], sizes = [1, 8, 8], strides = [1, 1, 1]} : vector<1x8x32xbf16> to vector<1x8x8xbf16>
    %74 = vector.extract_strided_slice %28 {offsets = [0, 0, 16], sizes = [1, 8, 8], strides = [1, 1, 1]} : vector<1x8x32xbf16> to vector<1x8x8xbf16>
    "tpu.trace_start"() <{level = 10 : i32, message = "bqd,bkd->bqk"}> : () -> ()
    %cst_37 = arith.constant dense<0.000000e+00> : vector<1x8x8xf32>
    %75 = tpu.matmul %72, %73, %cst_37 {dimension_numbers = #tpu.dot_dimension_numbers<[2], [2], [1], [1], [0, 0, 0, 1, 1, 1], [0], [0]>} : vector<1x8x8xbf16>, vector<1x8x8xbf16>, vector<1x8x8xf32> -> vector<1x8x8xf32>
    "tpu.trace_stop"() : () -> ()
    %cst_38 = arith.constant dense<0xFF800000> : vector<1x8xf32>
    %76 = vector.multi_reduction <maximumf>, %75, %cst_38 [2] : vector<1x8x8xf32> to vector<1x8xf32>
    %77 = vector.shape_cast %76 : vector<1x8xf32> to vector<1x8x1xf32>
    %78 = vector.broadcast %77 : vector<1x8x1xf32> to vector<1x8x8xf32>
    %79 = arith.subf %75, %78 : vector<1x8x8xf32>
    %80 = math.exp %79 : vector<1x8x8xf32>
    %cst_39 = arith.constant dense<0.000000e+00> : vector<1x8xf32>
    %81 = vector.multi_reduction <add>, %80, %cst_39 [2] : vector<1x8x8xf32> to vector<1x8xf32>
    %82 = vector.shape_cast %81 : vector<1x8xf32> to vector<1x8x1xf32>
    %83 = tpu.reciprocal %82 {approx = true} : vector<1x8x1xf32> -> vector<1x8x1xf32>
    %84 = vector.broadcast %83 : vector<1x8x1xf32> to vector<1x8x8xf32>
    %85 = arith.mulf %80, %84 : vector<1x8x8xf32>
    %86 = arith.truncf %85 : vector<1x8x8xf32> to vector<1x8x8xbf16>
    "tpu.trace_start"() <{level = 10 : i32, message = "bqk,bkd->bqd"}> : () -> ()
    %cst_40 = arith.constant dense<0.000000e+00> : vector<1x8x8xf32>
    %87 = tpu.matmul %86, %74, %cst_40 {dimension_numbers = #tpu.dot_dimension_numbers<[2], [1], [1], [2], [0, 0, 0, 1, 1, 2], [0], [0]>} : vector<1x8x8xbf16>, vector<1x8x8xbf16>, vector<1x8x8xf32> -> vector<1x8x8xf32>
    "tpu.trace_stop"() : () -> ()
    %88 = vector.shape_cast %87 : vector<1x8x8xf32> to vector<8x8xf32>
    %89 = arith.truncf %88 : vector<8x8xf32> to vector<8x8xbf16>
    %c16 = arith.constant 16 : index
    %c0_41 = arith.constant 0 : index
    %90 = vector.load %arg10[%c16, %c0_41] : memref<32x32xbf16, #tpu.memory_space<vmem>>, vector<8x32xbf16>
    %cst_42 = arith.constant dense<0.000000e+00> : vector<8x32xf32>
    %91 = tpu.matmul %89, %90, %cst_42 {dimension_numbers = #tpu.dot_dimension_numbers<[1], [0], [0], [1], [0, 0, 1, 1], [], []>} : vector<8x8xbf16>, vector<8x32xbf16>, vector<8x32xf32> -> vector<8x32xf32>
    %92 = arith.addf %71, %91 : vector<8x32xf32>
    %93 = vector.extract_strided_slice %24 {offsets = [0, 0, 24], sizes = [1, 8, 8], strides = [1, 1, 1]} : vector<1x8x32xbf16> to vector<1x8x8xbf16>
    %94 = vector.extract_strided_slice %26 {offsets = [0, 0, 24], sizes = [1, 8, 8], strides = [1, 1, 1]} : vector<1x8x32xbf16> to vector<1x8x8xbf16>
    %95 = vector.extract_strided_slice %28 {offsets = [0, 0, 24], sizes = [1, 8, 8], strides = [1, 1, 1]} : vector<1x8x32xbf16> to vector<1x8x8xbf16>
    "tpu.trace_start"() <{level = 10 : i32, message = "bqd,bkd->bqk"}> : () -> ()
    %cst_43 = arith.constant dense<0.000000e+00> : vector<1x8x8xf32>
    %96 = tpu.matmul %93, %94, %cst_43 {dimension_numbers = #tpu.dot_dimension_numbers<[2], [2], [1], [1], [0, 0, 0, 1, 1, 1], [0], [0]>} : vector<1x8x8xbf16>, vector<1x8x8xbf16>, vector<1x8x8xf32> -> vector<1x8x8xf32>
    "tpu.trace_stop"() : () -> ()
    %cst_44 = arith.constant dense<0xFF800000> : vector<1x8xf32>
    %97 = vector.multi_reduction <maximumf>, %96, %cst_44 [2] : vector<1x8x8xf32> to vector<1x8xf32>
    %98 = vector.shape_cast %97 : vector<1x8xf32> to vector<1x8x1xf32>
    %99 = vector.broadcast %98 : vector<1x8x1xf32> to vector<1x8x8xf32>
    %100 = arith.subf %96, %99 : vector<1x8x8xf32>
    %101 = math.exp %100 : vector<1x8x8xf32>
    %cst_45 = arith.constant dense<0.000000e+00> : vector<1x8xf32>
    %102 = vector.multi_reduction <add>, %101, %cst_45 [2] : vector<1x8x8xf32> to vector<1x8xf32>
    %103 = vector.shape_cast %102 : vector<1x8xf32> to vector<1x8x1xf32>
    %104 = tpu.reciprocal %103 {approx = true} : vector<1x8x1xf32> -> vector<1x8x1xf32>
    %105 = vector.broadcast %104 : vector<1x8x1xf32> to vector<1x8x8xf32>
    %106 = arith.mulf %101, %105 : vector<1x8x8xf32>
    %107 = arith.truncf %106 : vector<1x8x8xf32> to vector<1x8x8xbf16>
    "tpu.trace_start"() <{level = 10 : i32, message = "bqk,bkd->bqd"}> : () -> ()
    %cst_46 = arith.constant dense<0.000000e+00> : vector<1x8x8xf32>
    %108 = tpu.matmul %107, %95, %cst_46 {dimension_numbers = #tpu.dot_dimension_numbers<[2], [1], [1], [2], [0, 0, 0, 1, 1, 2], [0], [0]>} : vector<1x8x8xbf16>, vector<1x8x8xbf16>, vector<1x8x8xf32> -> vector<1x8x8xf32>
    "tpu.trace_stop"() : () -> ()
    %109 = vector.shape_cast %108 : vector<1x8x8xf32> to vector<8x8xf32>
    %110 = arith.truncf %109 : vector<8x8xf32> to vector<8x8xbf16>
    %c24 = arith.constant 24 : index
    %c0_47 = arith.constant 0 : index
    %111 = vector.load %arg10[%c24, %c0_47] : memref<32x32xbf16, #tpu.memory_space<vmem>>, vector<8x32xbf16>
    %cst_48 = arith.constant dense<0.000000e+00> : vector<8x32xf32>
    %112 = tpu.matmul %110, %111, %cst_48 {dimension_numbers = #tpu.dot_dimension_numbers<[1], [0], [0], [1], [0, 0, 1, 1], [], []>} : vector<8x8xbf16>, vector<8x32xbf16>, vector<8x32xf32> -> vector<8x32xf32>
    %113 = arith.addf %92, %112 : vector<8x32xf32>
    %c0_49 = arith.constant 0 : index
    %c0_50 = arith.constant 0 : index
    %114 = vector.load %arg11[%c0_49, %c0_50] : memref<1x32xf32, #tpu.memory_space<vmem>>, vector<1x32xf32>
    %115 = vector.broadcast %114 : vector<1x32xf32> to vector<8x32xf32>
    %116 = arith.addf %113, %115 : vector<8x32xf32>
    %117 = vector.shape_cast %116 : vector<8x32xf32> to vector<1x8x32xf32>
    %c0_51 = arith.constant 0 : index
    %c0_52 = arith.constant 0 : index
    %c0_53 = arith.constant 0 : index
    %118 = vector.load %arg12[%c0_51, %c0_52, %c0_53] : memref<1x8x32xf32, #tpu.memory_space<vmem>>, vector<1x8x32xf32>
    tpu.vector_store %arg12[%c0_51, %c0_52, %c0_53], %117 {strides = array<i32>} : memref<1x8x32xf32, #tpu.memory_space<vmem>>, vector<1x8x32xf32>,
    return
  }
  func.func @transform_0(%arg0: i32) -> (i32, i32, i32) {
    %c0_i32 = arith.constant 0 : i32
    %c0_i32_0 = arith.constant 0 : i32
    %c0_i32_1 = arith.constant 0 : i32
    return %arg0, %c0_i32, %c0_i32_0 : i32, i32, i32
  }
  func.func @transform_1(%arg0: i32) -> (i32, i32, i32) {
    %c0_i32 = arith.constant 0 : i32
    %c0_i32_0 = arith.constant 0 : i32
    %c0_i32_1 = arith.constant 0 : i32
    return %arg0, %c0_i32, %c0_i32_0 : i32, i32, i32
  }
  func.func @transform_2(%arg0: i32) -> (i32, i32, i32) {
    %c0_i32 = arith.constant 0 : i32
    %c0_i32_0 = arith.constant 0 : i32
    %c0_i32_1 = arith.constant 0 : i32
    return %arg0, %c0_i32, %c0_i32_0 : i32, i32, i32
  }
  func.func @transform_3(%arg0: i32) -> (i32, i32) {
    %c0_i32 = arith.constant 0 : i32
    %c0_i32_0 = arith.constant 0 : i32
    %c0_i32_1 = arith.constant 0 : i32
    return %c0_i32, %c0_i32_0 : i32, i32
  }
  func.func @transform_4(%arg0: i32) -> (i32, i32) {
    %c0_i32 = arith.constant 0 : i32
    %c0_i32_0 = arith.constant 0 : i32
    %c0_i32_1 = arith.constant 0 : i32
    return %c0_i32, %c0_i32_0 : i32, i32
  }
  func.func @transform_5(%arg0: i32) -> (i32, i32) {
    %c0_i32 = arith.constant 0 : i32
    %c0_i32_0 = arith.constant 0 : i32
    %c0_i32_1 = arith.constant 0 : i32
    return %c0_i32, %c0_i32_0 : i32, i32
  }
  func.func @transform_6(%arg0: i32) -> (i32, i32) {
    %c0_i32 = arith.constant 0 : i32
    %c0_i32_0 = arith.constant 0 : i32
    %c0_i32_1 = arith.constant 0 : i32
    return %c0_i32, %c0_i32_0 : i32, i32
  }
  func.func @transform_7(%arg0: i32) -> (i32, i32) {
    %c0_i32 = arith.constant 0 : i32
    %c0_i32_0 = arith.constant 0 : i32
    %c0_i32_1 = arith.constant 0 : i32
    return %c0_i32, %c0_i32_0 : i32, i32
  }
  func.func @transform_8(%arg0: i32) -> (i32, i32) {
    %c0_i32 = arith.constant 0 : i32
    %c0_i32_0 = arith.constant 0 : i32
    %c0_i32_1 = arith.constant 0 : i32
    return %c0_i32, %c0_i32_0 : i32, i32
  }
  func.func @transform_9(%arg0: i32) -> (i32, i32) {
    %c0_i32 = arith.constant 0 : i32
    %c0_i32_0 = arith.constant 0 : i32
    %c0_i32_1 = arith.constant 0 : i32
    return %c0_i32, %c0_i32_0 : i32, i32
  }
  func.func @transform_10(%arg0: i32) -> (i32, i32) {
    %c0_i32 = arith.constant 0 : i32
    %c0_i32_0 = arith.constant 0 : i32
    %c0_i32_1 = arith.constant 0 : i32
    return %c0_i32, %c0_i32_0 : i32, i32
  }
  func.func @transform_11(%arg0: i32) -> (i32, i32, i32) {
    %c0_i32 = arith.constant 0 : i32
    %c0_i32_0 = arith.constant 0 : i32
    %c0_i32_1 = arith.constant 0 : i32
    return %arg0, %c0_i32, %c0_i32_0 : i32, i32, i32
  }
}

</mosaic_0001>

<llo_original>
// kernel: tpu_custom_call.1
$region0: #{tpu_custom_call.1}
  #allocation0 [shape = 'u32[]', space=smem, size = 0x4, offset = 0x4, fixed_abs, tag = 'smem constant byte address 0x4 - core index']
  #allocation1 [shape = 'u32[144,128]{1,0:T(1,128)}', space=vmem, size = 0x12000, scoped, tag = 'internal scratch']
  %s0 = inlined_call_operand.hbm [shape: bf16[2,8,32], index: 0, kind: input, shape index: {}]
  %s1 = inlined_call_operand.hbm [shape: bf16[2,8,32], index: 1, kind: input, shape index: {}]
  %s2 = inlined_call_operand.hbm [shape: bf16[2,8,32], index: 2, kind: input, shape index: {}]
  %s3 = inlined_call_operand.hbm [shape: bf16[32,32], index: 3, kind: input, shape index: {}]
  %s4 = inlined_call_operand.hbm [shape: f32[1,32], index: 4, kind: input, shape index: {}]
  %s5 = inlined_call_operand.hbm [shape: bf16[32,32], index: 5, kind: input, shape index: {}]
  %s6 = inlined_call_operand.hbm [shape: f32[1,32], index: 6, kind: input, shape index: {}]
  %s7 = inlined_call_operand.hbm [shape: bf16[32,32], index: 7, kind: input, shape index: {}]
  %s8 = inlined_call_operand.hbm [shape: f32[1,32], index: 8, kind: input, shape index: {}]
  %s9 = inlined_call_operand.vmem [shape: bf16[32,32], index: 9, kind: input, shape index: {}]
  %s10 = inlined_call_operand.vmem [shape: f32[1,32], index: 10, kind: input, shape index: {}]
  %s11 = inlined_call_operand.hbm [shape: f32[2,8,32], index: 11, kind: output, shape index: {}]
  %s12 = sld [smem:[#allocation0]]
  $region113: #{tpu_custom_call.1} parent=0
    _
  %s14 = ssub.s32 1, %s12
  %s15 = scalar_select 0, %s14, %s12
  $region1: #{tpu_custom_call.1} parent=0
    #allocation2 [shape = 'u8[4096]{0}', space=vmem, size = 0x1000, scoped, tag = 'input window, operand 0']
    #allocation3 [shape = 's32[2]{0}', space=sflag, size = 0x8, scoped, tag = 'scoped memory for tpu_custom_call.1']
    #allocation4 [shape = 's32[2]{0}', space=sflag, size = 0x8, scoped, tag = 'scoped memory for tpu_custom_call.1']
    #allocation5 [shape = 'u8[4096]{0}', space=vmem, size = 0x1000, scoped, tag = 'input window, operand 1']
    #allocation6 [shape = 's32[2]{0}', space=sflag, size = 0x8, scoped, tag = 'scoped memory for tpu_custom_call.1']
    #allocation7 [shape = 'u8[4096]{0}', space=vmem, size = 0x1000, scoped, tag = 'input window, operand 2']
    #allocation8 [shape = 'u8[8192]{0}', space=vmem, size = 0x2000, scoped, tag = 'input window, operand 3, single buffered']
    #allocation9 [shape = 's32[1]{0}', space=sflag, size = 0x4, scoped, tag = 'scoped memory for tpu_custom_call.1']
    #allocation10 [shape = 'u8[512]{0}', space=vmem, size = 0x400, scoped, tag = 'input window, operand 4, single buffered']
    #allocation11 [shape = 'u8[8192]{0}', space=vmem, size = 0x2000, scoped, tag = 'input window, operand 5, single buffered']
    #allocation12 [shape = 's32[1]{0}', space=sflag, size = 0x4, scoped, tag = 'scoped memory for tpu_custom_call.1']
    #allocation13 [shape = 'u8[512]{0}', space=vmem, size = 0x400, scoped, tag = 'input window, operand 6, single buffered']
    #allocation14 [shape = 'u8[8192]{0}', space=vmem, size = 0x2000, scoped, tag = 'input window, operand 7, single buffered']
    #allocation15 [shape = 's32[1]{0}', space=sflag, size = 0x4, scoped, tag = 'scoped memory for tpu_custom_call.1']
    #allocation16 [shape = 'u8[512]{0}', space=vmem, size = 0x400, scoped, tag = 'input window, operand 8, single buffered']
    #allocation17 [shape = 'u8[8192]{0}', space=vmem, size = 0x2000, scoped, tag = 'output window, operand 0']
    %16 = vsyncpa [#allocation3], 0
    %s17 = scalar_lea.sflag [#allocation3], 1
    %18 = vsyncpa %s17, 0
    %19 = vsyncpa [#allocation6], 0
    %s20 = scalar_lea.sflag [#allocation6], 1
    %21 = vsyncpa %s20, 0
    %22 = vsyncpa [#allocation9], 0
    %23 = vsyncpa [#allocation12], 0
    %24 = vsyncpa [#allocation15], 0
    %25 = vsyncpa [#allocation4], 0
    %s26 = scalar_lea.sflag [#allocation4], 1
    %27 = vsyncpa %s26, 0
    loop: start=0, step=1, limit=4
    $region2: #{tpu_custom_call.1} parent=1 // loop_pre_header
      _
    $region3: #{tpu_custom_call.1} parent=1 // loop_header
      %s29 = sphi 0, %s33
      %p30 = scmp.ge.s32.totalorder %s29, 4
      %s39 = sphi 0, %s41
      %s42 = sphi 0, %s39
      %s43 = sphi 0, %s42
      %s59 = sphi 0, %s43
      %s65 = sphi 0, %s67
      %s68 = sphi 0, %s65
      %s69 = sphi 0, %s68
      %s85 = sphi 0, %s69
      %s91 = sphi 0, %s93
      %s94 = sphi 0, %s91
      %s95 = sphi 0, %s94
      %s111 = sphi 0, %s95
      %s115 = sphi 0, %s115
      %s117 = sphi 0, %s115
      %s118 = sphi 0, %s117
      %s132 = sphi 0, %s118
      %s136 = sphi 0, %s136
      %s138 = sphi 0, %s136
      %s139 = sphi 0, %s138
      %s153 = sphi 0, %s139
      %s157 = sphi 0, %s157
      %s159 = sphi 0, %s157
      %s160 = sphi 0, %s159
      %s174 = sphi 0, %s160
      %s178 = sphi 0, %s178
      %s180 = sphi 0, %s178
      %s181 = sphi 0, %s180
      %s195 = sphi 0, %s181
      %s199 = sphi 0, %s199
      %s201 = sphi 0, %s199
      %s202 = sphi 0, %s201
      %s216 = sphi 0, %s202
      %s220 = sphi 0, %s220
      %s222 = sphi 0, %s220
      %s223 = sphi 0, %s222
      %s237 = sphi 0, %s223
      %s241 = sphi 0, %s241
      %s243 = sphi 0, %s241
      %s244 = sphi 0, %s243
      %s258 = sphi 0, %s244
      %s262 = sphi 0, %s262
      %s264 = sphi 0, %s262
      %s265 = sphi 0, %s264
      %s279 = sphi 0, %s265
      %s285 = sphi 0, %s287
      %s288 = sphi 0, %s285
      %s289 = sphi 0, %s288
      %s305 = sphi 0, %s289
    $region4: #{tpu_custom_call.1} parent=1 // loop_header_branch
      %32 = sbr.rel (%p30) target = $region8
    $region5: #{tpu_custom_call.1} parent=1 // loop_body
      %s34 = ssub.s32 %s29, 1
      %s35 = ssub.s32 %s29, 2
      %s36 = sadd.s32 %s29, 1
      %s37 = ssub.s32 %s29, %s36
      %p38 = scmp.eq.s32.totalorder %s37, 0
      %s40 = sadd.s32 %s39, 1
      %s41 = scalar_select %p38, %s39, %s40
      %p44 = pneg %p38
      %p45 = scmp.eq.s32.totalorder %s29, 1
      %p46 = por %p44, %p45
      %p47 = scmp.ne.s32.totalorder %s39, %s42
      %p48 = scmp.eq.s32.totalorder %s29, 0
      %p49 = por %p47, %p48
      %p50 = scmp.ne.s32.totalorder %s39, %s42
      %p51 = scmp.eq.s32.totalorder %s34, 1
      %p52 = por %p50, %p51
      %p53 = scmp.ne.s32.totalorder %s42, %s43
      %p54 = scmp.eq.s32.totalorder %s34, 0
      %p55 = por %p53, %p54
      %p56 = scmp.ne.s32.totalorder %s42, %s43
      %p57 = scmp.eq.s32.totalorder %s35, 1
      %p58 = por %p56, %p57
      %p60 = scmp.ne.s32.totalorder %s43, %s59
      %p61 = scmp.eq.s32.totalorder %s35, 0
      %p62 = por %p60, %p61
      %s63 = ssub.s32 %s29, %s36
      %p64 = scmp.eq.s32.totalorder %s63, 0
      %s66 = sadd.s32 %s65, 1
      %s67 = scalar_select %p64, %s65, %s66
      %p70 = pneg %p64
      %p71 = scmp.eq.s32.totalorder %s29, 1
      %p72 = por %p70, %p71
      %p73 = scmp.ne.s32.totalorder %s65, %s68
      %p74 = scmp.eq.s32.totalorder %s29, 0
      %p75 = por %p73, %p74
      %p76 = scmp.ne.s32.totalorder %s65, %s68
      %p77 = scmp.eq.s32.totalorder %s34, 1
      %p78 = por %p76, %p77
      %p79 = scmp.ne.s32.totalorder %s68, %s69
      %p80 = scmp.eq.s32.totalorder %s34, 0
      %p81 = por %p79, %p80
      %p82 = scmp.ne.s32.totalorder %s68, %s69
      %p83 = scmp.eq.s32.totalorder %s35, 1
      %p84 = por %p82, %p83
      %p86 = scmp.ne.s32.totalorder %s69, %s85
      %p87 = scmp.eq.s32.totalorder %s35, 0
      %p88 = por %p86, %p87
      %s89 = ssub.s32 %s29, %s36
      %p90 = scmp.eq.s32.totalorder %s89, 0
      %s92 = sadd.s32 %s91, 1
      %s93 = scalar_select %p90, %s91, %s92
      %p96 = pneg %p90
      %p97 = scmp.eq.s32.totalorder %s29, 1
      %p98 = por %p96, %p97
      %p99 = scmp.ne.s32.totalorder %s91, %s94
      %p100 = scmp.eq.s32.totalorder %s29, 0
      %p101 = por %p99, %p100
      %p102 = scmp.ne.s32.totalorder %s91, %s94
      %p103 = scmp.eq.s32.totalorder %s34, 1
      %p104 = por %p102, %p103
      %p105 = scmp.ne.s32.totalorder %s94, %s95
      %p106 = scmp.eq.s32.totalorder %s34, 0
      %p107 = por %p105, %p106
      %p108 = scmp.ne.s32.totalorder %s94, %s95
      %p109 = scmp.eq.s32.totalorder %s35, 1
      %p110 = por %p108, %p109
      %p112 = scmp.ne.s32.totalorder %s95, %s111
      %p113 = scmp.eq.s32.totalorder %s35, 0
      %p114 = por %p112, %p113
      %s116 = sadd.s32 %s115, 1
      %p119 = scmp.eq.s32.totalorder %s29, 1
      %p120 = scmp.ne.s32.totalorder %s115, %s117
      %p121 = scmp.eq.s32.totalorder %s29, 0
      %p122 = por %p120, %p121
      %p123 = scmp.ne.s32.totalorder %s115, %s117
      %p124 = scmp.eq.s32.totalorder %s34, 1
      %p125 = por %p123, %p124
      %p126 = scmp.ne.s32.totalorder %s117, %s118
      %p127 = scmp.eq.s32.totalorder %s34, 0
      %p128 = por %p126, %p127
      %p129 = scmp.ne.s32.totalorder %s117, %s118
      %p130 = scmp.eq.s32.totalorder %s35, 1
      %p131 = por %p129, %p130
      %p133 = scmp.ne.s32.totalorder %s118, %s132
      %p134 = scmp.eq.s32.totalorder %s35, 0
      %p135 = por %p133, %p134
      %s137 = sadd.s32 %s136, 1
      %p140 = scmp.eq.s32.totalorder %s29, 1
      %p141 = scmp.ne.s32.totalorder %s136, %s138
      %p142 = scmp.eq.s32.totalorder %s29, 0
      %p143 = por %p141, %p142
      %p144 = scmp.ne.s32.totalorder %s136, %s138
      %p145 = scmp.eq.s32.totalorder %s34, 1
      %p146 = por %p144, %p145
      %p147 = scmp.ne.s32.totalorder %s138, %s139
      %p148 = scmp.eq.s32.totalorder %s34, 0
      %p149 = por %p147, %p148
      %p150 = scmp.ne.s32.totalorder %s138, %s139
      %p151 = scmp.eq.s32.totalorder %s35, 1
      %p152 = por %p150, %p151
      %p154 = scmp.ne.s32.totalorder %s139, %s153
      %p155 = scmp.eq.s32.totalorder %s35, 0
      %p156 = por %p154, %p155
      %s158 = sadd.s32 %s157, 1
      %p161 = scmp.eq.s32.totalorder %s29, 1
      %p162 = scmp.ne.s32.totalorder %s157, %s159
      %p163 = scmp.eq.s32.totalorder %s29, 0
      %p164 = por %p162, %p163
      %p165 = scmp.ne.s32.totalorder %s157, %s159
      %p166 = scmp.eq.s32.totalorder %s34, 1
      %p167 = por %p165, %p166
      %p168 = scmp.ne.s32.totalorder %s159, %s160
      %p169 = scmp.eq.s32.totalorder %s34, 0
      %p170 = por %p168, %p169
      %p171 = scmp.ne.s32.totalorder %s159, %s160
      %p172 = scmp.eq.s32.totalorder %s35, 1
      %p173 = por %p171, %p172
      %p175 = scmp.ne.s32.totalorder %s160, %s174
      %p176 = scmp.eq.s32.totalorder %s35, 0
      %p177 = por %p175, %p176
      %s179 = sadd.s32 %s178, 1
      %p182 = scmp.eq.s32.totalorder %s29, 1
      %p183 = scmp.ne.s32.totalorder %s178, %s180
      %p184 = scmp.eq.s32.totalorder %s29, 0
      %p185 = por %p183, %p184
      %p186 = scmp.ne.s32.totalorder %s178, %s180
      %p187 = scmp.eq.s32.totalorder %s34, 1
      %p188 = por %p186, %p187
      %p189 = scmp.ne.s32.totalorder %s180, %s181
      %p190 = scmp.eq.s32.totalorder %s34, 0
      %p191 = por %p189, %p190
      %p192 = scmp.ne.s32.totalorder %s180, %s181
      %p193 = scmp.eq.s32.totalorder %s35, 1
      %p194 = por %p192, %p193
      %p196 = scmp.ne.s32.totalorder %s181, %s195
      %p197 = scmp.eq.s32.totalorder %s35, 0
      %p198 = por %p196, %p197
      %s200 = sadd.s32 %s199, 1
      %p203 = scmp.eq.s32.totalorder %s29, 1
      %p204 = scmp.ne.s32.totalorder %s199, %s201
      %p205 = scmp.eq.s32.totalorder %s29, 0
      %p206 = por %p204, %p205
      %p207 = scmp.ne.s32.totalorder %s199, %s201
      %p208 = scmp.eq.s32.totalorder %s34, 1
      %p209 = por %p207, %p208
      %p210 = scmp.ne.s32.totalorder %s201, %s202
      %p211 = scmp.eq.s32.totalorder %s34, 0
      %p212 = por %p210, %p211
      %p213 = scmp.ne.s32.totalorder %s201, %s202
      %p214 = scmp.eq.s32.totalorder %s35, 1
      %p215 = por %p213, %p214
      %p217 = scmp.ne.s32.totalorder %s202, %s216
      %p218 = scmp.eq.s32.totalorder %s35, 0
      %p219 = por %p217, %p218
      %s221 = sadd.s32 %s220, 1
      %p224 = scmp.eq.s32.totalorder %s29, 1
      %p225 = scmp.ne.s32.totalorder %s220, %s222
      %p226 = scmp.eq.s32.totalorder %s29, 0
      %p227 = por %p225, %p226
      %p228 = scmp.ne.s32.totalorder %s220, %s222
      %p229 = scmp.eq.s32.totalorder %s34, 1
      %p230 = por %p228, %p229
      %p231 = scmp.ne.s32.totalorder %s222, %s223
      %p232 = scmp.eq.s32.totalorder %s34, 0
      %p233 = por %p231, %p232
      %p234 = scmp.ne.s32.totalorder %s222, %s223
      %p235 = scmp.eq.s32.totalorder %s35, 1
      %p236 = por %p234, %p235
      %p238 = scmp.ne.s32.totalorder %s223, %s237
      %p239 = scmp.eq.s32.totalorder %s35, 0
      %p240 = por %p238, %p239
      %s242 = sadd.s32 %s241, 1
      %p245 = scmp.eq.s32.totalorder %s29, 1
      %p246 = scmp.ne.s32.totalorder %s241, %s243
      %p247 = scmp.eq.s32.totalorder %s29, 0
      %p248 = por %p246, %p247
      %p249 = scmp.ne.s32.totalorder %s241, %s243
      %p250 = scmp.eq.s32.totalorder %s34, 1
      %p251 = por %p249, %p250
      %p252 = scmp.ne.s32.totalorder %s243, %s244
      %p253 = scmp.eq.s32.totalorder %s34, 0
      %p254 = por %p252, %p253
      %p255 = scmp.ne.s32.totalorder %s243, %s244
      %p256 = scmp.eq.s32.totalorder %s35, 1
      %p257 = por %p255, %p256
      %p259 = scmp.ne.s32.totalorder %s244, %s258
      %p260 = scmp.eq.s32.totalorder %s35, 0
      %p261 = por %p259, %p260
      %s263 = sadd.s32 %s262, 1
      %p266 = scmp.eq.s32.totalorder %s29, 1
      %p267 = scmp.ne.s32.totalorder %s262, %s264
      %p268 = scmp.eq.s32.totalorder %s29, 0
      %p269 = por %p267, %p268
      %p270 = scmp.ne.s32.totalorder %s262, %s264
      %p271 = scmp.eq.s32.totalorder %s34, 1
      %p272 = por %p270, %p271
      %p273 = scmp.ne.s32.totalorder %s264, %s265
      %p274 = scmp.eq.s32.totalorder %s34, 0
      %p275 = por %p273, %p274
      %p276 = scmp.ne.s32.totalorder %s264, %s265
      %p277 = scmp.eq.s32.totalorder %s35, 1
      %p278 = por %p276, %p277
      %p280 = scmp.ne.s32.totalorder %s265, %s279
      %p281 = scmp.eq.s32.totalorder %s35, 0
      %p282 = por %p280, %p281
      %s283 = ssub.s32 %s29, %s36
      %p284 = scmp.eq.s32.totalorder %s283, 0
      %s286 = sadd.s32 %s285, 1
      %s287 = scalar_select %p284, %s285, %s286
      %p290 = pneg %p284
      %p291 = scmp.eq.s32.totalorder %s29, 1
      %p292 = por %p290, %p291
      %p293 = scmp.ne.s32.totalorder %s285, %s288
      %p294 = scmp.eq.s32.totalorder %s29, 0
      %p295 = por %p293, %p294
      %p296 = scmp.ne.s32.totalorder %s285, %s288
      %p297 = scmp.eq.s32.totalorder %s34, 1
      %p298 = por %p296, %p297
      %p299 = scmp.ne.s32.totalorder %s288, %s289
      %p300 = scmp.eq.s32.totalorder %s34, 0
      %p301 = por %p299, %p300
      %p302 = scmp.ne.s32.totalorder %s288, %s289
      %p303 = scmp.eq.s32.totalorder %s35, 1
      %p304 = por %p302, %p303
      %p306 = scmp.ne.s32.totalorder %s289, %s305
      %p307 = scmp.eq.s32.totalorder %s35, 0
      %p308 = por %p306, %p307
      %p309 = scmp.le.s32.totalorder 1, %s29
      %p310 = scmp.lt.s32.totalorder %s29, 3
      %p311 = pnand %p309, %p310
      %p312 = pneg %p311
      // Predicated region
      $region9: #{tpu_custom_call.1} parent=5 // pred_check
        _
      $region10: #{tpu_custom_call.1} parent=5 // pred_check_branch
        %314 = sbr.rel (%p311) target = $region12
      $region11: #{tpu_custom_call.1} parent=5 // pred_region
        %s315 = ssub.s32 %s29, 1
        // Predicated region
        $region13: #{tpu_custom_call.1} parent=11 // pred_check
          %p316 = pneg %p128
        $region14: #{tpu_custom_call.1} parent=11 // pred_check_branch
          %318 = sbr.rel (%p316) target = $region16
        $region15: #{tpu_custom_call.1} parent=11 // pred_region
          %s320 = ssub.s32 256, 256
          %321 = vsyncadd [#allocation9], %s320
          %s322 = sshll.u32 [#allocation8], 4
          %s323 = int_to_ptr.vmem [resolvable:$true] %s322
          %328 = dma.hbm_to_vmem [thread:$0]  %s3, 256, %s323, [#allocation9], 64, 64, 4
        $region16: #{tpu_custom_call.1} parent=11 // pred_fallthru
          _
        // Predicated region
        $region17: #{tpu_custom_call.1} parent=11 // pred_check
          %p329 = pneg %p149
        $region18: #{tpu_custom_call.1} parent=11 // pred_check_branch
          %331 = sbr.rel (%p329) target = $region20
        $region19: #{tpu_custom_call.1} parent=11 // pred_region
          %s333 = ssub.s32 16, 16
          %334 = vsyncadd [#allocation9], %s333
          %s336 = sshll.u32 [#allocation10], 4
          %s337 = int_to_ptr.vmem [resolvable:$true] %s336
          %339 = dma.hbm_to_vmem [thread:$0]  %s4, 16, %s337, [#allocation9]
        $region20: #{tpu_custom_call.1} parent=11 // pred_fallthru
          _
        // Predicated region
        $region21: #{tpu_custom_call.1} parent=11 // pred_check
          %p340 = pneg %p170
        $region22: #{tpu_custom_call.1} parent=11 // pred_check_branch
          %342 = sbr.rel (%p340) target = $region24
        $region23: #{tpu_custom_call.1} parent=11 // pred_region
          %s344 = ssub.s32 256, 256
          %345 = vsyncadd [#allocation12], %s344
          %s346 = sshll.u32 [#allocation11], 4
          %s347 = int_to_ptr.vmem [resolvable:$true] %s346
          %352 = dma.hbm_to_vmem [thread:$0]  %s5, 256, %s347, [#allocation12], 64, 64, 4
        $region24: #{tpu_custom_call.1} parent=11 // pred_fallthru
          _
        // Predicated region
        $region25: #{tpu_custom_call.1} parent=11 // pred_check
          %p353 = pneg %p191
        $region26: #{tpu_custom_call.1} parent=11 // pred_check_branch
          %355 = sbr.rel (%p353) target = $region28
        $region27: #{tpu_custom_call.1} parent=11 // pred_region
          %s357 = ssub.s32 16, 16
          %358 = vsyncadd [#allocation12], %s357
          %s360 = sshll.u32 [#allocation13], 4
          %s361 = int_to_ptr.vmem [resolvable:$true] %s360
          %363 = dma.hbm_to_vmem [thread:$0]  %s6, 16, %s361, [#allocation12]
        $region28: #{tpu_custom_call.1} parent=11 // pred_fallthru
          _
        // Predicated region
        $region29: #{tpu_custom_call.1} parent=11 // pred_check
          %p364 = pneg %p212
        $region30: #{tpu_custom_call.1} parent=11 // pred_check_branch
          %366 = sbr.rel (%p364) target = $region32
        $region31: #{tpu_custom_call.1} parent=11 // pred_region
          %s368 = ssub.s32 256, 256
          %369 = vsyncadd [#allocation15], %s368
          %s370 = sshll.u32 [#allocation14], 4
          %s371 = int_to_ptr.vmem [resolvable:$true] %s370
          %376 = dma.hbm_to_vmem [thread:$0]  %s7, 256, %s371, [#allocation15], 64, 64, 4
        $region32: #{tpu_custom_call.1} parent=11 // pred_fallthru
          _
        // Predicated region
        $region33: #{tpu_custom_call.1} parent=11 // pred_check
          %p377 = pneg %p233
        $region34: #{tpu_custom_call.1} parent=11 // pred_check_branch
          %379 = sbr.rel (%p377) target = $region36
        $region35: #{tpu_custom_call.1} parent=11 // pred_region
          %s381 = ssub.s32 16, 16
          %382 = vsyncadd [#allocation15], %s381
          %s384 = sshll.u32 [#allocation16], 4
          %s385 = int_to_ptr.vmem [resolvable:$true] %s384
          %387 = dma.hbm_to_vmem [thread:$0]  %s8, 16, %s385, [#allocation15]
        $region36: #{tpu_custom_call.1} parent=11 // pred_fallthru
          _
        // Predicated region
        $region37: #{tpu_custom_call.1} parent=11 // pred_check
          %p388 = pneg %p254
        $region38: #{tpu_custom_call.1} parent=11 // pred_check_branch
          %390 = sbr.rel (%p388) target = $region40
        $region39: #{tpu_custom_call.1} parent=11 // pred_region
          _
        $region40: #{tpu_custom_call.1} parent=11 // pred_fallthru
          _
        // Predicated region
        $region41: #{tpu_custom_call.1} parent=11 // pred_check
          %p391 = pneg %p275
        $region42: #{tpu_custom_call.1} parent=11 // pred_check_branch
          %393 = sbr.rel (%p391) target = $region44
        $region43: #{tpu_custom_call.1} parent=11 // pred_region
          _
        $region44: #{tpu_custom_call.1} parent=11 // pred_fallthru
          _
      $region12: #{tpu_custom_call.1} parent=5 // pred_fallthru
        _
      %p394 = scmp.lt.s32.totalorder %s29, 2
      // Predicated region
      $region45: #{tpu_custom_call.1} parent=5 // pred_check
        %p395 = pneg %p394
      $region46: #{tpu_custom_call.1} parent=5 // pred_check_branch
        %397 = sbr.rel (%p395) target = $region48
      $region47: #{tpu_custom_call.1} parent=5 // pred_region
        // Predicated region
        $region49: #{tpu_custom_call.1} parent=47 // pred_check
          %p398 = pneg %p49
        $region50: #{tpu_custom_call.1} parent=47 // pred_check_branch
          %400 = sbr.rel (%p398) target = $region52
        $region51: #{tpu_custom_call.1} parent=47 // pred_region
          %s401 = sand.u32 %s39, 1
          %s402 = scalar_lea.sflag [#allocation3], %s401
          %s403 = sand.u32 %s39, 1
          %s404 = smul.addr %s403, 4
          %s405 = scalar_lea.vmem [#allocation2], %s404
          %s407 = ssub.s32 64, 64
          %408 = vsyncadd %s402, %s407
          %s409 = smul.addr %s29, 64
          %s410 = scalar_lea.hbm %s0, %s409
          %s412 = sshll.u32 %s405, 4
          %s413 = int_to_ptr.vmem [resolvable:$true] %s412
          %415 = dma.hbm_to_vmem [thread:$0]  %s410, 64, %s413, %s402
        $region52: #{tpu_custom_call.1} parent=47 // pred_fallthru
          _
        // Predicated region
        $region53: #{tpu_custom_call.1} parent=47 // pred_check
          %p416 = pneg %p75
        $region54: #{tpu_custom_call.1} parent=47 // pred_check_branch
          %418 = sbr.rel (%p416) target = $region56
        $region55: #{tpu_custom_call.1} parent=47 // pred_region
          %s419 = sand.u32 %s29, 1
          %s420 = scalar_lea.sflag [#allocation6], %s419
          %s421 = sand.u32 %s65, 1
          %s422 = smul.addr %s421, 4
          %s423 = scalar_lea.vmem [#allocation5], %s422
          %s425 = ssub.s32 64, 64
          %426 = vsyncadd %s420, %s425
          %s427 = smul.addr %s29, 64
          %s428 = scalar_lea.hbm %s1, %s427
          %s430 = sshll.u32 %s423, 4
          %s431 = int_to_ptr.vmem [resolvable:$true] %s430
          %433 = dma.hbm_to_vmem [thread:$0]  %s428, 64, %s431, %s420
        $region56: #{tpu_custom_call.1} parent=47 // pred_fallthru
          _
        // Predicated region
        $region57: #{tpu_custom_call.1} parent=47 // pred_check
          %p434 = pneg %p101
        $region58: #{tpu_custom_call.1} parent=47 // pred_check_branch
          %436 = sbr.rel (%p434) target = $region60
        $region59: #{tpu_custom_call.1} parent=47 // pred_region
          %s437 = sand.u32 %s29, 1
          %s438 = scalar_lea.sflag [#allocation6], %s437
          %s439 = sand.u32 %s91, 1
          %s440 = smul.addr %s439, 4
          %s441 = scalar_lea.vmem [#allocation7], %s440
          %s443 = ssub.s32 64, 64
          %444 = vsyncadd %s438, %s443
          %s445 = smul.addr %s29, 64
          %s446 = scalar_lea.hbm %s2, %s445
          %s448 = sshll.u32 %s441, 4
          %s449 = int_to_ptr.vmem [resolvable:$true] %s448
          %451 = dma.hbm_to_vmem [thread:$0]  %s446, 64, %s449, %s438
        $region60: #{tpu_custom_call.1} parent=47 // pred_fallthru
          _
      $region48: #{tpu_custom_call.1} parent=5 // pred_fallthru
        _
      %p452 = scmp.le.s32.totalorder 1, %s29
      %p453 = scmp.lt.s32.totalorder %s29, 3
      %p454 = pnand %p452, %p453
      %p455 = pneg %p454
      // Predicated region
      $region61: #{tpu_custom_call.1} parent=5 // pred_check
        _
      $region62: #{tpu_custom_call.1} parent=5 // pred_check_branch
        %457 = sbr.rel (%p454) target = $region64
      $region63: #{tpu_custom_call.1} parent=5 // pred_region
        %s458 = ssub.s32 %s29, 1
        %s459 = sand.u32 %s42, 1
        %s460 = scalar_lea.sflag [#allocation3], %s459
        %s461 = sand.u32 %s42, 1
        %s462 = smul.addr %s461, 4
        %s463 = scalar_lea.vmem [#allocation2], %s462
        // Predicated region
        $region65: #{tpu_custom_call.1} parent=63 // pred_check
          %p464 = pneg %p55
        $region66: #{tpu_custom_call.1} parent=63 // pred_check_branch
          %466 = sbr.rel (%p464) target = $region68
        $region67: #{tpu_custom_call.1} parent=63 // pred_region
          %467 = dma.done %s460, 64
        $region68: #{tpu_custom_call.1} parent=63 // pred_fallthru
          _
        %s468 = sand.u32 %s34, 1
        %s469 = scalar_lea.sflag [#allocation6], %s468
        %s470 = sand.u32 %s68, 1
        %s471 = smul.addr %s470, 4
        %s472 = scalar_lea.vmem [#allocation5], %s471
        // Predicated region
        $region69: #{tpu_custom_call.1} parent=63 // pred_check
          %p473 = pneg %p81
        $region70: #{tpu_custom_call.1} parent=63 // pred_check_branch
          %475 = sbr.rel (%p473) target = $region72
        $region71: #{tpu_custom_call.1} parent=63 // pred_region
          %476 = dma.done %s469, 64
        $region72: #{tpu_custom_call.1} parent=63 // pred_fallthru
          _
        %s477 = sand.u32 %s34, 1
        %s478 = scalar_lea.sflag [#allocation6], %s477
        %s479 = sand.u32 %s94, 1
        %s480 = smul.addr %s479, 4
        %s481 = scalar_lea.vmem [#allocation7], %s480
        // Predicated region
        $region73: #{tpu_custom_call.1} parent=63 // pred_check
          %p482 = pneg %p107
        $region74: #{tpu_custom_call.1} parent=63 // pred_check_branch
          %484 = sbr.rel (%p482) target = $region76
        $region75: #{tpu_custom_call.1} parent=63 // pred_region
          %485 = dma.done %s478, 64
        $region76: #{tpu_custom_call.1} parent=63 // pred_fallthru
          _
        // Predicated region
        $region77: #{tpu_custom_call.1} parent=63 // pred_check
          %p486 = pneg %p128
        $region78: #{tpu_custom_call.1} parent=63 // pred_check_branch
          %488 = sbr.rel (%p486) target = $region80
        $region79: #{tpu_custom_call.1} parent=63 // pred_region
          %489 = dma.done [#allocation9], 256
        $region80: #{tpu_custom_call.1} parent=63 // pred_fallthru
          _
        // Predicated region
        $region81: #{tpu_custom_call.1} parent=63 // pred_check
          %p490 = pneg %p149
        $region82: #{tpu_custom_call.1} parent=63 // pred_check_branch
          %492 = sbr.rel (%p490) target = $region84
        $region83: #{tpu_custom_call.1} parent=63 // pred_region
          %493 = dma.done [#allocation9], 16
        $region84: #{tpu_custom_call.1} parent=63 // pred_fallthru
          _
        // Predicated region
        $region85: #{tpu_custom_call.1} parent=63 // pred_check
          %p494 = pneg %p170
        $region86: #{tpu_custom_call.1} parent=63 // pred_check_branch
          %496 = sbr.rel (%p494) target = $region88
        $region87: #{tpu_custom_call.1} parent=63 // pred_region
          %497 = dma.done [#allocation12], 256
        $region88: #{tpu_custom_call.1} parent=63 // pred_fallthru
          _
        // Predicated region
        $region89: #{tpu_custom_call.1} parent=63 // pred_check
          %p498 = pneg %p191
        $region90: #{tpu_custom_call.1} parent=63 // pred_check_branch
          %500 = sbr.rel (%p498) target = $region92
        $region91: #{tpu_custom_call.1} parent=63 // pred_region
          %501 = dma.done [#allocation12], 16
        $region92: #{tpu_custom_call.1} parent=63 // pred_fallthru
          _
        // Predicated region
        $region93: #{tpu_custom_call.1} parent=63 // pred_check
          %p502 = pneg %p212
        $region94: #{tpu_custom_call.1} parent=63 // pred_check_branch
          %504 = sbr.rel (%p502) target = $region96
        $region95: #{tpu_custom_call.1} parent=63 // pred_region
          %505 = dma.done [#allocation15], 256
        $region96: #{tpu_custom_call.1} parent=63 // pred_fallthru
          _
        // Predicated region
        $region97: #{tpu_custom_call.1} parent=63 // pred_check
          %p506 = pneg %p233
        $region98: #{tpu_custom_call.1} parent=63 // pred_check_branch
          %508 = sbr.rel (%p506) target = $region100
        $region99: #{tpu_custom_call.1} parent=63 // pred_region
          %509 = dma.done [#allocation15], 16
        $region100: #{tpu_custom_call.1} parent=63 // pred_fallthru
          _
        %s510 = sand.u32 %s42, 1
        %s511 = scalar_lea.sflag [#allocation3], %s510
        %s512 = sand.u32 %s42, 1
        %s513 = smul.addr %s512, 4
        %s514 = scalar_lea.vmem [#allocation2], %s513
        %p515 = pneg %p55
        %p516 = pneg %p52
        %s517 = sand.u32 %s34, 1
        %s518 = scalar_lea.sflag [#allocation6], %s517
        %s519 = sand.u32 %s68, 1
        %s520 = smul.addr %s519, 4
        %s521 = scalar_lea.vmem [#allocation5], %s520
        %p522 = pneg %p81
        %p523 = pneg %p78
        %s524 = sand.u32 %s34, 1
        %s525 = scalar_lea.sflag [#allocation6], %s524
        %s526 = sand.u32 %s94, 1
        %s527 = smul.addr %s526, 4
        %s528 = scalar_lea.vmem [#allocation7], %s527
        %p529 = pneg %p107
        %p530 = pneg %p104
        %p531 = pneg %p128
        %p532 = pneg %p125
        %p533 = pneg %p149
        %p534 = pneg %p146
        %p535 = pneg %p170
        %p536 = pneg %p167
        %p537 = pneg %p191
        %p538 = pneg %p188
        %p539 = pneg %p212
        %p540 = pneg %p209
        %p541 = pneg %p233
        %p542 = pneg %p230
        %p543 = pneg %p254
        %p544 = pneg %p251
        %p545 = pneg %p275
        %p546 = pneg %p272
        %p547 = pneg %p301
        %p548 = pneg %p298
        %s549 = sand.u32 %s288, 1
        %s550 = scalar_lea.sflag [#allocation4], %s549
        %s551 = sand.u32 %s288, 1
        %s552 = smul.addr %s551, 8
        %s553 = scalar_lea.vmem [#allocation17], %s552
        %v555 = vld [vmem:[%s463] sm:$0xf]
        %v556 = vld [vmem:[%s472] sm:$0xf]
        %v557 = vld [vmem:[%s481] sm:$0xf]
        %v558 = vld [vmem:[#allocation8] sm:$0xf]
        %v559 = vld [vmem:[#allocation8 + $0x4] sm:$0xf]
        %v560 = vld [vmem:[#allocation8 + $0x8] sm:$0xf]
        %v561 = vld [vmem:[#allocation8 + $0xc] sm:$0xf]
        %v562 = vld [vmem:[#allocation10] sm:$0x1]
        %v564 = vlaneseq
        %v565 = vshrl.u32 %v564, 7
        %v566 = vsub.s32 0, %v565
        %v567 = vrot.slane %v562, %v566
        %v573 = vunpack.c.l.b16 %v558
        %v574 = vunpack.c.l.b16 %v559
        %v575 = vunpack.c.l.b16 %v560
        %v576 = vunpack.c.l.b16 %v561
        %v577 = vpack.c.b16 %v574, %v573
        %v578 = vpack.c.b16 %v576, %v575
        %vm581 = vcmask 261120
        %v583 = vsel %vm581, %v555, 0
        %585 = vmatprep.subr.bf16.mxu0 0
        %586 = vmatpush1.bf16.msra.mxu0 0
        %587 = vmatprep.subr.bf16.mxu0 0
        %588 = vmatpush1.bf16.msra.mxu0 0
        %589 = vmatprep.subr.bf16.mxu0 0
        %590 = vmatpush1.bf16.msra.mxu0 0
        %591 = vmatprep.subr.bf16.mxu0 0
        %592 = vmatpush1.bf16.msra.mxu0 0
        %593 = vmatprep.subr.bf16.mxu0 0
        %594 = vmatpush1.bf16.msra.mxu0 0
        %595 = vmatprep.subr.bf16.mxu0 0
        %596 = vmatpush1.bf16.msra.mxu0 0
        %597 = vmatprep.subr.bf16.mxu0 0
        %598 = vmatpush1.bf16.msra.mxu0 %v578
        %599 = vmatprep.subr.bf16.mxu0 0
        %600 = vmatpush1.bf16.msra.mxu0 %v577
        %601 = vmatprep.subr.bf16.mxu0 0
        %602 = vmatpush2.bf16.msra.mxu0 0
        %603 = vmatprep.subr.bf16.mxu0 0
        %604 = vmatpush2.bf16.msra.mxu0 0
        %605 = vmatprep.subr.bf16.mxu0 0
        %606 = vmatpush2.bf16.msra.mxu0 0
        %607 = vmatprep.subr.bf16.mxu0 0
        %608 = vmatpush2.bf16.msra.mxu0 0
        %609 = vmatprep.subr.bf16.mxu0 0
        %610 = vmatpush2.bf16.msra.mxu0 0
        %611 = vmatprep.subr.bf16.mxu0 0
        %612 = vmatpush2.bf16.msra.mxu0 0
        %613 = vmatprep.subr.bf16.mxu0 0
        %614 = vmatpush2.bf16.msra.mxu0 0
        %615 = vmatprep.subr.bf16.mxu0 0
        %616 = vmatpush2.bf16.msra.mxu0 0
        %617 = vmatprep.mubr.bf16.mxu0 0
        %618 = vmatmul.mubr.bf16.gmra.mxu0 %v583
        %v619 = vpop.f32.mrf.mxu0
        %v620 = vadd.f32 %v567, %v619
        %v621 = vpop.f32.mrf.mxu0
        %v622 = vpop.f32.mrf.mxu0
        %v623 = vpop.f32.mrf.mxu0
        %624 = vdwg.mxu0
        %v625 = vld [vmem:[#allocation11] sm:$0xf]
        %v626 = vld [vmem:[#allocation11 + $0x4] sm:$0xf]
        %v627 = vld [vmem:[#allocation11 + $0x8] sm:$0xf]
        %v628 = vld [vmem:[#allocation11 + $0xc] sm:$0xf]
        %v629 = vld [vmem:[#allocation13] sm:$0x1]
        %v631 = vlaneseq
        %v632 = vshrl.u32 %v631, 7
        %v633 = vsub.s32 0, %v632
        %v634 = vrot.slane %v629, %v633
        %v640 = vunpack.c.l.b16 %v625
        %v641 = vunpack.c.l.b16 %v626
        %v642 = vunpack.c.l.b16 %v627
        %v643 = vunpack.c.l.b16 %v628
        %v644 = vpack.c.b16 %v641, %v640
        %v645 = vpack.c.b16 %v643, %v642
        %v649 = vsel %vm581, %v556, 0
        %651 = vmatprep.subr.bf16.mxu0 0
        %652 = vmatpush1.bf16.msra.mxu0 0
        %653 = vmatprep.subr.bf16.mxu0 0
        %654 = vmatpush1.bf16.msra.mxu0 0
        %655 = vmatprep.subr.bf16.mxu0 0
        %656 = vmatpush1.bf16.msra.mxu0 0
        %657 = vmatprep.subr.bf16.mxu0 0
        %658 = vmatpush1.bf16.msra.mxu0 0
        %659 = vmatprep.subr.bf16.mxu0 0
        %660 = vmatpush1.bf16.msra.mxu0 0
        %661 = vmatprep.subr.bf16.mxu0 0
        %662 = vmatpush1.bf16.msra.mxu0 0
        %663 = vmatprep.subr.bf16.mxu0 0
        %664 = vmatpush1.bf16.msra.mxu0 %v645
        %665 = vmatprep.subr.bf16.mxu0 0
        %666 = vmatpush1.bf16.msra.mxu0 %v644
        %667 = vmatprep.subr.bf16.mxu0 0
        %668 = vmatpush2.bf16.msra.mxu0 0
        %669 = vmatprep.subr.bf16.mxu0 0
        %670 = vmatpush2.bf16.msra.mxu0 0
        %671 = vmatprep.subr.bf16.mxu0 0
        %672 = vmatpush2.bf16.msra.mxu0 0
        %673 = vmatprep.subr.bf16.mxu0 0
        %674 = vmatpush2.bf16.msra.mxu0 0
        %675 = vmatprep.subr.bf16.mxu0 0
        %676 = vmatpush2.bf16.msra.mxu0 0
        %677 = vmatprep.subr.bf16.mxu0 0
        %678 = vmatpush2.bf16.msra.mxu0 0
        %679 = vmatprep.subr.bf16.mxu0 0
        %680 = vmatpush2.bf16.msra.mxu0 0
        %681 = vmatprep.subr.bf16.mxu0 0
        %682 = vmatpush2.bf16.msra.mxu0 0
        %683 = vmatprep.mubr.bf16.mxu0 0
        %684 = vmatmul.mubr.bf16.gmra.mxu0 %v649
        %v685 = vpop.f32.mrf.mxu0
        %v686 = vadd.f32 %v634, %v685
        %v687 = vpop.f32.mrf.mxu0
        %v688 = vpop.f32.mrf.mxu0
        %v689 = vpop.f32.mrf.mxu0
        %690 = vdwg.mxu0
        %v691 = vld [vmem:[#allocation14] sm:$0xf]
        %v692 = vld [vmem:[#allocation14 + $0x4] sm:$0xf]
        %v693 = vld [vmem:[#allocation14 + $0x8] sm:$0xf]
        %v694 = vld [vmem:[#allocation14 + $0xc] sm:$0xf]
        %v695 = vld [vmem:[#allocation16] sm:$0x1]
        %v697 = vlaneseq
        %v698 = vshrl.u32 %v697, 7
        %v699 = vsub.s32 0, %v698
        %v700 = vrot.slane %v695, %v699
        %v706 = vunpack.c.l.b16 %v691
        %v707 = vunpack.c.l.b16 %v692
        %v708 = vunpack.c.l.b16 %v693
        %v709 = vunpack.c.l.b16 %v694
        %v710 = vpack.c.b16 %v707, %v706
        %v711 = vpack.c.b16 %v709, %v708
        %v715 = vsel %vm581, %v557, 0
        %717 = vmatprep.subr.bf16.mxu0 0
        %718 = vmatpush1.bf16.msra.mxu0 0
        %719 = vmatprep.subr.bf16.mxu0 0
        %720 = vmatpush1.bf16.msra.mxu0 0
        %721 = vmatprep.subr.bf16.mxu0 0
        %722 = vmatpush1.bf16.msra.mxu0 0
        %723 = vmatprep.subr.bf16.mxu0 0
        %724 = vmatpush1.bf16.msra.mxu0 0
        %725 = vmatprep.subr.bf16.mxu0 0
        %726 = vmatpush1.bf16.msra.mxu0 0
        %727 = vmatprep.subr.bf16.mxu0 0
        %728 = vmatpush1.bf16.msra.mxu0 0
        %729 = vmatprep.subr.bf16.mxu0 0
        %730 = vmatpush1.bf16.msra.mxu0 %v711
        %731 = vmatprep.subr.bf16.mxu0 0
        %732 = vmatpush1.bf16.msra.mxu0 %v710
        %733 = vmatprep.subr.bf16.mxu0 0
        %734 = vmatpush2.bf16.msra.mxu0 0
        %735 = vmatprep.subr.bf16.mxu0 0
        %736 = vmatpush2.bf16.msra.mxu0 0
        %737 = vmatprep.subr.bf16.mxu0 0
        %738 = vmatpush2.bf16.msra.mxu0 0
        %739 = vmatprep.subr.bf16.mxu0 0
        %740 = vmatpush2.bf16.msra.mxu0 0
        %741 = vmatprep.subr.bf16.mxu0 0
        %742 = vmatpush2.bf16.msra.mxu0 0
        %743 = vmatprep.subr.bf16.mxu0 0
        %744 = vmatpush2.bf16.msra.mxu0 0
        %745 = vmatprep.subr.bf16.mxu0 0
        %746 = vmatpush2.bf16.msra.mxu0 0
        %747 = vmatprep.subr.bf16.mxu0 0
        %748 = vmatpush2.bf16.msra.mxu0 0
        %749 = vmatprep.mubr.bf16.mxu0 0
        %750 = vmatmul.mubr.bf16.gmra.mxu0 %v715
        %v751 = vpop.f32.mrf.mxu0
        %v752 = vadd.f32 %v700, %v751
        %v753 = vpop.f32.mrf.mxu0
        %v754 = vpop.f32.mrf.mxu0
        %v755 = vpop.f32.mrf.mxu0
        %756 = vdwg.mxu0
        %v757 = vmul.f32 %v620, 0.35355338
        %v758 = vpack.c.bf16 %v757, %v757
        %v759 = vpack.c.bf16 %v686, %v686
        %v760 = vpack.c.bf16 %v752, %v752
        %vm761 = vcmask 64512
        %v763 = vsel %vm761, %v758, 0
        %v766 = vsel %vm761, %v759, 0
        %768 = vmatprep.subr.bf16.mxu0 0
        %769 = vmatpush1.bf16.xpose.msra.mxu0 0
        %770 = vmatprep.subr.bf16.mxu0 0
        %771 = vmatpush1.bf16.xpose.msra.mxu0 0
        %772 = vmatprep.subr.bf16.mxu0 0
        %773 = vmatpush1.bf16.xpose.msra.mxu0 0
        %774 = vmatprep.subr.bf16.mxu0 0
        %775 = vmatpush1.bf16.xpose.msra.mxu0 0
        %776 = vmatprep.subr.bf16.mxu0 0
        %777 = vmatpush1.bf16.xpose.msra.mxu0 0
        %778 = vmatprep.subr.bf16.mxu0 0
        %779 = vmatpush1.bf16.xpose.msra.mxu0 0
        %780 = vmatprep.subr.bf16.mxu0 0
        %781 = vmatpush1.bf16.xpose.msra.mxu0 0
        %782 = vmatprep.subr.bf16.mxu0 0
        %783 = vmatpush1.bf16.xpose.msra.mxu0 %v766
        %784 = vmatprep.subr.bf16.mxu0 0
        %785 = vmatpush2.bf16.xpose.msra.mxu0 0
        %786 = vmatprep.subr.bf16.mxu0 0
        %787 = vmatpush2.bf16.xpose.msra.mxu0 0
        %788 = vmatprep.subr.bf16.mxu0 0
        %789 = vmatpush2.bf16.xpose.msra.mxu0 0
        %790 = vmatprep.subr.bf16.mxu0 0
        %791 = vmatpush2.bf16.xpose.msra.mxu0 0
        %792 = vmatprep.subr.bf16.mxu0 0
        %793 = vmatpush2.bf16.xpose.msra.mxu0 0
        %794 = vmatprep.subr.bf16.mxu0 0
        %795 = vmatpush2.bf16.xpose.msra.mxu0 0
        %796 = vmatprep.subr.bf16.mxu0 0
        %797 = vmatpush2.bf16.xpose.msra.mxu0 0
        %798 = vmatprep.subr.bf16.mxu0 0
        %799 = vmatpush2.bf16.xpose.msra.mxu0 0
        %800 = vmatprep.mubr.bf16.mxu0 0
        %801 = vmatmul.mubr.bf16.gmra.mxu0 %v763
        %v802 = vpop.f32.mrf.mxu0
        %v803 = vadd.f32 0.0, %v802
        %v804 = vpop.f32.mrf.mxu0
        %v805 = vpop.f32.mrf.mxu0
        %v806 = vpop.f32.mrf.mxu0
        %807 = vdwg.mxu0
        %v808 = vsel %vm761, %v803, -inf
        %809 = vmax.xlane.f32.xlu0 %v808
        %v810 = vpop.xlane.xlu0 %809
        %v811 = vsub.f32 %v803, %v810
        %v812 = vmul.f32 %v811, 1.442695
        %v813 = vpow.pop %v812
        %v814 = vsel %vm761, %v813, 0.0
        %815 = vadd.xlane.f32.xlu0 %v814
        %v816 = vpop.xlane.xlu0 %815
        %v817 = vrcp.pop %v816
        %v818 = vmul.f32 %v813, %v817
        %v819 = vpack.c.bf16 %v818, %v818
        %v821 = vsel %vm761, %v819, 0
        %vm823 = vcmask 1043456
        %v825 = vsel %vm823, %v760, 0
        %827 = vmatprep.subr.bf16.mxu0 0
        %828 = vmatpush1.bf16.msra.mxu0 0
        %829 = vmatprep.subr.bf16.mxu0 0
        %830 = vmatpush1.bf16.msra.mxu0 0
        %831 = vmatprep.subr.bf16.mxu0 0
        %832 = vmatpush1.bf16.msra.mxu0 0
        %833 = vmatprep.subr.bf16.mxu0 0
        %834 = vmatpush1.bf16.msra.mxu0 0
        %835 = vmatprep.subr.bf16.mxu0 0
        %836 = vmatpush1.bf16.msra.mxu0 0
        %837 = vmatprep.subr.bf16.mxu0 0
        %838 = vmatpush1.bf16.msra.mxu0 0
        %839 = vmatprep.subr.bf16.mxu0 0
        %840 = vmatpush1.bf16.msra.mxu0 0
        %841 = vmatprep.subr.bf16.mxu0 0
        %842 = vmatpush1.bf16.msra.mxu0 %v825
        %843 = vmatprep.subr.bf16.mxu0 0
        %844 = vmatpush2.bf16.msra.mxu0 0
        %845 = vmatprep.subr.bf16.mxu0 0
        %846 = vmatpush2.bf16.msra.mxu0 0
        %847 = vmatprep.subr.bf16.mxu0 0
        %848 = vmatpush2.bf16.msra.mxu0 0
        %849 = vmatprep.subr.bf16.mxu0 0
        %850 = vmatpush2.bf16.msra.mxu0 0
        %851 = vmatprep.subr.bf16.mxu0 0
        %852 = vmatpush2.bf16.msra.mxu0 0
        %853 = vmatprep.subr.bf16.mxu0 0
        %854 = vmatpush2.bf16.msra.mxu0 0
        %855 = vmatprep.subr.bf16.mxu0 0
        %856 = vmatpush2.bf16.msra.mxu0 0
        %857 = vmatprep.subr.bf16.mxu0 0
        %858 = vmatpush2.bf16.msra.mxu0 0
        %859 = vmatprep.mubr.bf16.mxu0 0
        %860 = vmatmul.mubr.bf16.gmra.mxu0 %v821
        %v861 = vpop.f32.mrf.mxu0
        %v862 = vadd.f32 0.0, %v861
        %v863 = vpop.f32.mrf.mxu0
        %v864 = vpop.f32.mrf.mxu0
        %v865 = vpop.f32.mrf.mxu0
        %866 = vdwg.mxu0
        %v867 = vpack.c.bf16 %v862, %v862
        %v868 = vld [vmem:[%s9] sm:$0xf]
        %870 = vrot.lane.b32.xlu0 %v758, 120
        %v871 = vpop.permute.xlu0 %870
        %873 = vrot.lane.b32.xlu0 %v759, 120
        %v874 = vpop.permute.xlu0 %873
        %v876 = vsel %vm761, %v871, 0
        %v879 = vsel %vm761, %v874, 0
        %881 = vmatprep.subr.bf16.mxu0 0
        %882 = vmatpush1.bf16.xpose.msra.mxu0 0
        %883 = vmatprep.subr.bf16.mxu0 0
        %884 = vmatpush1.bf16.xpose.msra.mxu0 0
        %885 = vmatprep.subr.bf16.mxu0 0
        %886 = vmatpush1.bf16.xpose.msra.mxu0 0
        %887 = vmatprep.subr.bf16.mxu0 0
        %888 = vmatpush1.bf16.xpose.msra.mxu0 0
        %889 = vmatprep.subr.bf16.mxu0 0
        %890 = vmatpush1.bf16.xpose.msra.mxu0 0
        %891 = vmatprep.subr.bf16.mxu0 0
        %892 = vmatpush1.bf16.xpose.msra.mxu0 0
        %893 = vmatprep.subr.bf16.mxu0 0
        %894 = vmatpush1.bf16.xpose.msra.mxu0 0
        %895 = vmatprep.subr.bf16.mxu0 0
        %896 = vmatpush1.bf16.xpose.msra.mxu0 %v879
        %897 = vmatprep.subr.bf16.mxu0 0
        %898 = vmatpush2.bf16.xpose.msra.mxu0 0
        %899 = vmatprep.subr.bf16.mxu0 0
        %900 = vmatpush2.bf16.xpose.msra.mxu0 0
        %901 = vmatprep.subr.bf16.mxu0 0
        %902 = vmatpush2.bf16.xpose.msra.mxu0 0
        %903 = vmatprep.subr.bf16.mxu0 0
        %904 = vmatpush2.bf16.xpose.msra.mxu0 0
        %905 = vmatprep.subr.bf16.mxu0 0
        %906 = vmatpush2.bf16.xpose.msra.mxu0 0
        %907 = vmatprep.subr.bf16.mxu0 0
        %908 = vmatpush2.bf16.xpose.msra.mxu0 0
        %909 = vmatprep.subr.bf16.mxu0 0
        %910 = vmatpush2.bf16.xpose.msra.mxu0 0
        %911 = vmatprep.subr.bf16.mxu0 0
        %912 = vmatpush2.bf16.xpose.msra.mxu0 0
        %913 = vmatprep.mubr.bf16.mxu0 0
        %914 = vmatmul.mubr.bf16.gmra.mxu0 %v876
        %v915 = vpop.f32.mrf.mxu0
        %v916 = vadd.f32 0.0, %v915
        %v917 = vpop.f32.mrf.mxu0
        %v918 = vpop.f32.mrf.mxu0
        %v919 = vpop.f32.mrf.mxu0
        %920 = vdwg.mxu0
        %v921 = vsel %vm761, %v916, -inf
        %922 = vmax.xlane.f32.xlu0 %v921
        %v923 = vpop.xlane.xlu0 %922
        %v924 = vsub.f32 %v916, %v923
        %v925 = vmul.f32 %v924, 1.442695
        %v926 = vpow.pop %v925
        %v927 = vsel %vm761, %v926, 0.0
        %928 = vadd.xlane.f32.xlu0 %v927
        %v929 = vpop.xlane.xlu0 %928
        %v930 = vrcp.pop %v929
        %v931 = vmul.f32 %v926, %v930
        %v932 = vpack.c.bf16 %v931, %v931
        %934 = vrot.lane.b32.xlu0 %v760, 120
        %v935 = vpop.permute.xlu0 %934
        %v937 = vsel %vm761, %v932, 0
        %v940 = vsel %vm823, %v935, 0
        %942 = vmatprep.subr.bf16.mxu0 0
        %943 = vmatpush1.bf16.msra.mxu0 0
        %944 = vmatprep.subr.bf16.mxu0 0
        %945 = vmatpush1.bf16.msra.mxu0 0
        %946 = vmatprep.subr.bf16.mxu0 0
        %947 = vmatpush1.bf16.msra.mxu0 0
        %948 = vmatprep.subr.bf16.mxu0 0
        %949 = vmatpush1.bf16.msra.mxu0 0
        %950 = vmatprep.subr.bf16.mxu0 0
        %951 = vmatpush1.bf16.msra.mxu0 0
        %952 = vmatprep.subr.bf16.mxu0 0
        %953 = vmatpush1.bf16.msra.mxu0 0
        %954 = vmatprep.subr.bf16.mxu0 0
        %955 = vmatpush1.bf16.msra.mxu0 0
        %956 = vmatprep.subr.bf16.mxu0 0
        %957 = vmatpush1.bf16.msra.mxu0 %v940
        %958 = vmatprep.subr.bf16.mxu0 0
        %959 = vmatpush2.bf16.msra.mxu0 0
        %960 = vmatprep.subr.bf16.mxu0 0
        %961 = vmatpush2.bf16.msra.mxu0 0
        %962 = vmatprep.subr.bf16.mxu0 0
        %963 = vmatpush2.bf16.msra.mxu0 0
        %964 = vmatprep.subr.bf16.mxu0 0
        %965 = vmatpush2.bf16.msra.mxu0 0
        %966 = vmatprep.subr.bf16.mxu0 0
        %967 = vmatpush2.bf16.msra.mxu0 0
        %968 = vmatprep.subr.bf16.mxu0 0
        %969 = vmatpush2.bf16.msra.mxu0 0
        %970 = vmatprep.subr.bf16.mxu0 0
        %971 = vmatpush2.bf16.msra.mxu0 0
        %972 = vmatprep.subr.bf16.mxu0 0
        %973 = vmatpush2.bf16.msra.mxu0 0
        %974 = vmatprep.mubr.bf16.mxu0 0
        %975 = vmatmul.mubr.bf16.gmra.mxu0 %v937
        %v976 = vpop.f32.mrf.mxu0
        %v977 = vadd.f32 0.0, %v976
        %v978 = vpop.f32.mrf.mxu0
        %v979 = vpop.f32.mrf.mxu0
        %v980 = vpop.f32.mrf.mxu0
        %981 = vdwg.mxu0
        %v982 = vpack.c.bf16 %v977, %v977
        %v983 = vld [vmem:[%s9 + $0x4] sm:$0xf]
        %v985 = vsel %vm761, %v982, 0
        %v988 = vsel %vm823, %v983, 0
        %990 = vmatprep.subr.bf16.mxu0 0
        %991 = vmatpush1.bf16.msra.mxu0 0
        %992 = vmatprep.subr.bf16.mxu0 0
        %993 = vmatpush1.bf16.msra.mxu0 0
        %994 = vmatprep.subr.bf16.mxu0 0
        %995 = vmatpush1.bf16.msra.mxu0 0
        %996 = vmatprep.subr.bf16.mxu0 0
        %997 = vmatpush1.bf16.msra.mxu0 0
        %998 = vmatprep.subr.bf16.mxu0 0
        %999 = vmatpush1.bf16.msra.mxu0 0
        %1000 = vmatprep.subr.bf16.mxu0 0
        %1001 = vmatpush1.bf16.msra.mxu0 0
        %1002 = vmatprep.subr.bf16.mxu0 0
        %1003 = vmatpush1.bf16.msra.mxu0 0
        %1004 = vmatprep.subr.bf16.mxu0 0
        %1005 = vmatpush1.bf16.msra.mxu0 %v988
        %1006 = vmatprep.subr.bf16.mxu0 0
        %1007 = vmatpush2.bf16.msra.mxu0 0
        %1008 = vmatprep.subr.bf16.mxu0 0
        %1009 = vmatpush2.bf16.msra.mxu0 0
        %1010 = vmatprep.subr.bf16.mxu0 0
        %1011 = vmatpush2.bf16.msra.mxu0 0
        %1012 = vmatprep.subr.bf16.mxu0 0
        %1013 = vmatpush2.bf16.msra.mxu0 0
        %1014 = vmatprep.subr.bf16.mxu0 0
        %1015 = vmatpush2.bf16.msra.mxu0 0
        %1016 = vmatprep.subr.bf16.mxu0 0
        %1017 = vmatpush2.bf16.msra.mxu0 0
        %1018 = vmatprep.subr.bf16.mxu0 0
        %1019 = vmatpush2.bf16.msra.mxu0 0
        %1020 = vmatprep.subr.bf16.mxu0 0
        %1021 = vmatpush2.bf16.msra.mxu0 0
        %1022 = vmatprep.mubr.bf16.mxu0 0
        %1023 = vmatmul.mubr.bf16.gmra.mxu0 %v985
        %v1024 = vpop.f32.mrf.mxu0
        %v1025 = vadd.f32 0.0, %v1024
        %v1026 = vpop.f32.mrf.mxu0
        %v1027 = vpop.f32.mrf.mxu0
        %v1028 = vpop.f32.mrf.mxu0
        %1029 = vdwg.mxu0
        %v1031 = vsel %vm761, %v867, 0
        %v1034 = vsel %vm823, %v868, 0
        %1036 = vmatprep.subr.bf16.mxu0 0
        %1037 = vmatpush1.bf16.msra.mxu0 0
        %1038 = vmatprep.subr.bf16.mxu0 0
        %1039 = vmatpush1.bf16.msra.mxu0 0
        %1040 = vmatprep.subr.bf16.mxu0 0
        %1041 = vmatpush1.bf16.msra.mxu0 0
        %1042 = vmatprep.subr.bf16.mxu0 0
        %1043 = vmatpush1.bf16.msra.mxu0 0
        %1044 = vmatprep.subr.bf16.mxu0 0
        %1045 = vmatpush1.bf16.msra.mxu0 0
        %1046 = vmatprep.subr.bf16.mxu0 0
        %1047 = vmatpush1.bf16.msra.mxu0 0
        %1048 = vmatprep.subr.bf16.mxu0 0
        %1049 = vmatpush1.bf16.msra.mxu0 0
        %1050 = vmatprep.subr.bf16.mxu0 0
        %1051 = vmatpush1.bf16.msra.mxu0 %v1034
        %1052 = vmatprep.subr.bf16.mxu0 0
        %1053 = vmatpush2.bf16.msra.mxu0 0
        %1054 = vmatprep.subr.bf16.mxu0 0
        %1055 = vmatpush2.bf16.msra.mxu0 0
        %1056 = vmatprep.subr.bf16.mxu0 0
        %1057 = vmatpush2.bf16.msra.mxu0 0
        %1058 = vmatprep.subr.bf16.mxu0 0
        %1059 = vmatpush2.bf16.msra.mxu0 0
        %1060 = vmatprep.subr.bf16.mxu0 0
        %1061 = vmatpush2.bf16.msra.mxu0 0
        %1062 = vmatprep.subr.bf16.mxu0 0
        %1063 = vmatpush2.bf16.msra.mxu0 0
        %1064 = vmatprep.subr.bf16.mxu0 0
        %1065 = vmatpush2.bf16.msra.mxu0 0
        %1066 = vmatprep.subr.bf16.mxu0 0
        %1067 = vmatpush2.bf16.msra.mxu0 0
        %1068 = vmatprep.mubr.bf16.mxu0 0
        %1069 = vmatmul.mubr.bf16.gmra.mxu0 %v1031
        %v1070 = vpop.f32.mrf.mxu0
        %v1071 = vadd.f32 %v1025, %v1070
        %v1072 = vpop.f32.mrf.mxu0
        %v1073 = vpop.f32.mrf.mxu0
        %v1074 = vpop.f32.mrf.mxu0
        %1075 = vdwg.mxu0
        %1076 = vrot.lane.b32.xlu0 %v758, 112
        %v1077 = vpop.permute.xlu0 %1076
        %1078 = vrot.lane.b32.xlu0 %v759, 112
        %v1079 = vpop.permute.xlu0 %1078
        %v1081 = vsel %vm761, %v1077, 0
        %v1084 = vsel %vm761, %v1079, 0
        %1086 = vmatprep.subr.bf16.mxu0 0
        %1087 = vmatpush1.bf16.xpose.msra.mxu0 0
        %1088 = vmatprep.subr.bf16.mxu0 0
        %1089 = vmatpush1.bf16.xpose.msra.mxu0 0
        %1090 = vmatprep.subr.bf16.mxu0 0
        %1091 = vmatpush1.bf16.xpose.msra.mxu0 0
        %1092 = vmatprep.subr.bf16.mxu0 0
        %1093 = vmatpush1.bf16.xpose.msra.mxu0 0
        %1094 = vmatprep.subr.bf16.mxu0 0
        %1095 = vmatpush1.bf16.xpose.msra.mxu0 0
        %1096 = vmatprep.subr.bf16.mxu0 0
        %1097 = vmatpush1.bf16.xpose.msra.mxu0 0
        %1098 = vmatprep.subr.bf16.mxu0 0
        %1099 = vmatpush1.bf16.xpose.msra.mxu0 0
        %1100 = vmatprep.subr.bf16.mxu0 0
        %1101 = vmatpush1.bf16.xpose.msra.mxu0 %v1084
        %1102 = vmatprep.subr.bf16.mxu0 0
        %1103 = vmatpush2.bf16.xpose.msra.mxu0 0
        %1104 = vmatprep.subr.bf16.mxu0 0
        %1105 = vmatpush2.bf16.xpose.msra.mxu0 0
        %1106 = vmatprep.subr.bf16.mxu0 0
        %1107 = vmatpush2.bf16.xpose.msra.mxu0 0
        %1108 = vmatprep.subr.bf16.mxu0 0
        %1109 = vmatpush2.bf16.xpose.msra.mxu0 0
        %1110 = vmatprep.subr.bf16.mxu0 0
        %1111 = vmatpush2.bf16.xpose.msra.mxu0 0
        %1112 = vmatprep.subr.bf16.mxu0 0
        %1113 = vmatpush2.bf16.xpose.msra.mxu0 0
        %1114 = vmatprep.subr.bf16.mxu0 0
        %1115 = vmatpush2.bf16.xpose.msra.mxu0 0
        %1116 = vmatprep.subr.bf16.mxu0 0
        %1117 = vmatpush2.bf16.xpose.msra.mxu0 0
        %1118 = vmatprep.mubr.bf16.mxu0 0
        %1119 = vmatmul.mubr.bf16.gmra.mxu0 %v1081
        %v1120 = vpop.f32.mrf.mxu0
        %v1121 = vadd.f32 0.0, %v1120
        %v1122 = vpop.f32.mrf.mxu0
        %v1123 = vpop.f32.mrf.mxu0
        %v1124 = vpop.f32.mrf.mxu0
        %1125 = vdwg.mxu0
        %v1126 = vsel %vm761, %v1121, -inf
        %1127 = vmax.xlane.f32.xlu0 %v1126
        %v1128 = vpop.xlane.xlu0 %1127
        %v1129 = vsub.f32 %v1121, %v1128
        %v1130 = vmul.f32 %v1129, 1.442695
        %v1131 = vpow.pop %v1130
        %v1132 = vsel %vm761, %v1131, 0.0
        %1133 = vadd.xlane.f32.xlu0 %v1132
        %v1134 = vpop.xlane.xlu0 %1133
        %v1135 = vrcp.pop %v1134
        %v1136 = vmul.f32 %v1131, %v1135
        %v1137 = vpack.c.bf16 %v1136, %v1136
        %1138 = vrot.lane.b32.xlu0 %v760, 112
        %v1139 = vpop.permute.xlu0 %1138
        %v1141 = vsel %vm761, %v1137, 0
        %v1144 = vsel %vm823, %v1139, 0
        %1146 = vmatprep.subr.bf16.mxu0 0
        %1147 = vmatpush1.bf16.msra.mxu0 0
        %1148 = vmatprep.subr.bf16.mxu0 0
        %1149 = vmatpush1.bf16.msra.mxu0 0
        %1150 = vmatprep.subr.bf16.mxu0 0
        %1151 = vmatpush1.bf16.msra.mxu0 0
        %1152 = vmatprep.subr.bf16.mxu0 0
        %1153 = vmatpush1.bf16.msra.mxu0 0
        %1154 = vmatprep.subr.bf16.mxu0 0
        %1155 = vmatpush1.bf16.msra.mxu0 0
        %1156 = vmatprep.subr.bf16.mxu0 0
        %1157 = vmatpush1.bf16.msra.mxu0 0
        %1158 = vmatprep.subr.bf16.mxu0 0
        %1159 = vmatpush1.bf16.msra.mxu0 0
        %1160 = vmatprep.subr.bf16.mxu0 0
        %1161 = vmatpush1.bf16.msra.mxu0 %v1144
        %1162 = vmatprep.subr.bf16.mxu0 0
        %1163 = vmatpush2.bf16.msra.mxu0 0
        %1164 = vmatprep.subr.bf16.mxu0 0
        %1165 = vmatpush2.bf16.msra.mxu0 0
        %1166 = vmatprep.subr.bf16.mxu0 0
        %1167 = vmatpush2.bf16.msra.mxu0 0
        %1168 = vmatprep.subr.bf16.mxu0 0
        %1169 = vmatpush2.bf16.msra.mxu0 0
        %1170 = vmatprep.subr.bf16.mxu0 0
        %1171 = vmatpush2.bf16.msra.mxu0 0
        %1172 = vmatprep.subr.bf16.mxu0 0
        %1173 = vmatpush2.bf16.msra.mxu0 0
        %1174 = vmatprep.subr.bf16.mxu0 0
        %1175 = vmatpush2.bf16.msra.mxu0 0
        %1176 = vmatprep.subr.bf16.mxu0 0
        %1177 = vmatpush2.bf16.msra.mxu0 0
        %1178 = vmatprep.mubr.bf16.mxu0 0
        %1179 = vmatmul.mubr.bf16.gmra.mxu0 %v1141
        %v1180 = vpop.f32.mrf.mxu0
        %v1181 = vadd.f32 0.0, %v1180
        %v1182 = vpop.f32.mrf.mxu0
        %v1183 = vpop.f32.mrf.mxu0
        %v1184 = vpop.f32.mrf.mxu0
        %1185 = vdwg.mxu0
        %v1186 = vpack.c.bf16 %v1181, %v1181
        %v1187 = vld [vmem:[%s9 + $0x8] sm:$0xf]
        %v1189 = vsel %vm761, %v1186, 0
        %v1192 = vsel %vm823, %v1187, 0
        %1194 = vmatprep.subr.bf16.mxu0 0
        %1195 = vmatpush1.bf16.msra.mxu0 0
        %1196 = vmatprep.subr.bf16.mxu0 0
        %1197 = vmatpush1.bf16.msra.mxu0 0
        %1198 = vmatprep.subr.bf16.mxu0 0
        %1199 = vmatpush1.bf16.msra.mxu0 0
        %1200 = vmatprep.subr.bf16.mxu0 0
        %1201 = vmatpush1.bf16.msra.mxu0 0
        %1202 = vmatprep.subr.bf16.mxu0 0
        %1203 = vmatpush1.bf16.msra.mxu0 0
        %1204 = vmatprep.subr.bf16.mxu0 0
        %1205 = vmatpush1.bf16.msra.mxu0 0
        %1206 = vmatprep.subr.bf16.mxu0 0
        %1207 = vmatpush1.bf16.msra.mxu0 0
        %1208 = vmatprep.subr.bf16.mxu0 0
        %1209 = vmatpush1.bf16.msra.mxu0 %v1192
        %1210 = vmatprep.subr.bf16.mxu0 0
        %1211 = vmatpush2.bf16.msra.mxu0 0
        %1212 = vmatprep.subr.bf16.mxu0 0
        %1213 = vmatpush2.bf16.msra.mxu0 0
        %1214 = vmatprep.subr.bf16.mxu0 0
        %1215 = vmatpush2.bf16.msra.mxu0 0
        %1216 = vmatprep.subr.bf16.mxu0 0
        %1217 = vmatpush2.bf16.msra.mxu0 0
        %1218 = vmatprep.subr.bf16.mxu0 0
        %1219 = vmatpush2.bf16.msra.mxu0 0
        %1220 = vmatprep.subr.bf16.mxu0 0
        %1221 = vmatpush2.bf16.msra.mxu0 0
        %1222 = vmatprep.subr.bf16.mxu0 0
        %1223 = vmatpush2.bf16.msra.mxu0 0
        %1224 = vmatprep.subr.bf16.mxu0 0
        %1225 = vmatpush2.bf16.msra.mxu0 0
        %1226 = vmatprep.mubr.bf16.mxu0 0
        %1227 = vmatmul.mubr.bf16.gmra.mxu0 %v1189
        %v1228 = vpop.f32.mrf.mxu0
        %v1229 = vadd.f32 0.0, %v1228
        %v1230 = vpop.f32.mrf.mxu0
        %v1231 = vpop.f32.mrf.mxu0
        %v1232 = vpop.f32.mrf.mxu0
        %1233 = vdwg.mxu0
        %v1234 = vadd.f32 %v1071, %v1229
        %1235 = vrot.lane.b32.xlu0 %v758, 104
        %v1236 = vpop.permute.xlu0 %1235
        %1237 = vrot.lane.b32.xlu0 %v759, 104
        %v1238 = vpop.permute.xlu0 %1237
        %v1240 = vsel %vm761, %v1236, 0
        %v1243 = vsel %vm761, %v1238, 0
        %1245 = vmatprep.subr.bf16.mxu0 0
        %1246 = vmatpush1.bf16.xpose.msra.mxu0 0
        %1247 = vmatprep.subr.bf16.mxu0 0
        %1248 = vmatpush1.bf16.xpose.msra.mxu0 0
        %1249 = vmatprep.subr.bf16.mxu0 0
        %1250 = vmatpush1.bf16.xpose.msra.mxu0 0
        %1251 = vmatprep.subr.bf16.mxu0 0
        %1252 = vmatpush1.bf16.xpose.msra.mxu0 0
        %1253 = vmatprep.subr.bf16.mxu0 0
        %1254 = vmatpush1.bf16.xpose.msra.mxu0 0
        %1255 = vmatprep.subr.bf16.mxu0 0
        %1256 = vmatpush1.bf16.xpose.msra.mxu0 0
        %1257 = vmatprep.subr.bf16.mxu0 0
        %1258 = vmatpush1.bf16.xpose.msra.mxu0 0
        %1259 = vmatprep.subr.bf16.mxu0 0
        %1260 = vmatpush1.bf16.xpose.msra.mxu0 %v1243
        %1261 = vmatprep.subr.bf16.mxu0 0
        %1262 = vmatpush2.bf16.xpose.msra.mxu0 0
        %1263 = vmatprep.subr.bf16.mxu0 0
        %1264 = vmatpush2.bf16.xpose.msra.mxu0 0
        %1265 = vmatprep.subr.bf16.mxu0 0
        %1266 = vmatpush2.bf16.xpose.msra.mxu0 0
        %1267 = vmatprep.subr.bf16.mxu0 0
        %1268 = vmatpush2.bf16.xpose.msra.mxu0 0
        %1269 = vmatprep.subr.bf16.mxu0 0
        %1270 = vmatpush2.bf16.xpose.msra.mxu0 0
        %1271 = vmatprep.subr.bf16.mxu0 0
        %1272 = vmatpush2.bf16.xpose.msra.mxu0 0
        %1273 = vmatprep.subr.bf16.mxu0 0
        %1274 = vmatpush2.bf16.xpose.msra.mxu0 0
        %1275 = vmatprep.subr.bf16.mxu0 0
        %1276 = vmatpush2.bf16.xpose.msra.mxu0 0
        %1277 = vmatprep.mubr.bf16.mxu0 0
        %1278 = vmatmul.mubr.bf16.gmra.mxu0 %v1240
        %v1279 = vpop.f32.mrf.mxu0
        %v1280 = vadd.f32 0.0, %v1279
        %v1281 = vpop.f32.mrf.mxu0
        %v1282 = vpop.f32.mrf.mxu0
        %v1283 = vpop.f32.mrf.mxu0
        %1284 = vdwg.mxu0
        %v1285 = vsel %vm761, %v1280, -inf
        %1286 = vmax.xlane.f32.xlu0 %v1285
        %v1287 = vpop.xlane.xlu0 %1286
        %v1288 = vsub.f32 %v1280, %v1287
        %v1289 = vmul.f32 %v1288, 1.442695
        %v1290 = vpow.pop %v1289
        %v1291 = vsel %vm761, %v1290, 0.0
        %1292 = vadd.xlane.f32.xlu0 %v1291
        %v1293 = vpop.xlane.xlu0 %1292
        %v1294 = vrcp.pop %v1293
        %v1295 = vmul.f32 %v1290, %v1294
        %v1296 = vpack.c.bf16 %v1295, %v1295
        %1297 = vrot.lane.b32.xlu0 %v760, 104
        %v1298 = vpop.permute.xlu0 %1297
        %v1300 = vsel %vm761, %v1296, 0
        %v1303 = vsel %vm823, %v1298, 0
        %1305 = vmatprep.subr.bf16.mxu0 0
        %1306 = vmatpush1.bf16.msra.mxu0 0
        %1307 = vmatprep.subr.bf16.mxu0 0
        %1308 = vmatpush1.bf16.msra.mxu0 0
        %1309 = vmatprep.subr.bf16.mxu0 0
        %1310 = vmatpush1.bf16.msra.mxu0 0
        %1311 = vmatprep.subr.bf16.mxu0 0
        %1312 = vmatpush1.bf16.msra.mxu0 0
        %1313 = vmatprep.subr.bf16.mxu0 0
        %1314 = vmatpush1.bf16.msra.mxu0 0
        %1315 = vmatprep.subr.bf16.mxu0 0
        %1316 = vmatpush1.bf16.msra.mxu0 0
        %1317 = vmatprep.subr.bf16.mxu0 0
        %1318 = vmatpush1.bf16.msra.mxu0 0
        %1319 = vmatprep.subr.bf16.mxu0 0
        %1320 = vmatpush1.bf16.msra.mxu0 %v1303
        %1321 = vmatprep.subr.bf16.mxu0 0
        %1322 = vmatpush2.bf16.msra.mxu0 0
        %1323 = vmatprep.subr.bf16.mxu0 0
        %1324 = vmatpush2.bf16.msra.mxu0 0
        %1325 = vmatprep.subr.bf16.mxu0 0
        %1326 = vmatpush2.bf16.msra.mxu0 0
        %1327 = vmatprep.subr.bf16.mxu0 0
        %1328 = vmatpush2.bf16.msra.mxu0 0
        %1329 = vmatprep.subr.bf16.mxu0 0
        %1330 = vmatpush2.bf16.msra.mxu0 0
        %1331 = vmatprep.subr.bf16.mxu0 0
        %1332 = vmatpush2.bf16.msra.mxu0 0
        %1333 = vmatprep.subr.bf16.mxu0 0
        %1334 = vmatpush2.bf16.msra.mxu0 0
        %1335 = vmatprep.subr.bf16.mxu0 0
        %1336 = vmatpush2.bf16.msra.mxu0 0
        %1337 = vmatprep.mubr.bf16.mxu0 0
        %1338 = vmatmul.mubr.bf16.gmra.mxu0 %v1300
        %v1339 = vpop.f32.mrf.mxu0
        %v1340 = vadd.f32 0.0, %v1339
        %v1341 = vpop.f32.mrf.mxu0
        %v1342 = vpop.f32.mrf.mxu0
        %v1343 = vpop.f32.mrf.mxu0
        %1344 = vdwg.mxu0
        %v1345 = vpack.c.bf16 %v1340, %v1340
        %v1346 = vld [vmem:[%s9 + $0xc] sm:$0xf]
        %v1348 = vsel %vm761, %v1345, 0
        %v1351 = vsel %vm823, %v1346, 0
        %1353 = vmatprep.subr.bf16.mxu0 0
        %1354 = vmatpush1.bf16.msra.mxu0 0
        %1355 = vmatprep.subr.bf16.mxu0 0
        %1356 = vmatpush1.bf16.msra.mxu0 0
        %1357 = vmatprep.subr.bf16.mxu0 0
        %1358 = vmatpush1.bf16.msra.mxu0 0
        %1359 = vmatprep.subr.bf16.mxu0 0
        %1360 = vmatpush1.bf16.msra.mxu0 0
        %1361 = vmatprep.subr.bf16.mxu0 0
        %1362 = vmatpush1.bf16.msra.mxu0 0
        %1363 = vmatprep.subr.bf16.mxu0 0
        %1364 = vmatpush1.bf16.msra.mxu0 0
        %1365 = vmatprep.subr.bf16.mxu0 0
        %1366 = vmatpush1.bf16.msra.mxu0 0
        %1367 = vmatprep.subr.bf16.mxu0 0
        %1368 = vmatpush1.bf16.msra.mxu0 %v1351
        %1369 = vmatprep.subr.bf16.mxu0 0
        %1370 = vmatpush2.bf16.msra.mxu0 0
        %1371 = vmatprep.subr.bf16.mxu0 0
        %1372 = vmatpush2.bf16.msra.mxu0 0
        %1373 = vmatprep.subr.bf16.mxu0 0
        %1374 = vmatpush2.bf16.msra.mxu0 0
        %1375 = vmatprep.subr.bf16.mxu0 0
        %1376 = vmatpush2.bf16.msra.mxu0 0
        %1377 = vmatprep.subr.bf16.mxu0 0
        %1378 = vmatpush2.bf16.msra.mxu0 0
        %1379 = vmatprep.subr.bf16.mxu0 0
        %1380 = vmatpush2.bf16.msra.mxu0 0
        %1381 = vmatprep.subr.bf16.mxu0 0
        %1382 = vmatpush2.bf16.msra.mxu0 0
        %1383 = vmatprep.subr.bf16.mxu0 0
        %1384 = vmatpush2.bf16.msra.mxu0 0
        %1385 = vmatprep.mubr.bf16.mxu0 0
        %1386 = vmatmul.mubr.bf16.gmra.mxu0 %v1348
        %v1387 = vpop.f32.mrf.mxu0
        %v1388 = vadd.f32 0.0, %v1387
        %v1389 = vpop.f32.mrf.mxu0
        %v1390 = vpop.f32.mrf.mxu0
        %v1391 = vpop.f32.mrf.mxu0
        %1392 = vdwg.mxu0
        %v1393 = vadd.f32 %v1234, %v1388
        %v1394 = vld [vmem:[%s10] sm:$0x1]
        %v1396 = vlaneseq
        %v1397 = vshrl.u32 %v1396, 7
        %v1398 = vsub.s32 0, %v1397
        %v1399 = vrot.slane %v1394, %v1398
        %v1401 = vadd.f32 %v1393, %v1399
        %1402 = vst.msk [vmem:[%s553] sm:$0xff] %vm581, %v1401
        %s1403 = sand.u32 %s288, 1
        %s1404 = scalar_lea.sflag [#allocation4], %s1403
        %s1405 = sand.u32 %s288, 1
        %s1406 = smul.addr %s1405, 8
        %s1407 = scalar_lea.vmem [#allocation17], %s1406
        // Predicated region
        $region101: #{tpu_custom_call.1} parent=63 // pred_check
          %p1408 = pneg %p298
        $region102: #{tpu_custom_call.1} parent=63 // pred_check_branch
          %1410 = sbr.rel (%p1408) target = $region104
        $region103: #{tpu_custom_call.1} parent=63 // pred_region
          %s1412 = ssub.s32 128, 128
          %1413 = vsyncadd %s1404, %s1412
          %s1414 = smul.addr %s34, 128
          %s1415 = scalar_lea.hbm %s11, %s1414
          %s1417 = sshll.u32 %s1407, 4
          %s1418 = int_to_ptr.vmem [resolvable:$true] %s1417
          %1420 = dma.vmem_to_hbm [thread:$0]  %s1418, 128, %s1415, %s1404
        $region104: #{tpu_custom_call.1} parent=63 // pred_fallthru
          _
      $region64: #{tpu_custom_call.1} parent=5 // pred_fallthru
        _
      %p1421 = scmp.le.s32.totalorder 2, %s29
      // Predicated region
      $region105: #{tpu_custom_call.1} parent=5 // pred_check
        %p1422 = pneg %p1421
      $region106: #{tpu_custom_call.1} parent=5 // pred_check_branch
        %1424 = sbr.rel (%p1422) target = $region108
      $region107: #{tpu_custom_call.1} parent=5 // pred_region
        %s1425 = ssub.s32 %s29, 2
        // Predicated region
        $region109: #{tpu_custom_call.1} parent=107 // pred_check
          %p1426 = pneg %p304
        $region110: #{tpu_custom_call.1} parent=107 // pred_check_branch
          %1428 = sbr.rel (%p1426) target = $region112
        $region111: #{tpu_custom_call.1} parent=107 // pred_region
          %s1429 = sand.u32 %s289, 1
          %s1430 = scalar_lea.sflag [#allocation4], %s1429
          %s1431 = sand.u32 %s289, 1
          %s1432 = smul.addr %s1431, 8
          %s1433 = scalar_lea.vmem [#allocation17], %s1432
          %1434 = dma.done %s1430, 128
        $region112: #{tpu_custom_call.1} parent=107 // pred_fallthru
          _
      $region108: #{tpu_custom_call.1} parent=5 // pred_fallthru
        _
    $region6: #{tpu_custom_call.1} parent=1 // loop_footer
      %s33 = sadd.s32 1, %s29
    $region7: #{tpu_custom_call.1} parent=1 // loop_footer_branch
      %28 = sbr.rel target = $region3
    $region8: #{tpu_custom_call.1} parent=1 // loop_exit
      _
    %1435 = vsyncpa [#allocation3], 1
    %s1436 = scalar_lea.sflag [#allocation3], 1
    %1437 = vsyncpa %s1436, 1
    %1438 = vsyncpa [#allocation6], 1
    %s1439 = scalar_lea.sflag [#allocation6], 1
    %1440 = vsyncpa %s1439, 1
    %1441 = vsyncpa [#allocation9], 1
    %1442 = vsyncpa [#allocation12], 1
    %1443 = vsyncpa [#allocation15], 1
    %1444 = vsyncpa [#allocation4], 1
    %s1445 = scalar_lea.sflag [#allocation4], 1
    %1446 = vsyncpa %s1445, 1

// kernel: tpu_custom_call.1
$region0: #{tpu_custom_call.1}
  #allocation0 [shape = 'u32[]', space=smem, size = 0x4, offset = 0x4, fixed_abs, tag = 'smem constant byte address 0x4 - core index']
  #allocation1 [shape = 'u32[144,128]{1,0:T(1,128)}', space=vmem, size = 0x12000, scoped, tag = 'internal scratch']
  %s0 = inlined_call_operand.hbm [shape: bf16[2,8,32], index: 0, kind: input, shape index: {}]
  %s1 = inlined_call_operand.hbm [shape: bf16[2,8,32], index: 1, kind: input, shape index: {}]
  %s2 = inlined_call_operand.hbm [shape: bf16[2,8,32], index: 2, kind: input, shape index: {}]
  %s3 = inlined_call_operand.hbm [shape: bf16[32,32], index: 3, kind: input, shape index: {}]
  %s4 = inlined_call_operand.hbm [shape: f32[1,32], index: 4, kind: input, shape index: {}]
  %s5 = inlined_call_operand.hbm [shape: bf16[32,32], index: 5, kind: input, shape index: {}]
  %s6 = inlined_call_operand.hbm [shape: f32[1,32], index: 6, kind: input, shape index: {}]
  %s7 = inlined_call_operand.hbm [shape: bf16[32,32], index: 7, kind: input, shape index: {}]
  %s8 = inlined_call_operand.hbm [shape: f32[1,32], index: 8, kind: input, shape index: {}]
  %s9 = inlined_call_operand.vmem [shape: bf16[32,32], index: 9, kind: input, shape index: {}]
  %s10 = inlined_call_operand.vmem [shape: f32[1,32], index: 10, kind: input, shape index: {}]
  %s11 = inlined_call_operand.hbm [shape: f32[2,8,32], index: 11, kind: output, shape index: {}]
  %s12 = sld [smem:[#allocation0]]
  $region113: #{tpu_custom_call.1} parent=0
    _
  %s14 = ssub.s32 1, %s12
  %s15 = scalar_select 0, %s14, %s12
  $region1: #{tpu_custom_call.1} parent=0
    #allocation2 [shape = 'u8[4096]{0}', space=vmem, size = 0x1000, scoped, tag = 'input window, operand 0']
    #allocation3 [shape = 's32[2]{0}', space=sflag, size = 0x8, scoped, tag = 'scoped memory for tpu_custom_call.1']
    #allocation4 [shape = 's32[2]{0}', space=sflag, size = 0x8, scoped, tag = 'scoped memory for tpu_custom_call.1']
    #allocation5 [shape = 'u8[4096]{0}', space=vmem, size = 0x1000, scoped, tag = 'input window, operand 1']
    #allocation6 [shape = 's32[2]{0}', space=sflag, size = 0x8, scoped, tag = 'scoped memory for tpu_custom_call.1']
    #allocation7 [shape = 'u8[4096]{0}', space=vmem, size = 0x1000, scoped, tag = 'input window, operand 2']
    #allocation8 [shape = 'u8[8192]{0}', space=vmem, size = 0x2000, scoped, tag = 'input window, operand 3, single buffered']
    #allocation9 [shape = 's32[1]{0}', space=sflag, size = 0x4, scoped, tag = 'scoped memory for tpu_custom_call.1']
    #allocation10 [shape = 'u8[512]{0}', space=vmem, size = 0x400, scoped, tag = 'input window, operand 4, single buffered']
    #allocation11 [shape = 'u8[8192]{0}', space=vmem, size = 0x2000, scoped, tag = 'input window, operand 5, single buffered']
    #allocation12 [shape = 's32[1]{0}', space=sflag, size = 0x4, scoped, tag = 'scoped memory for tpu_custom_call.1']
    #allocation13 [shape = 'u8[512]{0}', space=vmem, size = 0x400, scoped, tag = 'input window, operand 6, single buffered']
    #allocation14 [shape = 'u8[8192]{0}', space=vmem, size = 0x2000, scoped, tag = 'input window, operand 7, single buffered']
    #allocation15 [shape = 's32[1]{0}', space=sflag, size = 0x4, scoped, tag = 'scoped memory for tpu_custom_call.1']
    #allocation16 [shape = 'u8[512]{0}', space=vmem, size = 0x400, scoped, tag = 'input window, operand 8, single buffered']
    #allocation17 [shape = 'u8[8192]{0}', space=vmem, size = 0x2000, scoped, tag = 'output window, operand 0']
    %16 = vsyncpa [#allocation3], 0
    %s17 = scalar_lea.sflag [#allocation3], 1
    %18 = vsyncpa %s17, 0
    %19 = vsyncpa [#allocation6], 0
    %s20 = scalar_lea.sflag [#allocation6], 1
    %21 = vsyncpa %s20, 0
    %22 = vsyncpa [#allocation9], 0
    %23 = vsyncpa [#allocation12], 0
    %24 = vsyncpa [#allocation15], 0
    %25 = vsyncpa [#allocation4], 0
    %s26 = scalar_lea.sflag [#allocation4], 1
    %27 = vsyncpa %s26, 0
    loop: start=0, step=1, limit=4
    $region2: #{tpu_custom_call.1} parent=1 // loop_pre_header
      _
    $region3: #{tpu_custom_call.1} parent=1 // loop_header
      %s29 = sphi 0, %s33
      %p30 = scmp.ge.s32.totalorder %s29, 4
      %s39 = sphi 0, %s41
      %s42 = sphi 0, %s39
      %s43 = sphi 0, %s42
      %s59 = sphi 0, %s43
      %s65 = sphi 0, %s67
      %s68 = sphi 0, %s65
      %s69 = sphi 0, %s68
      %s85 = sphi 0, %s69
      %s91 = sphi 0, %s93
      %s94 = sphi 0, %s91
      %s95 = sphi 0, %s94
      %s111 = sphi 0, %s95
      %s115 = sphi 0, %s115
      %s117 = sphi 0, %s115
      %s118 = sphi 0, %s117
      %s132 = sphi 0, %s118
      %s136 = sphi 0, %s136
      %s138 = sphi 0, %s136
      %s139 = sphi 0, %s138
      %s153 = sphi 0, %s139
      %s157 = sphi 0, %s157
      %s159 = sphi 0, %s157
      %s160 = sphi 0, %s159
      %s174 = sphi 0, %s160
      %s178 = sphi 0, %s178
      %s180 = sphi 0, %s178
      %s181 = sphi 0, %s180
      %s195 = sphi 0, %s181
      %s199 = sphi 0, %s199
      %s201 = sphi 0, %s199
      %s202 = sphi 0, %s201
      %s216 = sphi 0, %s202
      %s220 = sphi 0, %s220
      %s222 = sphi 0, %s220
      %s223 = sphi 0, %s222
      %s237 = sphi 0, %s223
      %s241 = sphi 0, %s241
      %s243 = sphi 0, %s241
      %s244 = sphi 0, %s243
      %s258 = sphi 0, %s244
      %s262 = sphi 0, %s262
      %s264 = sphi 0, %s262
      %s265 = sphi 0, %s264
      %s279 = sphi 0, %s265
      %s285 = sphi 0, %s287
      %s288 = sphi 0, %s285
      %s289 = sphi 0, %s288
      %s305 = sphi 0, %s289
    $region4: #{tpu_custom_call.1} parent=1 // loop_header_branch
      %32 = sbr.rel (%p30) target = $region8
    $region5: #{tpu_custom_call.1} parent=1 // loop_body
      %s34 = ssub.s32 %s29, 1
      %s35 = ssub.s32 %s29, 2
      %s36 = sadd.s32 %s29, 1
      %s37 = ssub.s32 %s29, %s36
      %p38 = scmp.eq.s32.totalorder %s37, 0
      %s40 = sadd.s32 %s39, 1
      %s41 = scalar_select %p38, %s39, %s40
      %p44 = pneg %p38
      %p45 = scmp.eq.s32.totalorder %s29, 1
      %p46 = por %p44, %p45
      %p47 = scmp.ne.s32.totalorder %s39, %s42
      %p48 = scmp.eq.s32.totalorder %s29, 0
      %p49 = por %p47, %p48
      %p50 = scmp.ne.s32.totalorder %s39, %s42
      %p51 = scmp.eq.s32.totalorder %s34, 1
      %p52 = por %p50, %p51
      %p53 = scmp.ne.s32.totalorder %s42, %s43
      %p54 = scmp.eq.s32.totalorder %s34, 0
      %p55 = por %p53, %p54
      %p56 = scmp.ne.s32.totalorder %s42, %s43
      %p57 = scmp.eq.s32.totalorder %s35, 1
      %p58 = por %p56, %p57
      %p60 = scmp.ne.s32.totalorder %s43, %s59
      %p61 = scmp.eq.s32.totalorder %s35, 0
      %p62 = por %p60, %p61
      %s63 = ssub.s32 %s29, %s36
      %p64 = scmp.eq.s32.totalorder %s63, 0
      %s66 = sadd.s32 %s65, 1
      %s67 = scalar_select %p64, %s65, %s66
      %p70 = pneg %p64
      %p71 = scmp.eq.s32.totalorder %s29, 1
      %p72 = por %p70, %p71
      %p73 = scmp.ne.s32.totalorder %s65, %s68
      %p74 = scmp.eq.s32.totalorder %s29, 0
      %p75 = por %p73, %p74
      %p76 = scmp.ne.s32.totalorder %s65, %s68
      %p77 = scmp.eq.s32.totalorder %s34, 1
      %p78 = por %p76, %p77
      %p79 = scmp.ne.s32.totalorder %s68, %s69
      %p80 = scmp.eq.s32.totalorder %s34, 0
      %p81 = por %p79, %p80
      %p82 = scmp.ne.s32.totalorder %s68, %s69
      %p83 = scmp.eq.s32.totalorder %s35, 1
      %p84 = por %p82, %p83
      %p86 = scmp.ne.s32.totalorder %s69, %s85
      %p87 = scmp.eq.s32.totalorder %s35, 0
      %p88 = por %p86, %p87
      %s89 = ssub.s32 %s29, %s36
      %p90 = scmp.eq.s32.totalorder %s89, 0
      %s92 = sadd.s32 %s91, 1
      %s93 = scalar_select %p90, %s91, %s92
      %p96 = pneg %p90
      %p97 = scmp.eq.s32.totalorder %s29, 1
      %p98 = por %p96, %p97
      %p99 = scmp.ne.s32.totalorder %s91, %s94
      %p100 = scmp.eq.s32.totalorder %s29, 0
      %p101 = por %p99, %p100
      %p102 = scmp.ne.s32.totalorder %s91, %s94
      %p103 = scmp.eq.s32.totalorder %s34, 1
      %p104 = por %p102, %p103
      %p105 = scmp.ne.s32.totalorder %s94, %s95
      %p106 = scmp.eq.s32.totalorder %s34, 0
      %p107 = por %p105, %p106
      %p108 = scmp.ne.s32.totalorder %s94, %s95
      %p109 = scmp.eq.s32.totalorder %s35, 1
      %p110 = por %p108, %p109
      %p112 = scmp.ne.s32.totalorder %s95, %s111
      %p113 = scmp.eq.s32.totalorder %s35, 0
      %p114 = por %p112, %p113
      %s116 = sadd.s32 %s115, 1
      %p119 = scmp.eq.s32.totalorder %s29, 1
      %p120 = scmp.ne.s32.totalorder %s115, %s117
      %p121 = scmp.eq.s32.totalorder %s29, 0
      %p122 = por %p120, %p121
      %p123 = scmp.ne.s32.totalorder %s115, %s117
      %p124 = scmp.eq.s32.totalorder %s34, 1
      %p125 = por %p123, %p124
      %p126 = scmp.ne.s32.totalorder %s117, %s118
      %p127 = scmp.eq.s32.totalorder %s34, 0
      %p128 = por %p126, %p127
      %p129 = scmp.ne.s32.totalorder %s117, %s118
      %p130 = scmp.eq.s32.totalorder %s35, 1
      %p131 = por %p129, %p130
      %p133 = scmp.ne.s32.totalorder %s118, %s132
      %p134 = scmp.eq.s32.totalorder %s35, 0
      %p135 = por %p133, %p134
      %s137 = sadd.s32 %s136, 1
      %p140 = scmp.eq.s32.totalorder %s29, 1
      %p141 = scmp.ne.s32.totalorder %s136, %s138
      %p142 = scmp.eq.s32.totalorder %s29, 0
      %p143 = por %p141, %p142
      %p144 = scmp.ne.s32.totalorder %s136, %s138
      %p145 = scmp.eq.s32.totalorder %s34, 1
      %p146 = por %p144, %p145
      %p147 = scmp.ne.s32.totalorder %s138, %s139
      %p148 = scmp.eq.s32.totalorder %s34, 0
      %p149 = por %p147, %p148
      %p150 = scmp.ne.s32.totalorder %s138, %s139
      %p151 = scmp.eq.s32.totalorder %s35, 1
      %p152 = por %p150, %p151
      %p154 = scmp.ne.s32.totalorder %s139, %s153
      %p155 = scmp.eq.s32.totalorder %s35, 0
      %p156 = por %p154, %p155
      %s158 = sadd.s32 %s157, 1
      %p161 = scmp.eq.s32.totalorder %s29, 1
      %p162 = scmp.ne.s32.totalorder %s157, %s159
      %p163 = scmp.eq.s32.totalorder %s29, 0
      %p164 = por %p162, %p163
      %p165 = scmp.ne.s32.totalorder %s157, %s159
      %p166 = scmp.eq.s32.totalorder %s34, 1
      %p167 = por %p165, %p166
      %p168 = scmp.ne.s32.totalorder %s159, %s160
      %p169 = scmp.eq.s32.totalorder %s34, 0
      %p170 = por %p168, %p169
      %p171 = scmp.ne.s32.totalorder %s159, %s160
      %p172 = scmp.eq.s32.totalorder %s35, 1
      %p173 = por %p171, %p172
      %p175 = scmp.ne.s32.totalorder %s160, %s174
      %p176 = scmp.eq.s32.totalorder %s35, 0
      %p177 = por %p175, %p176
      %s179 = sadd.s32 %s178, 1
      %p182 = scmp.eq.s32.totalorder %s29, 1
      %p183 = scmp.ne.s32.totalorder %s178, %s180
      %p184 = scmp.eq.s32.totalorder %s29, 0
      %p185 = por %p183, %p184
      %p186 = scmp.ne.s32.totalorder %s178, %s180
      %p187 = scmp.eq.s32.totalorder %s34, 1
      %p188 = por %p186, %p187
      %p189 = scmp.ne.s32.totalorder %s180, %s181
      %p190 = scmp.eq.s32.totalorder %s34, 0
      %p191 = por %p189, %p190
      %p192 = scmp.ne.s32.totalorder %s180, %s181
      %p193 = scmp.eq.s32.totalorder %s35, 1
      %p194 = por %p192, %p193
      %p196 = scmp.ne.s32.totalorder %s181, %s195
      %p197 = scmp.eq.s32.totalorder %s35, 0
      %p198 = por %p196, %p197
      %s200 = sadd.s32 %s199, 1
      %p203 = scmp.eq.s32.totalorder %s29, 1
      %p204 = scmp.ne.s32.totalorder %s199, %s201
      %p205 = scmp.eq.s32.totalorder %s29, 0
      %p206 = por %p204, %p205
      %p207 = scmp.ne.s32.totalorder %s199, %s201
      %p208 = scmp.eq.s32.totalorder %s34, 1
      %p209 = por %p207, %p208
      %p210 = scmp.ne.s32.totalorder %s201, %s202
      %p211 = scmp.eq.s32.totalorder %s34, 0
      %p212 = por %p210, %p211
      %p213 = scmp.ne.s32.totalorder %s201, %s202
      %p214 = scmp.eq.s32.totalorder %s35, 1
      %p215 = por %p213, %p214
      %p217 = scmp.ne.s32.totalorder %s202, %s216
      %p218 = scmp.eq.s32.totalorder %s35, 0
      %p219 = por %p217, %p218
      %s221 = sadd.s32 %s220, 1
      %p224 = scmp.eq.s32.totalorder %s29, 1
      %p225 = scmp.ne.s32.totalorder %s220, %s222
      %p226 = scmp.eq.s32.totalorder %s29, 0
      %p227 = por %p225, %p226
      %p228 = scmp.ne.s32.totalorder %s220, %s222
      %p229 = scmp.eq.s32.totalorder %s34, 1
      %p230 = por %p228, %p229
      %p231 = scmp.ne.s32.totalorder %s222, %s223
      %p232 = scmp.eq.s32.totalorder %s34, 0
      %p233 = por %p231, %p232
      %p234 = scmp.ne.s32.totalorder %s222, %s223
      %p235 = scmp.eq.s32.totalorder %s35, 1
      %p236 = por %p234, %p235
      %p238 = scmp.ne.s32.totalorder %s223, %s237
      %p239 = scmp.eq.s32.totalorder %s35, 0
      %p240 = por %p238, %p239
      %s242 = sadd.s32 %s241, 1
      %p245 = scmp.eq.s32.totalorder %s29, 1
      %p246 = scmp.ne.s32.totalorder %s241, %s243
      %p247 = scmp.eq.s32.totalorder %s29, 0
      %p248 = por %p246, %p247
      %p249 = scmp.ne.s32.totalorder %s241, %s243
      %p250 = scmp.eq.s32.totalorder %s34, 1
      %p251 = por %p249, %p250
      %p252 = scmp.ne.s32.totalorder %s243, %s244
      %p253 = scmp.eq.s32.totalorder %s34, 0
      %p254 = por %p252, %p253
      %p255 = scmp.ne.s32.totalorder %s243, %s244
      %p256 = scmp.eq.s32.totalorder %s35, 1
      %p257 = por %p255, %p256
      %p259 = scmp.ne.s32.totalorder %s244, %s258
      %p260 = scmp.eq.s32.totalorder %s35, 0
      %p261 = por %p259, %p260
      %s263 = sadd.s32 %s262, 1
      %p266 = scmp.eq.s32.totalorder %s29, 1
      %p267 = scmp.ne.s32.totalorder %s262, %s264
      %p268 = scmp.eq.s32.totalorder %s29, 0
      %p269 = por %p267, %p268
      %p270 = scmp.ne.s32.totalorder %s262, %s264
      %p271 = scmp.eq.s32.totalorder %s34, 1
      %p272 = por %p270, %p271
      %p273 = scmp.ne.s32.totalorder %s264, %s265
      %p274 = scmp.eq.s32.totalorder %s34, 0
      %p275 = por %p273, %p274
      %p276 = scmp.ne.s32.totalorder %s264, %s265
      %p277 = scmp.eq.s32.totalorder %s35, 1
      %p278 = por %p276, %p277
      %p280 = scmp.ne.s32.totalorder %s265, %s279
      %p281 = scmp.eq.s32.totalorder %s35, 0
      %p282 = por %p280, %p281
      %s283 = ssub.s32 %s29, %s36
      %p284 = scmp.eq.s32.totalorder %s283, 0
      %s286 = sadd.s32 %s285, 1
      %s287 = scalar_select %p284, %s285, %s286
      %p290 = pneg %p284
      %p291 = scmp.eq.s32.totalorder %s29, 1
      %p292 = por %p290, %p291
      %p293 = scmp.ne.s32.totalorder %s285, %s288
      %p294 = scmp.eq.s32.totalorder %s29, 0
      %p295 = por %p293, %p294
      %p296 = scmp.ne.s32.totalorder %s285, %s288
      %p297 = scmp.eq.s32.totalorder %s34, 1
      %p298 = por %p296, %p297
      %p299 = scmp.ne.s32.totalorder %s288, %s289
      %p300 = scmp.eq.s32.totalorder %s34, 0
      %p301 = por %p299, %p300
      %p302 = scmp.ne.s32.totalorder %s288, %s289
      %p303 = scmp.eq.s32.totalorder %s35, 1
      %p304 = por %p302, %p303
      %p306 = scmp.ne.s32.totalorder %s289, %s305
      %p307 = scmp.eq.s32.totalorder %s35, 0
      %p308 = por %p306, %p307
      %p309 = scmp.le.s32.totalorder 1, %s29
      %p310 = scmp.lt.s32.totalorder %s29, 3
      %p311 = pnand %p309, %p310
      %p312 = pneg %p311
      // Predicated region
      $region9: #{tpu_custom_call.1} parent=5 // pred_check
        _
      $region10: #{tpu_custom_call.1} parent=5 // pred_check_branch
        %314 = sbr.rel (%p311) target = $region12
      $region11: #{tpu_custom_call.1} parent=5 // pred_region
        %s315 = ssub.s32 %s29, 1
        // Predicated region
        $region13: #{tpu_custom_call.1} parent=11 // pred_check
          %p316 = pneg %p128
        $region14: #{tpu_custom_call.1} parent=11 // pred_check_branch
          %318 = sbr.rel (%p316) target = $region16
        $region15: #{tpu_custom_call.1} parent=11 // pred_region
          %s320 = ssub.s32 256, 256
          %321 = vsyncadd [#allocation9], %s320
          %s322 = sshll.u32 [#allocation8], 4
          %s323 = int_to_ptr.vmem [resolvable:$true] %s322
          %328 = dma.hbm_to_vmem [thread:$0]  %s3, 256, %s323, [#allocation9], 64, 64, 4
        $region16: #{tpu_custom_call.1} parent=11 // pred_fallthru
          _
        // Predicated region
        $region17: #{tpu_custom_call.1} parent=11 // pred_check
          %p329 = pneg %p149
        $region18: #{tpu_custom_call.1} parent=11 // pred_check_branch
          %331 = sbr.rel (%p329) target = $region20
        $region19: #{tpu_custom_call.1} parent=11 // pred_region
          %s333 = ssub.s32 16, 16
          %334 = vsyncadd [#allocation9], %s333
          %s336 = sshll.u32 [#allocation10], 4
          %s337 = int_to_ptr.vmem [resolvable:$true] %s336
          %339 = dma.hbm_to_vmem [thread:$0]  %s4, 16, %s337, [#allocation9]
        $region20: #{tpu_custom_call.1} parent=11 // pred_fallthru
          _
        // Predicated region
        $region21: #{tpu_custom_call.1} parent=11 // pred_check
          %p340 = pneg %p170
        $region22: #{tpu_custom_call.1} parent=11 // pred_check_branch
          %342 = sbr.rel (%p340) target = $region24
        $region23: #{tpu_custom_call.1} parent=11 // pred_region
          %s344 = ssub.s32 256, 256
          %345 = vsyncadd [#allocation12], %s344
          %s346 = sshll.u32 [#allocation11], 4
          %s347 = int_to_ptr.vmem [resolvable:$true] %s346
          %352 = dma.hbm_to_vmem [thread:$0]  %s5, 256, %s347, [#allocation12], 64, 64, 4
        $region24: #{tpu_custom_call.1} parent=11 // pred_fallthru
          _
        // Predicated region
        $region25: #{tpu_custom_call.1} parent=11 // pred_check
          %p353 = pneg %p191
        $region26: #{tpu_custom_call.1} parent=11 // pred_check_branch
          %355 = sbr.rel (%p353) target = $region28
        $region27: #{tpu_custom_call.1} parent=11 // pred_region
          %s357 = ssub.s32 16, 16
          %358 = vsyncadd [#allocation12], %s357
          %s360 = sshll.u32 [#allocation13], 4
          %s361 = int_to_ptr.vmem [resolvable:$true] %s360
          %363 = dma.hbm_to_vmem [thread:$0]  %s6, 16, %s361, [#allocation12]
        $region28: #{tpu_custom_call.1} parent=11 // pred_fallthru
          _
        // Predicated region
        $region29: #{tpu_custom_call.1} parent=11 // pred_check
          %p364 = pneg %p212
        $region30: #{tpu_custom_call.1} parent=11 // pred_check_branch
          %366 = sbr.rel (%p364) target = $region32
        $region31: #{tpu_custom_call.1} parent=11 // pred_region
          %s368 = ssub.s32 256, 256
          %369 = vsyncadd [#allocation15], %s368
          %s370 = sshll.u32 [#allocation14], 4
          %s371 = int_to_ptr.vmem [resolvable:$true] %s370
          %376 = dma.hbm_to_vmem [thread:$0]  %s7, 256, %s371, [#allocation15], 64, 64, 4
        $region32: #{tpu_custom_call.1} parent=11 // pred_fallthru
          _
        // Predicated region
        $region33: #{tpu_custom_call.1} parent=11 // pred_check
          %p377 = pneg %p233
        $region34: #{tpu_custom_call.1} parent=11 // pred_check_branch
          %379 = sbr.rel (%p377) target = $region36
        $region35: #{tpu_custom_call.1} parent=11 // pred_region
          %s381 = ssub.s32 16, 16
          %382 = vsyncadd [#allocation15], %s381
          %s384 = sshll.u32 [#allocation16], 4
          %s385 = int_to_ptr.vmem [resolvable:$true] %s384
          %387 = dma.hbm_to_vmem [thread:$0]  %s8, 16, %s385, [#allocation15]
        $region36: #{tpu_custom_call.1} parent=11 // pred_fallthru
          _
        // Predicated region
        $region37: #{tpu_custom_call.1} parent=11 // pred_check
          %p388 = pneg %p254
        $region38: #{tpu_custom_call.1} parent=11 // pred_check_branch
          %390 = sbr.rel (%p388) target = $region40
        $region39: #{tpu_custom_call.1} parent=11 // pred_region
          _
        $region40: #{tpu_custom_call.1} parent=11 // pred_fallthru
          _
        // Predicated region
        $region41: #{tpu_custom_call.1} parent=11 // pred_check
          %p391 = pneg %p275
        $region42: #{tpu_custom_call.1} parent=11 // pred_check_branch
          %393 = sbr.rel (%p391) target = $region44
        $region43: #{tpu_custom_call.1} parent=11 // pred_region
          _
        $region44: #{tpu_custom_call.1} parent=11 // pred_fallthru
          _
      $region12: #{tpu_custom_call.1} parent=5 // pred_fallthru
        _
      %p394 = scmp.lt.s32.totalorder %s29, 2
      // Predicated region
      $region45: #{tpu_custom_call.1} parent=5 // pred_check
        %p395 = pneg %p394
      $region46: #{tpu_custom_call.1} parent=5 // pred_check_branch
        %397 = sbr.rel (%p395) target = $region48
      $region47: #{tpu_custom_call.1} parent=5 // pred_region
        // Predicated region
        $region49: #{tpu_custom_call.1} parent=47 // pred_check
          %p398 = pneg %p49
        $region50: #{tpu_custom_call.1} parent=47 // pred_check_branch
          %400 = sbr.rel (%p398) target = $region52
        $region51: #{tpu_custom_call.1} parent=47 // pred_region
          %s401 = sand.u32 %s39, 1
          %s402 = scalar_lea.sflag [#allocation3], %s401
          %s403 = sand.u32 %s39, 1
          %s404 = smul.addr %s403, 4
          %s405 = scalar_lea.vmem [#allocation2], %s404
          %s407 = ssub.s32 64, 64
          %408 = vsyncadd %s402, %s407
          %s409 = smul.addr %s29, 64
          %s410 = scalar_lea.hbm %s0, %s409
          %s412 = sshll.u32 %s405, 4
          %s413 = int_to_ptr.vmem [resolvable:$true] %s412
          %415 = dma.hbm_to_vmem [thread:$0]  %s410, 64, %s413, %s402
        $region52: #{tpu_custom_call.1} parent=47 // pred_fallthru
          _
        // Predicated region
        $region53: #{tpu_custom_call.1} parent=47 // pred_check
          %p416 = pneg %p75
        $region54: #{tpu_custom_call.1} parent=47 // pred_check_branch
          %418 = sbr.rel (%p416) target = $region56
        $region55: #{tpu_custom_call.1} parent=47 // pred_region
          %s419 = sand.u32 %s29, 1
          %s420 = scalar_lea.sflag [#allocation6], %s419
          %s421 = sand.u32 %s65, 1
          %s422 = smul.addr %s421, 4
          %s423 = scalar_lea.vmem [#allocation5], %s422
          %s425 = ssub.s32 64, 64
          %426 = vsyncadd %s420, %s425
          %s427 = smul.addr %s29, 64
          %s428 = scalar_lea.hbm %s1, %s427
          %s430 = sshll.u32 %s423, 4
          %s431 = int_to_ptr.vmem [resolvable:$true] %s430
          %433 = dma.hbm_to_vmem [thread:$0]  %s428, 64, %s431, %s420
        $region56: #{tpu_custom_call.1} parent=47 // pred_fallthru
          _
        // Predicated region
        $region57: #{tpu_custom_call.1} parent=47 // pred_check
          %p434 = pneg %p101
        $region58: #{tpu_custom_call.1} parent=47 // pred_check_branch
          %436 = sbr.rel (%p434) target = $region60
        $region59: #{tpu_custom_call.1} parent=47 // pred_region
          %s437 = sand.u32 %s29, 1
          %s438 = scalar_lea.sflag [#allocation6], %s437
          %s439 = sand.u32 %s91, 1
          %s440 = smul.addr %s439, 4
          %s441 = scalar_lea.vmem [#allocation7], %s440
          %s443 = ssub.s32 64, 64
          %444 = vsyncadd %s438, %s443
          %s445 = smul.addr %s29, 64
          %s446 = scalar_lea.hbm %s2, %s445
          %s448 = sshll.u32 %s441, 4
          %s449 = int_to_ptr.vmem [resolvable:$true] %s448
          %451 = dma.hbm_to_vmem [thread:$0]  %s446, 64, %s449, %s438
        $region60: #{tpu_custom_call.1} parent=47 // pred_fallthru
          _
      $region48: #{tpu_custom_call.1} parent=5 // pred_fallthru
        _
      %p452 = scmp.le.s32.totalorder 1, %s29
      %p453 = scmp.lt.s32.totalorder %s29, 3
      %p454 = pnand %p452, %p453
      %p455 = pneg %p454
      // Predicated region
      $region61: #{tpu_custom_call.1} parent=5 // pred_check
        _
      $region62: #{tpu_custom_call.1} parent=5 // pred_check_branch
        %457 = sbr.rel (%p454) target = $region64
      $region63: #{tpu_custom_call.1} parent=5 // pred_region
        %s458 = ssub.s32 %s29, 1
        %s459 = sand.u32 %s42, 1
        %s460 = scalar_lea.sflag [#allocation3], %s459
        %s461 = sand.u32 %s42, 1
        %s462 = smul.addr %s461, 4
        %s463 = scalar_lea.vmem [#allocation2], %s462
        // Predicated region
        $region65: #{tpu_custom_call.1} parent=63 // pred_check
          %p464 = pneg %p55
        $region66: #{tpu_custom_call.1} parent=63 // pred_check_branch
          %466 = sbr.rel (%p464) target = $region68
        $region67: #{tpu_custom_call.1} parent=63 // pred_region
          %467 = dma.done %s460, 64
        $region68: #{tpu_custom_call.1} parent=63 // pred_fallthru
          _
        %s468 = sand.u32 %s34, 1
        %s469 = scalar_lea.sflag [#allocation6], %s468
        %s470 = sand.u32 %s68, 1
        %s471 = smul.addr %s470, 4
        %s472 = scalar_lea.vmem [#allocation5], %s471
        // Predicated region
        $region69: #{tpu_custom_call.1} parent=63 // pred_check
          %p473 = pneg %p81
        $region70: #{tpu_custom_call.1} parent=63 // pred_check_branch
          %475 = sbr.rel (%p473) target = $region72
        $region71: #{tpu_custom_call.1} parent=63 // pred_region
          %476 = dma.done %s469, 64
        $region72: #{tpu_custom_call.1} parent=63 // pred_fallthru
          _
        %s477 = sand.u32 %s34, 1
        %s478 = scalar_lea.sflag [#allocation6], %s477
        %s479 = sand.u32 %s94, 1
        %s480 = smul.addr %s479, 4
        %s481 = scalar_lea.vmem [#allocation7], %s480
        // Predicated region
        $region73: #{tpu_custom_call.1} parent=63 // pred_check
          %p482 = pneg %p107
        $region74: #{tpu_custom_call.1} parent=63 // pred_check_branch
          %484 = sbr.rel (%p482) target = $region76
        $region75: #{tpu_custom_call.1} parent=63 // pred_region
          %485 = dma.done %s478, 64
        $region76: #{tpu_custom_call.1} parent=63 // pred_fallthru
          _
        // Predicated region
        $region77: #{tpu_custom_call.1} parent=63 // pred_check
          %p486 = pneg %p128
        $region78: #{tpu_custom_call.1} parent=63 // pred_check_branch
          %488 = sbr.rel (%p486) target = $region80
        $region79: #{tpu_custom_call.1} parent=63 // pred_region
          %489 = dma.done [#allocation9], 256
        $region80: #{tpu_custom_call.1} parent=63 // pred_fallthru
          _
        // Predicated region
        $region81: #{tpu_custom_call.1} parent=63 // pred_check
          %p490 = pneg %p149
        $region82: #{tpu_custom_call.1} parent=63 // pred_check_branch
          %492 = sbr.rel (%p490) target = $region84
        $region83: #{tpu_custom_call.1} parent=63 // pred_region
          %493 = dma.done [#allocation9], 16
        $region84: #{tpu_custom_call.1} parent=63 // pred_fallthru
          _
        // Predicated region
        $region85: #{tpu_custom_call.1} parent=63 // pred_check
          %p494 = pneg %p170
        $region86: #{tpu_custom_call.1} parent=63 // pred_check_branch
          %496 = sbr.rel (%p494) target = $region88
        $region87: #{tpu_custom_call.1} parent=63 // pred_region
          %497 = dma.done [#allocation12], 256
        $region88: #{tpu_custom_call.1} parent=63 // pred_fallthru
          _
        // Predicated region
        $region89: #{tpu_custom_call.1} parent=63 // pred_check
          %p498 = pneg %p191
        $region90: #{tpu_custom_call.1} parent=63 // pred_check_branch
          %500 = sbr.rel (%p498) target = $region92
        $region91: #{tpu_custom_call.1} parent=63 // pred_region
          %501 = dma.done [#allocation12], 16
        $region92: #{tpu_custom_call.1} parent=63 // pred_fallthru
          _
        // Predicated region
        $region93: #{tpu_custom_call.1} parent=63 // pred_check
          %p502 = pneg %p212
        $region94: #{tpu_custom_call.1} parent=63 // pred_check_branch
          %504 = sbr.rel (%p502) target = $region96
        $region95: #{tpu_custom_call.1} parent=63 // pred_region
          %505 = dma.done [#allocation15], 256
        $region96: #{tpu_custom_call.1} parent=63 // pred_fallthru
          _
        // Predicated region
        $region97: #{tpu_custom_call.1} parent=63 // pred_check
          %p506 = pneg %p233
        $region98: #{tpu_custom_call.1} parent=63 // pred_check_branch
          %508 = sbr.rel (%p506) target = $region100
        $region99: #{tpu_custom_call.1} parent=63 // pred_region
          %509 = dma.done [#allocation15], 16
        $region100: #{tpu_custom_call.1} parent=63 // pred_fallthru
          _
        %s510 = sand.u32 %s42, 1
        %s511 = scalar_lea.sflag [#allocation3], %s510
        %s512 = sand.u32 %s42, 1
        %s513 = smul.addr %s512, 4
        %s514 = scalar_lea.vmem [#allocation2], %s513
        %p515 = pneg %p55
        %p516 = pneg %p52
        %s517 = sand.u32 %s34, 1
        %s518 = scalar_lea.sflag [#allocation6], %s517
        %s519 = sand.u32 %s68, 1
        %s520 = smul.addr %s519, 4
        %s521 = scalar_lea.vmem [#allocation5], %s520
        %p522 = pneg %p81
        %p523 = pneg %p78
        %s524 = sand.u32 %s34, 1
        %s525 = scalar_lea.sflag [#allocation6], %s524
        %s526 = sand.u32 %s94, 1
        %s527 = smul.addr %s526, 4
        %s528 = scalar_lea.vmem [#allocation7], %s527
        %p529 = pneg %p107
        %p530 = pneg %p104
        %p531 = pneg %p128
        %p532 = pneg %p125
        %p533 = pneg %p149
        %p534 = pneg %p146
        %p535 = pneg %p170
        %p536 = pneg %p167
        %p537 = pneg %p191
        %p538 = pneg %p188
        %p539 = pneg %p212
        %p540 = pneg %p209
        %p541 = pneg %p233
        %p542 = pneg %p230
        %p543 = pneg %p254
        %p544 = pneg %p251
        %p545 = pneg %p275
        %p546 = pneg %p272
        %p547 = pneg %p301
        %p548 = pneg %p298
        %s549 = sand.u32 %s288, 1
        %s550 = scalar_lea.sflag [#allocation4], %s549
        %s551 = sand.u32 %s288, 1
        %s552 = smul.addr %s551, 8
        %s553 = scalar_lea.vmem [#allocation17], %s552
        %v555 = vld [vmem:[%s463] sm:$0xf]
        %v556 = vld [vmem:[%s472] sm:$0xf]
        %v557 = vld [vmem:[%s481] sm:$0xf]
        %v558 = vld [vmem:[#allocation8] sm:$0xf]
        %v559 = vld [vmem:[#allocation8 + $0x4] sm:$0xf]
        %v560 = vld [vmem:[#allocation8 + $0x8] sm:$0xf]
        %v561 = vld [vmem:[#allocation8 + $0xc] sm:$0xf]
        %v562 = vld [vmem:[#allocation10] sm:$0x1]
        %v564 = vlaneseq
        %v565 = vshrl.u32 %v564, 7
        %v566 = vsub.s32 0, %v565
        %v567 = vrot.slane %v562, %v566
        %v573 = vunpack.c.l.b16 %v558
        %v574 = vunpack.c.l.b16 %v559
        %v575 = vunpack.c.l.b16 %v560
        %v576 = vunpack.c.l.b16 %v561
        %v577 = vpack.c.b16 %v574, %v573
        %v578 = vpack.c.b16 %v576, %v575
        %vm581 = vcmask 261120
        %v583 = vsel %vm581, %v555, 0
        %585 = vmatprep.subr.bf16.mxu0 0
        %586 = vmatpush1.bf16.msra.mxu0 0
        %587 = vmatprep.subr.bf16.mxu0 0
        %588 = vmatpush1.bf16.msra.mxu0 0
        %589 = vmatprep.subr.bf16.mxu0 0
        %590 = vmatpush1.bf16.msra.mxu0 0
        %591 = vmatprep.subr.bf16.mxu0 0
        %592 = vmatpush1.bf16.msra.mxu0 0
        %593 = vmatprep.subr.bf16.mxu0 0
        %594 = vmatpush1.bf16.msra.mxu0 0
        %595 = vmatprep.subr.bf16.mxu0 0
        %596 = vmatpush1.bf16.msra.mxu0 0
        %597 = vmatprep.subr.bf16.mxu0 0
        %598 = vmatpush1.bf16.msra.mxu0 %v578
        %599 = vmatprep.subr.bf16.mxu0 0
        %600 = vmatpush1.bf16.msra.mxu0 %v577
        %601 = vmatprep.subr.bf16.mxu0 0
        %602 = vmatpush2.bf16.msra.mxu0 0
        %603 = vmatprep.subr.bf16.mxu0 0
        %604 = vmatpush2.bf16.msra.mxu0 0
        %605 = vmatprep.subr.bf16.mxu0 0
        %606 = vmatpush2.bf16.msra.mxu0 0
        %607 = vmatprep.subr.bf16.mxu0 0
        %608 = vmatpush2.bf16.msra.mxu0 0
        %609 = vmatprep.subr.bf16.mxu0 0
        %610 = vmatpush2.bf16.msra.mxu0 0
        %611 = vmatprep.subr.bf16.mxu0 0
        %612 = vmatpush2.bf16.msra.mxu0 0
        %613 = vmatprep.subr.bf16.mxu0 0
        %614 = vmatpush2.bf16.msra.mxu0 0
        %615 = vmatprep.subr.bf16.mxu0 0
        %616 = vmatpush2.bf16.msra.mxu0 0
        %617 = vmatprep.mubr.bf16.mxu0 0
        %618 = vmatmul.mubr.bf16.gmra.mxu0 %v583
        %v619 = vpop.f32.mrf.mxu0
        %v620 = vadd.f32 %v567, %v619
        %v621 = vpop.f32.mrf.mxu0
        %v622 = vpop.f32.mrf.mxu0
        %v623 = vpop.f32.mrf.mxu0
        %624 = vdwg.mxu0
        %v625 = vld [vmem:[#allocation11] sm:$0xf]
        %v626 = vld [vmem:[#allocation11 + $0x4] sm:$0xf]
        %v627 = vld [vmem:[#allocation11 + $0x8] sm:$0xf]
        %v628 = vld [vmem:[#allocation11 + $0xc] sm:$0xf]
        %v629 = vld [vmem:[#allocation13] sm:$0x1]
        %v631 = vlaneseq
        %v632 = vshrl.u32 %v631, 7
        %v633 = vsub.s32 0, %v632
        %v634 = vrot.slane %v629, %v633
        %v640 = vunpack.c.l.b16 %v625
        %v641 = vunpack.c.l.b16 %v626
        %v642 = vunpack.c.l.b16 %v627
        %v643 = vunpack.c.l.b16 %v628
        %v644 = vpack.c.b16 %v641, %v640
        %v645 = vpack.c.b16 %v643, %v642
        %v649 = vsel %vm581, %v556, 0
        %651 = vmatprep.subr.bf16.mxu0 0
        %652 = vmatpush1.bf16.msra.mxu0 0
        %653 = vmatprep.subr.bf16.mxu0 0
        %654 = vmatpush1.bf16.msra.mxu0 0
        %655 = vmatprep.subr.bf16.mxu0 0
        %656 = vmatpush1.bf16.msra.mxu0 0
        %657 = vmatprep.subr.bf16.mxu0 0
        %658 = vmatpush1.bf16.msra.mxu0 0
        %659 = vmatprep.subr.bf16.mxu0 0
        %660 = vmatpush1.bf16.msra.mxu0 0
        %661 = vmatprep.subr.bf16.mxu0 0
        %662 = vmatpush1.bf16.msra.mxu0 0
        %663 = vmatprep.subr.bf16.mxu0 0
        %664 = vmatpush1.bf16.msra.mxu0 %v645
        %665 = vmatprep.subr.bf16.mxu0 0
        %666 = vmatpush1.bf16.msra.mxu0 %v644
        %667 = vmatprep.subr.bf16.mxu0 0
        %668 = vmatpush2.bf16.msra.mxu0 0
        %669 = vmatprep.subr.bf16.mxu0 0
        %670 = vmatpush2.bf16.msra.mxu0 0
        %671 = vmatprep.subr.bf16.mxu0 0
        %672 = vmatpush2.bf16.msra.mxu0 0
        %673 = vmatprep.subr.bf16.mxu0 0
        %674 = vmatpush2.bf16.msra.mxu0 0
        %675 = vmatprep.subr.bf16.mxu0 0
        %676 = vmatpush2.bf16.msra.mxu0 0
        %677 = vmatprep.subr.bf16.mxu0 0
        %678 = vmatpush2.bf16.msra.mxu0 0
        %679 = vmatprep.subr.bf16.mxu0 0
        %680 = vmatpush2.bf16.msra.mxu0 0
        %681 = vmatprep.subr.bf16.mxu0 0
        %682 = vmatpush2.bf16.msra.mxu0 0
        %683 = vmatprep.mubr.bf16.mxu0 0
        %684 = vmatmul.mubr.bf16.gmra.mxu0 %v649
        %v685 = vpop.f32.mrf.mxu0
        %v686 = vadd.f32 %v634, %v685
        %v687 = vpop.f32.mrf.mxu0
        %v688 = vpop.f32.mrf.mxu0
        %v689 = vpop.f32.mrf.mxu0
        %690 = vdwg.mxu0
        %v691 = vld [vmem:[#allocation14] sm:$0xf]
        %v692 = vld [vmem:[#allocation14 + $0x4] sm:$0xf]
        %v693 = vld [vmem:[#allocation14 + $0x8] sm:$0xf]
        %v694 = vld [vmem:[#allocation14 + $0xc] sm:$0xf]
        %v695 = vld [vmem:[#allocation16] sm:$0x1]
        %v697 = vlaneseq
        %v698 = vshrl.u32 %v697, 7
        %v699 = vsub.s32 0, %v698
        %v700 = vrot.slane %v695, %v699
        %v706 = vunpack.c.l.b16 %v691
        %v707 = vunpack.c.l.b16 %v692
        %v708 = vunpack.c.l.b16 %v693
        %v709 = vunpack.c.l.b16 %v694
        %v710 = vpack.c.b16 %v707, %v706
        %v711 = vpack.c.b16 %v709, %v708
        %v715 = vsel %vm581, %v557, 0
        %717 = vmatprep.subr.bf16.mxu0 0
        %718 = vmatpush1.bf16.msra.mxu0 0
        %719 = vmatprep.subr.bf16.mxu0 0
        %720 = vmatpush1.bf16.msra.mxu0 0
        %721 = vmatprep.subr.bf16.mxu0 0
        %722 = vmatpush1.bf16.msra.mxu0 0
        %723 = vmatprep.subr.bf16.mxu0 0
        %724 = vmatpush1.bf16.msra.mxu0 0
        %725 = vmatprep.subr.bf16.mxu0 0
        %726 = vmatpush1.bf16.msra.mxu0 0
        %727 = vmatprep.subr.bf16.mxu0 0
        %728 = vmatpush1.bf16.msra.mxu0 0
        %729 = vmatprep.subr.bf16.mxu0 0
        %730 = vmatpush1.bf16.msra.mxu0 %v711
        %731 = vmatprep.subr.bf16.mxu0 0
        %732 = vmatpush1.bf16.msra.mxu0 %v710
        %733 = vmatprep.subr.bf16.mxu0 0
        %734 = vmatpush2.bf16.msra.mxu0 0
        %735 = vmatprep.subr.bf16.mxu0 0
        %736 = vmatpush2.bf16.msra.mxu0 0
        %737 = vmatprep.subr.bf16.mxu0 0
        %738 = vmatpush2.bf16.msra.mxu0 0
        %739 = vmatprep.subr.bf16.mxu0 0
        %740 = vmatpush2.bf16.msra.mxu0 0
        %741 = vmatprep.subr.bf16.mxu0 0
        %742 = vmatpush2.bf16.msra.mxu0 0
        %743 = vmatprep.subr.bf16.mxu0 0
        %744 = vmatpush2.bf16.msra.mxu0 0
        %745 = vmatprep.subr.bf16.mxu0 0
        %746 = vmatpush2.bf16.msra.mxu0 0
        %747 = vmatprep.subr.bf16.mxu0 0
        %748 = vmatpush2.bf16.msra.mxu0 0
        %749 = vmatprep.mubr.bf16.mxu0 0
        %750 = vmatmul.mubr.bf16.gmra.mxu0 %v715
        %v751 = vpop.f32.mrf.mxu0
        %v752 = vadd.f32 %v700, %v751
        %v753 = vpop.f32.mrf.mxu0
        %v754 = vpop.f32.mrf.mxu0
        %v755 = vpop.f32.mrf.mxu0
        %756 = vdwg.mxu0
        %v757 = vmul.f32 %v620, 0.35355338
        %v758 = vpack.c.bf16 %v757, %v757
        %v759 = vpack.c.bf16 %v686, %v686
        %v760 = vpack.c.bf16 %v752, %v752
        %vm761 = vcmask 64512
        %v763 = vsel %vm761, %v758, 0
        %v766 = vsel %vm761, %v759, 0
        %768 = vmatprep.subr.bf16.mxu0 0
        %769 = vmatpush1.bf16.xpose.msra.mxu0 0
        %770 = vmatprep.subr.bf16.mxu0 0
        %771 = vmatpush1.bf16.xpose.msra.mxu0 0
        %772 = vmatprep.subr.bf16.mxu0 0
        %773 = vmatpush1.bf16.xpose.msra.mxu0 0
        %774 = vmatprep.subr.bf16.mxu0 0
        %775 = vmatpush1.bf16.xpose.msra.mxu0 0
        %776 = vmatprep.subr.bf16.mxu0 0
        %777 = vmatpush1.bf16.xpose.msra.mxu0 0
        %778 = vmatprep.subr.bf16.mxu0 0
        %779 = vmatpush1.bf16.xpose.msra.mxu0 0
        %780 = vmatprep.subr.bf16.mxu0 0
        %781 = vmatpush1.bf16.xpose.msra.mxu0 0
        %782 = vmatprep.subr.bf16.mxu0 0
        %783 = vmatpush1.bf16.xpose.msra.mxu0 %v766
        %784 = vmatprep.subr.bf16.mxu0 0
        %785 = vmatpush2.bf16.xpose.msra.mxu0 0
        %786 = vmatprep.subr.bf16.mxu0 0
        %787 = vmatpush2.bf16.xpose.msra.mxu0 0
        %788 = vmatprep.subr.bf16.mxu0 0
        %789 = vmatpush2.bf16.xpose.msra.mxu0 0
        %790 = vmatprep.subr.bf16.mxu0 0
        %791 = vmatpush2.bf16.xpose.msra.mxu0 0
        %792 = vmatprep.subr.bf16.mxu0 0
        %793 = vmatpush2.bf16.xpose.msra.mxu0 0
        %794 = vmatprep.subr.bf16.mxu0 0
        %795 = vmatpush2.bf16.xpose.msra.mxu0 0
        %796 = vmatprep.subr.bf16.mxu0 0
        %797 = vmatpush2.bf16.xpose.msra.mxu0 0
        %798 = vmatprep.subr.bf16.mxu0 0
        %799 = vmatpush2.bf16.xpose.msra.mxu0 0
        %800 = vmatprep.mubr.bf16.mxu0 0
        %801 = vmatmul.mubr.bf16.gmra.mxu0 %v763
        %v802 = vpop.f32.mrf.mxu0
        %v803 = vadd.f32 0.0, %v802
        %v804 = vpop.f32.mrf.mxu0
        %v805 = vpop.f32.mrf.mxu0
        %v806 = vpop.f32.mrf.mxu0
        %807 = vdwg.mxu0
        %v808 = vsel %vm761, %v803, -inf
        %809 = vmax.xlane.f32.xlu0 %v808
        %v810 = vpop.xlane.xlu0 %809
        %v811 = vsub.f32 %v803, %v810
        %v812 = vmul.f32 %v811, 1.442695
        %v813 = vpow.pop %v812
        %v814 = vsel %vm761, %v813, 0.0
        %815 = vadd.xlane.f32.xlu0 %v814
        %v816 = vpop.xlane.xlu0 %815
        %v817 = vrcp.pop %v816
        %v818 = vmul.f32 %v813, %v817
        %v819 = vpack.c.bf16 %v818, %v818
        %v821 = vsel %vm761, %v819, 0
        %vm823 = vcmask 1043456
        %v825 = vsel %vm823, %v760, 0
        %827 = vmatprep.subr.bf16.mxu0 0
        %828 = vmatpush1.bf16.msra.mxu0 0
        %829 = vmatprep.subr.bf16.mxu0 0
        %830 = vmatpush1.bf16.msra.mxu0 0
        %831 = vmatprep.subr.bf16.mxu0 0
        %832 = vmatpush1.bf16.msra.mxu0 0
        %833 = vmatprep.subr.bf16.mxu0 0
        %834 = vmatpush1.bf16.msra.mxu0 0
        %835 = vmatprep.subr.bf16.mxu0 0
        %836 = vmatpush1.bf16.msra.mxu0 0
        %837 = vmatprep.subr.bf16.mxu0 0
        %838 = vmatpush1.bf16.msra.mxu0 0
        %839 = vmatprep.subr.bf16.mxu0 0
        %840 = vmatpush1.bf16.msra.mxu0 0
        %841 = vmatprep.subr.bf16.mxu0 0
        %842 = vmatpush1.bf16.msra.mxu0 %v825
        %843 = vmatprep.subr.bf16.mxu0 0
        %844 = vmatpush2.bf16.msra.mxu0 0
        %845 = vmatprep.subr.bf16.mxu0 0
        %846 = vmatpush2.bf16.msra.mxu0 0
        %847 = vmatprep.subr.bf16.mxu0 0
        %848 = vmatpush2.bf16.msra.mxu0 0
        %849 = vmatprep.subr.bf16.mxu0 0
        %850 = vmatpush2.bf16.msra.mxu0 0
        %851 = vmatprep.subr.bf16.mxu0 0
        %852 = vmatpush2.bf16.msra.mxu0 0
        %853 = vmatprep.subr.bf16.mxu0 0
        %854 = vmatpush2.bf16.msra.mxu0 0
        %855 = vmatprep.subr.bf16.mxu0 0
        %856 = vmatpush2.bf16.msra.mxu0 0
        %857 = vmatprep.subr.bf16.mxu0 0
        %858 = vmatpush2.bf16.msra.mxu0 0
        %859 = vmatprep.mubr.bf16.mxu0 0
        %860 = vmatmul.mubr.bf16.gmra.mxu0 %v821
        %v861 = vpop.f32.mrf.mxu0
        %v862 = vadd.f32 0.0, %v861
        %v863 = vpop.f32.mrf.mxu0
        %v864 = vpop.f32.mrf.mxu0
        %v865 = vpop.f32.mrf.mxu0
        %866 = vdwg.mxu0
        %v867 = vpack.c.bf16 %v862, %v862
        %v868 = vld [vmem:[%s9] sm:$0xf]
        %870 = vrot.lane.b32.xlu0 %v758, 120
        %v871 = vpop.permute.xlu0 %870
        %873 = vrot.lane.b32.xlu0 %v759, 120
        %v874 = vpop.permute.xlu0 %873
        %v876 = vsel %vm761, %v871, 0
        %v879 = vsel %vm761, %v874, 0
        %881 = vmatprep.subr.bf16.mxu0 0
        %882 = vmatpush1.bf16.xpose.msra.mxu0 0
        %883 = vmatprep.subr.bf16.mxu0 0
        %884 = vmatpush1.bf16.xpose.msra.mxu0 0
        %885 = vmatprep.subr.bf16.mxu0 0
        %886 = vmatpush1.bf16.xpose.msra.mxu0 0
        %887 = vmatprep.subr.bf16.mxu0 0
        %888 = vmatpush1.bf16.xpose.msra.mxu0 0
        %889 = vmatprep.subr.bf16.mxu0 0
        %890 = vmatpush1.bf16.xpose.msra.mxu0 0
        %891 = vmatprep.subr.bf16.mxu0 0
        %892 = vmatpush1.bf16.xpose.msra.mxu0 0
        %893 = vmatprep.subr.bf16.mxu0 0
        %894 = vmatpush1.bf16.xpose.msra.mxu0 0
        %895 = vmatprep.subr.bf16.mxu0 0
        %896 = vmatpush1.bf16.xpose.msra.mxu0 %v879
        %897 = vmatprep.subr.bf16.mxu0 0
        %898 = vmatpush2.bf16.xpose.msra.mxu0 0
        %899 = vmatprep.subr.bf16.mxu0 0
        %900 = vmatpush2.bf16.xpose.msra.mxu0 0
        %901 = vmatprep.subr.bf16.mxu0 0
        %902 = vmatpush2.bf16.xpose.msra.mxu0 0
        %903 = vmatprep.subr.bf16.mxu0 0
        %904 = vmatpush2.bf16.xpose.msra.mxu0 0
        %905 = vmatprep.subr.bf16.mxu0 0
        %906 = vmatpush2.bf16.xpose.msra.mxu0 0
        %907 = vmatprep.subr.bf16.mxu0 0
        %908 = vmatpush2.bf16.xpose.msra.mxu0 0
        %909 = vmatprep.subr.bf16.mxu0 0
        %910 = vmatpush2.bf16.xpose.msra.mxu0 0
        %911 = vmatprep.subr.bf16.mxu0 0
        %912 = vmatpush2.bf16.xpose.msra.mxu0 0
        %913 = vmatprep.mubr.bf16.mxu0 0
        %914 = vmatmul.mubr.bf16.gmra.mxu0 %v876
        %v915 = vpop.f32.mrf.mxu0
        %v916 = vadd.f32 0.0, %v915
        %v917 = vpop.f32.mrf.mxu0
        %v918 = vpop.f32.mrf.mxu0
        %v919 = vpop.f32.mrf.mxu0
        %920 = vdwg.mxu0
        %v921 = vsel %vm761, %v916, -inf
        %922 = vmax.xlane.f32.xlu0 %v921
        %v923 = vpop.xlane.xlu0 %922
        %v924 = vsub.f32 %v916, %v923
        %v925 = vmul.f32 %v924, 1.442695
        %v926 = vpow.pop %v925
        %v927 = vsel %vm761, %v926, 0.0
        %928 = vadd.xlane.f32.xlu0 %v927
        %v929 = vpop.xlane.xlu0 %928
        %v930 = vrcp.pop %v929
        %v931 = vmul.f32 %v926, %v930
        %v932 = vpack.c.bf16 %v931, %v931
        %934 = vrot.lane.b32.xlu0 %v760, 120
        %v935 = vpop.permute.xlu0 %934
        %v937 = vsel %vm761, %v932, 0
        %v940 = vsel %vm823, %v935, 0
        %942 = vmatprep.subr.bf16.mxu0 0
        %943 = vmatpush1.bf16.msra.mxu0 0
        %944 = vmatprep.subr.bf16.mxu0 0
        %945 = vmatpush1.bf16.msra.mxu0 0
        %946 = vmatprep.subr.bf16.mxu0 0
        %947 = vmatpush1.bf16.msra.mxu0 0
        %948 = vmatprep.subr.bf16.mxu0 0
        %949 = vmatpush1.bf16.msra.mxu0 0
        %950 = vmatprep.subr.bf16.mxu0 0
        %951 = vmatpush1.bf16.msra.mxu0 0
        %952 = vmatprep.subr.bf16.mxu0 0
        %953 = vmatpush1.bf16.msra.mxu0 0
        %954 = vmatprep.subr.bf16.mxu0 0
        %955 = vmatpush1.bf16.msra.mxu0 0
        %956 = vmatprep.subr.bf16.mxu0 0
        %957 = vmatpush1.bf16.msra.mxu0 %v940
        %958 = vmatprep.subr.bf16.mxu0 0
        %959 = vmatpush2.bf16.msra.mxu0 0
        %960 = vmatprep.subr.bf16.mxu0 0
        %961 = vmatpush2.bf16.msra.mxu0 0
        %962 = vmatprep.subr.bf16.mxu0 0
        %963 = vmatpush2.bf16.msra.mxu0 0
        %964 = vmatprep.subr.bf16.mxu0 0
        %965 = vmatpush2.bf16.msra.mxu0 0
        %966 = vmatprep.subr.bf16.mxu0 0
        %967 = vmatpush2.bf16.msra.mxu0 0
        %968 = vmatprep.subr.bf16.mxu0 0
        %969 = vmatpush2.bf16.msra.mxu0 0
        %970 = vmatprep.subr.bf16.mxu0 0
        %971 = vmatpush2.bf16.msra.mxu0 0
        %972 = vmatprep.subr.bf16.mxu0 0
        %973 = vmatpush2.bf16.msra.mxu0 0
        %974 = vmatprep.mubr.bf16.mxu0 0
        %975 = vmatmul.mubr.bf16.gmra.mxu0 %v937
        %v976 = vpop.f32.mrf.mxu0
        %v977 = vadd.f32 0.0, %v976
        %v978 = vpop.f32.mrf.mxu0
        %v979 = vpop.f32.mrf.mxu0
        %v980 = vpop.f32.mrf.mxu0
        %981 = vdwg.mxu0
        %v982 = vpack.c.bf16 %v977, %v977
        %v983 = vld [vmem:[%s9 + $0x4] sm:$0xf]
        %v985 = vsel %vm761, %v982, 0
        %v988 = vsel %vm823, %v983, 0
        %990 = vmatprep.subr.bf16.mxu0 0
        %991 = vmatpush1.bf16.msra.mxu0 0
        %992 = vmatprep.subr.bf16.mxu0 0
        %993 = vmatpush1.bf16.msra.mxu0 0
        %994 = vmatprep.subr.bf16.mxu0 0
        %995 = vmatpush1.bf16.msra.mxu0 0
        %996 = vmatprep.subr.bf16.mxu0 0
        %997 = vmatpush1.bf16.msra.mxu0 0
        %998 = vmatprep.subr.bf16.mxu0 0
        %999 = vmatpush1.bf16.msra.mxu0 0
        %1000 = vmatprep.subr.bf16.mxu0 0
        %1001 = vmatpush1.bf16.msra.mxu0 0
        %1002 = vmatprep.subr.bf16.mxu0 0
        %1003 = vmatpush1.bf16.msra.mxu0 0
        %1004 = vmatprep.subr.bf16.mxu0 0
        %1005 = vmatpush1.bf16.msra.mxu0 %v988
        %1006 = vmatprep.subr.bf16.mxu0 0
        %1007 = vmatpush2.bf16.msra.mxu0 0
        %1008 = vmatprep.subr.bf16.mxu0 0
        %1009 = vmatpush2.bf16.msra.mxu0 0
        %1010 = vmatprep.subr.bf16.mxu0 0
        %1011 = vmatpush2.bf16.msra.mxu0 0
        %1012 = vmatprep.subr.bf16.mxu0 0
        %1013 = vmatpush2.bf16.msra.mxu0 0
        %1014 = vmatprep.subr.bf16.mxu0 0
        %1015 = vmatpush2.bf16.msra.mxu0 0
        %1016 = vmatprep.subr.bf16.mxu0 0
        %1017 = vmatpush2.bf16.msra.mxu0 0
        %1018 = vmatprep.subr.bf16.mxu0 0
        %1019 = vmatpush2.bf16.msra.mxu0 0
        %1020 = vmatprep.subr.bf16.mxu0 0
        %1021 = vmatpush2.bf16.msra.mxu0 0
        %1022 = vmatprep.mubr.bf16.mxu0 0
        %1023 = vmatmul.mubr.bf16.gmra.mxu0 %v985
        %v1024 = vpop.f32.mrf.mxu0
        %v1025 = vadd.f32 0.0, %v1024
        %v1026 = vpop.f32.mrf.mxu0
        %v1027 = vpop.f32.mrf.mxu0
        %v1028 = vpop.f32.mrf.mxu0
        %1029 = vdwg.mxu0
        %v1031 = vsel %vm761, %v867, 0
        %v1034 = vsel %vm823, %v868, 0
        %1036 = vmatprep.subr.bf16.mxu0 0
        %1037 = vmatpush1.bf16.msra.mxu0 0
        %1038 = vmatprep.subr.bf16.mxu0 0
        %1039 = vmatpush1.bf16.msra.mxu0 0
        %1040 = vmatprep.subr.bf16.mxu0 0
        %1041 = vmatpush1.bf16.msra.mxu0 0
        %1042 = vmatprep.subr.bf16.mxu0 0
        %1043 = vmatpush1.bf16.msra.mxu0 0
        %1044 = vmatprep.subr.bf16.mxu0 0
        %1045 = vmatpush1.bf16.msra.mxu0 0
        %1046 = vmatprep.subr.bf16.mxu0 0
        %1047 = vmatpush1.bf16.msra.mxu0 0
        %1048 = vmatprep.subr.bf16.mxu0 0
        %1049 = vmatpush1.bf16.msra.mxu0 0
        %1050 = vmatprep.subr.bf16.mxu0 0
        %1051 = vmatpush1.bf16.msra.mxu0 %v1034
        %1052 = vmatprep.subr.bf16.mxu0 0
        %1053 = vmatpush2.bf16.msra.mxu0 0
        %1054 = vmatprep.subr.bf16.mxu0 0
        %1055 = vmatpush2.bf16.msra.mxu0 0
        %1056 = vmatprep.subr.bf16.mxu0 0
        %1057 = vmatpush2.bf16.msra.mxu0 0
        %1058 = vmatprep.subr.bf16.mxu0 0
        %1059 = vmatpush2.bf16.msra.mxu0 0
        %1060 = vmatprep.subr.bf16.mxu0 0
        %1061 = vmatpush2.bf16.msra.mxu0 0
        %1062 = vmatprep.subr.bf16.mxu0 0
        %1063 = vmatpush2.bf16.msra.mxu0 0
        %1064 = vmatprep.subr.bf16.mxu0 0
        %1065 = vmatpush2.bf16.msra.mxu0 0
        %1066 = vmatprep.subr.bf16.mxu0 0
        %1067 = vmatpush2.bf16.msra.mxu0 0
        %1068 = vmatprep.mubr.bf16.mxu0 0
        %1069 = vmatmul.mubr.bf16.gmra.mxu0 %v1031
        %v1070 = vpop.f32.mrf.mxu0
        %v1071 = vadd.f32 %v1025, %v1070
        %v1072 = vpop.f32.mrf.mxu0
        %v1073 = vpop.f32.mrf.mxu0
        %v1074 = vpop.f32.mrf.mxu0
        %1075 = vdwg.mxu0
        %1076 = vrot.lane.b32.xlu0 %v758, 112
        %v1077 = vpop.permute.xlu0 %1076
        %1078 = vrot.lane.b32.xlu0 %v759, 112
        %v1079 = vpop.permute.xlu0 %1078
        %v1081 = vsel %vm761, %v1077, 0
        %v1084 = vsel %vm761, %v1079, 0
        %1086 = vmatprep.subr.bf16.mxu0 0
        %1087 = vmatpush1.bf16.xpose.msra.mxu0 0
        %1088 = vmatprep.subr.bf16.mxu0 0
        %1089 = vmatpush1.bf16.xpose.msra.mxu0 0
        %1090 = vmatprep.subr.bf16.mxu0 0
        %1091 = vmatpush1.bf16.xpose.msra.mxu0 0
        %1092 = vmatprep.subr.bf16.mxu0 0
        %1093 = vmatpush1.bf16.xpose.msra.mxu0 0
        %1094 = vmatprep.subr.bf16.mxu0 0
        %1095 = vmatpush1.bf16.xpose.msra.mxu0 0
        %1096 = vmatprep.subr.bf16.mxu0 0
        %1097 = vmatpush1.bf16.xpose.msra.mxu0 0
        %1098 = vmatprep.subr.bf16.mxu0 0
        %1099 = vmatpush1.bf16.xpose.msra.mxu0 0
        %1100 = vmatprep.subr.bf16.mxu0 0
        %1101 = vmatpush1.bf16.xpose.msra.mxu0 %v1084
        %1102 = vmatprep.subr.bf16.mxu0 0
        %1103 = vmatpush2.bf16.xpose.msra.mxu0 0
        %1104 = vmatprep.subr.bf16.mxu0 0
        %1105 = vmatpush2.bf16.xpose.msra.mxu0 0
        %1106 = vmatprep.subr.bf16.mxu0 0
        %1107 = vmatpush2.bf16.xpose.msra.mxu0 0
        %1108 = vmatprep.subr.bf16.mxu0 0
        %1109 = vmatpush2.bf16.xpose.msra.mxu0 0
        %1110 = vmatprep.subr.bf16.mxu0 0
        %1111 = vmatpush2.bf16.xpose.msra.mxu0 0
        %1112 = vmatprep.subr.bf16.mxu0 0
        %1113 = vmatpush2.bf16.xpose.msra.mxu0 0
        %1114 = vmatprep.subr.bf16.mxu0 0
        %1115 = vmatpush2.bf16.xpose.msra.mxu0 0
        %1116 = vmatprep.subr.bf16.mxu0 0
        %1117 = vmatpush2.bf16.xpose.msra.mxu0 0
        %1118 = vmatprep.mubr.bf16.mxu0 0
        %1119 = vmatmul.mubr.bf16.gmra.mxu0 %v1081
        %v1120 = vpop.f32.mrf.mxu0
        %v1121 = vadd.f32 0.0, %v1120
        %v1122 = vpop.f32.mrf.mxu0
        %v1123 = vpop.f32.mrf.mxu0
        %v1124 = vpop.f32.mrf.mxu0
        %1125 = vdwg.mxu0
        %v1126 = vsel %vm761, %v1121, -inf
        %1127 = vmax.xlane.f32.xlu0 %v1126
        %v1128 = vpop.xlane.xlu0 %1127
        %v1129 = vsub.f32 %v1121, %v1128
        %v1130 = vmul.f32 %v1129, 1.442695
        %v1131 = vpow.pop %v1130
        %v1132 = vsel %vm761, %v1131, 0.0
        %1133 = vadd.xlane.f32.xlu0 %v1132
        %v1134 = vpop.xlane.xlu0 %1133
        %v1135 = vrcp.pop %v1134
        %v1136 = vmul.f32 %v1131, %v1135
        %v1137 = vpack.c.bf16 %v1136, %v1136
        %1138 = vrot.lane.b32.xlu0 %v760, 112
        %v1139 = vpop.permute.xlu0 %1138
        %v1141 = vsel %vm761, %v1137, 0
        %v1144 = vsel %vm823, %v1139, 0
        %1146 = vmatprep.subr.bf16.mxu0 0
        %1147 = vmatpush1.bf16.msra.mxu0 0
        %1148 = vmatprep.subr.bf16.mxu0 0
        %1149 = vmatpush1.bf16.msra.mxu0 0
        %1150 = vmatprep.subr.bf16.mxu0 0
        %1151 = vmatpush1.bf16.msra.mxu0 0
        %1152 = vmatprep.subr.bf16.mxu0 0
        %1153 = vmatpush1.bf16.msra.mxu0 0
        %1154 = vmatprep.subr.bf16.mxu0 0
        %1155 = vmatpush1.bf16.msra.mxu0 0
        %1156 = vmatprep.subr.bf16.mxu0 0
        %1157 = vmatpush1.bf16.msra.mxu0 0
        %1158 = vmatprep.subr.bf16.mxu0 0
        %1159 = vmatpush1.bf16.msra.mxu0 0
        %1160 = vmatprep.subr.bf16.mxu0 0
        %1161 = vmatpush1.bf16.msra.mxu0 %v1144
        %1162 = vmatprep.subr.bf16.mxu0 0
        %1163 = vmatpush2.bf16.msra.mxu0 0
        %1164 = vmatprep.subr.bf16.mxu0 0
        %1165 = vmatpush2.bf16.msra.mxu0 0
        %1166 = vmatprep.subr.bf16.mxu0 0
        %1167 = vmatpush2.bf16.msra.mxu0 0
        %1168 = vmatprep.subr.bf16.mxu0 0
        %1169 = vmatpush2.bf16.msra.mxu0 0
        %1170 = vmatprep.subr.bf16.mxu0 0
        %1171 = vmatpush2.bf16.msra.mxu0 0
        %1172 = vmatprep.subr.bf16.mxu0 0
        %1173 = vmatpush2.bf16.msra.mxu0 0
        %1174 = vmatprep.subr.bf16.mxu0 0
        %1175 = vmatpush2.bf16.msra.mxu0 0
        %1176 = vmatprep.subr.bf16.mxu0 0
        %1177 = vmatpush2.bf16.msra.mxu0 0
        %1178 = vmatprep.mubr.bf16.mxu0 0
        %1179 = vmatmul.mubr.bf16.gmra.mxu0 %v1141
        %v1180 = vpop.f32.mrf.mxu0
        %v1181 = vadd.f32 0.0, %v1180
        %v1182 = vpop.f32.mrf.mxu0
        %v1183 = vpop.f32.mrf.mxu0
        %v1184 = vpop.f32.mrf.mxu0
        %1185 = vdwg.mxu0
        %v1186 = vpack.c.bf16 %v1181, %v1181
        %v1187 = vld [vmem:[%s9 + $0x8] sm:$0xf]
        %v1189 = vsel %vm761, %v1186, 0
        %v1192 = vsel %vm823, %v1187, 0
        %1194 = vmatprep.subr.bf16.mxu0 0
        %1195 = vmatpush1.bf16.msra.mxu0 0
        %1196 = vmatprep.subr.bf16.mxu0 0
        %1197 = vmatpush1.bf16.msra.mxu0 0
        %1198 = vmatprep.subr.bf16.mxu0 0
        %1199 = vmatpush1.bf16.msra.mxu0 0
        %1200 = vmatprep.subr.bf16.mxu0 0
        %1201 = vmatpush1.bf16.msra.mxu0 0
        %1202 = vmatprep.subr.bf16.mxu0 0
        %1203 = vmatpush1.bf16.msra.mxu0 0
        %1204 = vmatprep.subr.bf16.mxu0 0
        %1205 = vmatpush1.bf16.msra.mxu0 0
        %1206 = vmatprep.subr.bf16.mxu0 0
        %1207 = vmatpush1.bf16.msra.mxu0 0
        %1208 = vmatprep.subr.bf16.mxu0 0
        %1209 = vmatpush1.bf16.msra.mxu0 %v1192
        %1210 = vmatprep.subr.bf16.mxu0 0
        %1211 = vmatpush2.bf16.msra.mxu0 0
        %1212 = vmatprep.subr.bf16.mxu0 0
        %1213 = vmatpush2.bf16.msra.mxu0 0
        %1214 = vmatprep.subr.bf16.mxu0 0
        %1215 = vmatpush2.bf16.msra.mxu0 0
        %1216 = vmatprep.subr.bf16.mxu0 0
        %1217 = vmatpush2.bf16.msra.mxu0 0
        %1218 = vmatprep.subr.bf16.mxu0 0
        %1219 = vmatpush2.bf16.msra.mxu0 0
        %1220 = vmatprep.subr.bf16.mxu0 0
        %1221 = vmatpush2.bf16.msra.mxu0 0
        %1222 = vmatprep.subr.bf16.mxu0 0
        %1223 = vmatpush2.bf16.msra.mxu0 0
        %1224 = vmatprep.subr.bf16.mxu0 0
        %1225 = vmatpush2.bf16.msra.mxu0 0
        %1226 = vmatprep.mubr.bf16.mxu0 0
        %1227 = vmatmul.mubr.bf16.gmra.mxu0 %v1189
        %v1228 = vpop.f32.mrf.mxu0
        %v1229 = vadd.f32 0.0, %v1228
        %v1230 = vpop.f32.mrf.mxu0
        %v1231 = vpop.f32.mrf.mxu0
        %v1232 = vpop.f32.mrf.mxu0
        %1233 = vdwg.mxu0
        %v1234 = vadd.f32 %v1071, %v1229
        %1235 = vrot.lane.b32.xlu0 %v758, 104
        %v1236 = vpop.permute.xlu0 %1235
        %1237 = vrot.lane.b32.xlu0 %v759, 104
        %v1238 = vpop.permute.xlu0 %1237
        %v1240 = vsel %vm761, %v1236, 0
        %v1243 = vsel %vm761, %v1238, 0
        %1245 = vmatprep.subr.bf16.mxu0 0
        %1246 = vmatpush1.bf16.xpose.msra.mxu0 0
        %1247 = vmatprep.subr.bf16.mxu0 0
        %1248 = vmatpush1.bf16.xpose.msra.mxu0 0
        %1249 = vmatprep.subr.bf16.mxu0 0
        %1250 = vmatpush1.bf16.xpose.msra.mxu0 0
        %1251 = vmatprep.subr.bf16.mxu0 0
        %1252 = vmatpush1.bf16.xpose.msra.mxu0 0
        %1253 = vmatprep.subr.bf16.mxu0 0
        %1254 = vmatpush1.bf16.xpose.msra.mxu0 0
        %1255 = vmatprep.subr.bf16.mxu0 0
        %1256 = vmatpush1.bf16.xpose.msra.mxu0 0
        %1257 = vmatprep.subr.bf16.mxu0 0
        %1258 = vmatpush1.bf16.xpose.msra.mxu0 0
        %1259 = vmatprep.subr.bf16.mxu0 0
        %1260 = vmatpush1.bf16.xpose.msra.mxu0 %v1243
        %1261 = vmatprep.subr.bf16.mxu0 0
        %1262 = vmatpush2.bf16.xpose.msra.mxu0 0
        %1263 = vmatprep.subr.bf16.mxu0 0
        %1264 = vmatpush2.bf16.xpose.msra.mxu0 0
        %1265 = vmatprep.subr.bf16.mxu0 0
        %1266 = vmatpush2.bf16.xpose.msra.mxu0 0
        %1267 = vmatprep.subr.bf16.mxu0 0
        %1268 = vmatpush2.bf16.xpose.msra.mxu0 0
        %1269 = vmatprep.subr.bf16.mxu0 0
        %1270 = vmatpush2.bf16.xpose.msra.mxu0 0
        %1271 = vmatprep.subr.bf16.mxu0 0
        %1272 = vmatpush2.bf16.xpose.msra.mxu0 0
        %1273 = vmatprep.subr.bf16.mxu0 0
        %1274 = vmatpush2.bf16.xpose.msra.mxu0 0
        %1275 = vmatprep.subr.bf16.mxu0 0
        %1276 = vmatpush2.bf16.xpose.msra.mxu0 0
        %1277 = vmatprep.mubr.bf16.mxu0 0
        %1278 = vmatmul.mubr.bf16.gmra.mxu0 %v1240
        %v1279 = vpop.f32.mrf.mxu0
        %v1280 = vadd.f32 0.0, %v1279
        %v1281 = vpop.f32.mrf.mxu0
        %v1282 = vpop.f32.mrf.mxu0
        %v1283 = vpop.f32.mrf.mxu0
        %1284 = vdwg.mxu0
        %v1285 = vsel %vm761, %v1280, -inf
        %1286 = vmax.xlane.f32.xlu0 %v1285
        %v1287 = vpop.xlane.xlu0 %1286
        %v1288 = vsub.f32 %v1280, %v1287
        %v1289 = vmul.f32 %v1288, 1.442695
        %v1290 = vpow.pop %v1289
        %v1291 = vsel %vm761, %v1290, 0.0
        %1292 = vadd.xlane.f32.xlu0 %v1291
        %v1293 = vpop.xlane.xlu0 %1292
        %v1294 = vrcp.pop %v1293
        %v1295 = vmul.f32 %v1290, %v1294
        %v1296 = vpack.c.bf16 %v1295, %v1295
        %1297 = vrot.lane.b32.xlu0 %v760, 104
        %v1298 = vpop.permute.xlu0 %1297
        %v1300 = vsel %vm761, %v1296, 0
        %v1303 = vsel %vm823, %v1298, 0
        %1305 = vmatprep.subr.bf16.mxu0 0
        %1306 = vmatpush1.bf16.msra.mxu0 0
        %1307 = vmatprep.subr.bf16.mxu0 0
        %1308 = vmatpush1.bf16.msra.mxu0 0
        %1309 = vmatprep.subr.bf16.mxu0 0
        %1310 = vmatpush1.bf16.msra.mxu0 0
        %1311 = vmatprep.subr.bf16.mxu0 0
        %1312 = vmatpush1.bf16.msra.mxu0 0
        %1313 = vmatprep.subr.bf16.mxu0 0
        %1314 = vmatpush1.bf16.msra.mxu0 0
        %1315 = vmatprep.subr.bf16.mxu0 0
        %1316 = vmatpush1.bf16.msra.mxu0 0
        %1317 = vmatprep.subr.bf16.mxu0 0
        %1318 = vmatpush1.bf16.msra.mxu0 0
        %1319 = vmatprep.subr.bf16.mxu0 0
        %1320 = vmatpush1.bf16.msra.mxu0 %v1303
        %1321 = vmatprep.subr.bf16.mxu0 0
        %1322 = vmatpush2.bf16.msra.mxu0 0
        %1323 = vmatprep.subr.bf16.mxu0 0
        %1324 = vmatpush2.bf16.msra.mxu0 0
        %1325 = vmatprep.subr.bf16.mxu0 0
        %1326 = vmatpush2.bf16.msra.mxu0 0
        %1327 = vmatprep.subr.bf16.mxu0 0
        %1328 = vmatpush2.bf16.msra.mxu0 0
        %1329 = vmatprep.subr.bf16.mxu0 0
        %1330 = vmatpush2.bf16.msra.mxu0 0
        %1331 = vmatprep.subr.bf16.mxu0 0
        %1332 = vmatpush2.bf16.msra.mxu0 0
        %1333 = vmatprep.subr.bf16.mxu0 0
        %1334 = vmatpush2.bf16.msra.mxu0 0
        %1335 = vmatprep.subr.bf16.mxu0 0
        %1336 = vmatpush2.bf16.msra.mxu0 0
        %1337 = vmatprep.mubr.bf16.mxu0 0
        %1338 = vmatmul.mubr.bf16.gmra.mxu0 %v1300
        %v1339 = vpop.f32.mrf.mxu0
        %v1340 = vadd.f32 0.0, %v1339
        %v1341 = vpop.f32.mrf.mxu0
        %v1342 = vpop.f32.mrf.mxu0
        %v1343 = vpop.f32.mrf.mxu0
        %1344 = vdwg.mxu0
        %v1345 = vpack.c.bf16 %v1340, %v1340
        %v1346 = vld [vmem:[%s9 + $0xc] sm:$0xf]
        %v1348 = vsel %vm761, %v1345, 0
        %v1351 = vsel %vm823, %v1346, 0
        %1353 = vmatprep.subr.bf16.mxu0 0
        %1354 = vmatpush1.bf16.msra.mxu0 0
        %1355 = vmatprep.subr.bf16.mxu0 0
        %1356 = vmatpush1.bf16.msra.mxu0 0
        %1357 = vmatprep.subr.bf16.mxu0 0
        %1358 = vmatpush1.bf16.msra.mxu0 0
        %1359 = vmatprep.subr.bf16.mxu0 0
        %1360 = vmatpush1.bf16.msra.mxu0 0
        %1361 = vmatprep.subr.bf16.mxu0 0
        %1362 = vmatpush1.bf16.msra.mxu0 0
        %1363 = vmatprep.subr.bf16.mxu0 0
        %1364 = vmatpush1.bf16.msra.mxu0 0
        %1365 = vmatprep.subr.bf16.mxu0 0
        %1366 = vmatpush1.bf16.msra.mxu0 0
        %1367 = vmatprep.subr.bf16.mxu0 0
        %1368 = vmatpush1.bf16.msra.mxu0 %v1351
        %1369 = vmatprep.subr.bf16.mxu0 0
        %1370 = vmatpush2.bf16.msra.mxu0 0
        %1371 = vmatprep.subr.bf16.mxu0 0
        %1372 = vmatpush2.bf16.msra.mxu0 0
        %1373 = vmatprep.subr.bf16.mxu0 0
        %1374 = vmatpush2.bf16.msra.mxu0 0
        %1375 = vmatprep.subr.bf16.mxu0 0
        %1376 = vmatpush2.bf16.msra.mxu0 0
        %1377 = vmatprep.subr.bf16.mxu0 0
        %1378 = vmatpush2.bf16.msra.mxu0 0
        %1379 = vmatprep.subr.bf16.mxu0 0
        %1380 = vmatpush2.bf16.msra.mxu0 0
        %1381 = vmatprep.subr.bf16.mxu0 0
        %1382 = vmatpush2.bf16.msra.mxu0 0
        %1383 = vmatprep.subr.bf16.mxu0 0
        %1384 = vmatpush2.bf16.msra.mxu0 0
        %1385 = vmatprep.mubr.bf16.mxu0 0
        %1386 = vmatmul.mubr.bf16.gmra.mxu0 %v1348
        %v1387 = vpop.f32.mrf.mxu0
        %v1388 = vadd.f32 0.0, %v1387
        %v1389 = vpop.f32.mrf.mxu0
        %v1390 = vpop.f32.mrf.mxu0
        %v1391 = vpop.f32.mrf.mxu0
        %1392 = vdwg.mxu0
        %v1393 = vadd.f32 %v1234, %v1388
        %v1394 = vld [vmem:[%s10] sm:$0x1]
        %v1396 = vlaneseq
        %v1397 = vshrl.u32 %v1396, 7
        %v1398 = vsub.s32 0, %v1397
        %v1399 = vrot.slane %v1394, %v1398
        %v1401 = vadd.f32 %v1393, %v1399
        %1402 = vst.msk [vmem:[%s553] sm:$0xff] %vm581, %v1401
        %s1403 = sand.u32 %s288, 1
        %s1404 = scalar_lea.sflag [#allocation4], %s1403
        %s1405 = sand.u32 %s288, 1
        %s1406 = smul.addr %s1405, 8
        %s1407 = scalar_lea.vmem [#allocation17], %s1406
        // Predicated region
        $region101: #{tpu_custom_call.1} parent=63 // pred_check
          %p1408 = pneg %p298
        $region102: #{tpu_custom_call.1} parent=63 // pred_check_branch
          %1410 = sbr.rel (%p1408) target = $region104
        $region103: #{tpu_custom_call.1} parent=63 // pred_region
          %s1412 = ssub.s32 128, 128
          %1413 = vsyncadd %s1404, %s1412
          %s1414 = smul.addr %s34, 128
          %s1415 = scalar_lea.hbm %s11, %s1414
          %s1417 = sshll.u32 %s1407, 4
          %s1418 = int_to_ptr.vmem [resolvable:$true] %s1417
          %1420 = dma.vmem_to_hbm [thread:$0]  %s1418, 128, %s1415, %s1404
        $region104: #{tpu_custom_call.1} parent=63 // pred_fallthru
          _
      $region64: #{tpu_custom_call.1} parent=5 // pred_fallthru
        _
      %p1421 = scmp.le.s32.totalorder 2, %s29
      // Predicated region
      $region105: #{tpu_custom_call.1} parent=5 // pred_check
        %p1422 = pneg %p1421
      $region106: #{tpu_custom_call.1} parent=5 // pred_check_branch
        %1424 = sbr.rel (%p1422) target = $region108
      $region107: #{tpu_custom_call.1} parent=5 // pred_region
        %s1425 = ssub.s32 %s29, 2
        // Predicated region
        $region109: #{tpu_custom_call.1} parent=107 // pred_check
          %p1426 = pneg %p304
        $region110: #{tpu_custom_call.1} parent=107 // pred_check_branch
          %1428 = sbr.rel (%p1426) target = $region112
        $region111: #{tpu_custom_call.1} parent=107 // pred_region
          %s1429 = sand.u32 %s289, 1
          %s1430 = scalar_lea.sflag [#allocation4], %s1429
          %s1431 = sand.u32 %s289, 1
          %s1432 = smul.addr %s1431, 8
          %s1433 = scalar_lea.vmem [#allocation17], %s1432
          %1434 = dma.done %s1430, 128
        $region112: #{tpu_custom_call.1} parent=107 // pred_fallthru
          _
      $region108: #{tpu_custom_call.1} parent=5 // pred_fallthru
        _
    $region6: #{tpu_custom_call.1} parent=1 // loop_footer
      %s33 = sadd.s32 1, %s29
    $region7: #{tpu_custom_call.1} parent=1 // loop_footer_branch
      %28 = sbr.rel target = $region3
    $region8: #{tpu_custom_call.1} parent=1 // loop_exit
      _
    %1435 = vsyncpa [#allocation3], 1
    %s1436 = scalar_lea.sflag [#allocation3], 1
    %1437 = vsyncpa %s1436, 1
    %1438 = vsyncpa [#allocation6], 1
    %s1439 = scalar_lea.sflag [#allocation6], 1
    %1440 = vsyncpa %s1439, 1
    %1441 = vsyncpa [#allocation9], 1
    %1442 = vsyncpa [#allocation12], 1
    %1443 = vsyncpa [#allocation15], 1
    %1444 = vsyncpa [#allocation4], 1
    %s1445 = scalar_lea.sflag [#allocation4], 1
    %1446 = vsyncpa %s1445, 1

</llo_original>
